<compile_context>
chip_gen: v6e
topology: v6e:2x2x1
jax: 0.10.0
libtpu: 0.0.40
codegen_flags: <defaults>
</compile_context>

<pallas_src>
import numpy as np
import jax
import jax.numpy as jnp
from jax import lax
from jax.experimental import pallas as pl
from jax.experimental.pallas import tpu as pltpu

BN_EPS = 1e-5
VMEM_LIMIT = 32 * 1024 * 1024


def _round_up(v, m):
    return ((v + m - 1) // m) * m


# --------------------------------------------------------------------------
# Pallas kernels
# --------------------------------------------------------------------------
def fused_pyramid_kernel(x_ref, p_ref, w_ref, b_ref, m_ref, u_ref, o_ref):
    """All pyramid stages fused, plus pass-through concat of x.

    x_ref: (1, HW, C)      input features (spatial flattened)
    p_ref: (LLp, HW)       stacked adaptive-avg-pool matrices (zero-padded rows)
    w_ref: (C, SO)         concatenated 1x1 conv weights, BN scale pre-folded
    b_ref: (1, SO)         folded conv-bias + BN shift
    m_ref: (LLp, SO)       block-diagonal level mask (keeps level-matched blocks)
    u_ref: (HW, LLp)       stacked bilinear (align_corners) upsample matrices
    o_ref: (1, HW, SO + C) [stage outputs || x]  (same order as torch.cat)
    """
    x = x_ref[0]                                                         # (HW, C)
    pooled = jnp.dot(p_ref[...], x, preferred_element_type=jnp.float32)  # (LLp, C)
    z = jnp.dot(pooled, w_ref[...], preferred_element_type=jnp.float32)  # (LLp, SO)
    act = jnp.maximum((z + b_ref[...]) * m_ref[...], 0.0)                # BN + ReLU
    up = jnp.dot(u_ref[...], act, preferred_element_type=jnp.float32)    # (HW, SO)
    so = w_ref.shape[1]
    c = x_ref.shape[2]
    o_ref[0, :, :so] = up
    o_ref[0, :, so:so + c] = x


def conv3x3_bn_relu_kernel(xh_ref, w_ref, b_ref, o_ref):
    """3x3 conv as 9 shifted accumulating matmuls (no im2col) + folded BN + ReLU.

    xh_ref: (1, 1, TMR+2, W+2, Cin)  halo row-tile of the zero-padded input
    w_ref:  (9, Cin, Cout)           per-tap weights, BN scale pre-folded
    b_ref:  (1, Cout)                folded bias + BN shift
    o_ref:  (1, TMR*W, Cout)
    """
    tmr = xh_ref.shape[2] - 2
    w = xh_ref.shape[3] - 2
    cin = xh_ref.shape[4]
    cout = o_ref.shape[2]

    xh = xh_ref[0, 0]                       # (TMR+2, W+2, Cin), already in VMEM
    bias = b_ref[...]
    acc = jnp.zeros((tmr * w, cout), jnp.float32)
    for ky in range(3):                     # statically unrolled: 9 MXU matmuls
        for kx in range(3):
            win = xh[ky:ky + tmr, kx:kx + w, :].reshape(tmr * w, cin)
            acc = acc + jnp.dot(win, w_ref[ky * 3 + kx],
                                preferred_element_type=jnp.float32)
    o_ref[0] = jnp.maximum(acc + bias, 0.0)


# --------------------------------------------------------------------------
# pallas_call wrappers
# --------------------------------------------------------------------------
def run_fused_pyramid(x_flat, P_all, Wb, shift, mask, U_all):
    N, HW, C = x_flat.shape
    LLp = P_all.shape[0]
    SO = Wb.shape[1]
    return pl.pallas_call(
        fused_pyramid_kernel,
        out_shape=jax.ShapeDtypeStruct((N, HW, SO + C), jnp.float32),
        grid=(N,),
        in_specs=[
            pl.BlockSpec((1, HW, C), lambda n: (n, 0, 0)),
            pl.BlockSpec((LLp, HW), lambda n: (0, 0)),
            pl.BlockSpec((C, SO), lambda n: (0, 0)),
            pl.BlockSpec((1, SO), lambda n: (0, 0)),
            pl.BlockSpec((LLp, SO), lambda n: (0, 0)),
            pl.BlockSpec((HW, LLp), lambda n: (0, 0)),
        ],
        out_specs=pl.BlockSpec((1, HW, SO + C), lambda n: (n, 0, 0)),
        compiler_params=pltpu.CompilerParams(
            dimension_semantics=("parallel",),
            vmem_limit_bytes=VMEM_LIMIT),
    )(x_flat, P_all, Wb, shift, mask, U_all)


def run_conv3x3(xh, w9, shift, HW, W, row_tile):
    N, T, RT2, WP2, Cin = xh.shape
    Cout = w9.shape[2]
    tile_hw = row_tile * W
    return pl.pallas_call(
        conv3x3_bn_relu_kernel,
        out_shape=jax.ShapeDtypeStruct((N, HW, Cout), jnp.float32),
        grid=(N, T),
        in_specs=[
            pl.BlockSpec((1, 1, RT2, WP2, Cin), lambda n, t: (n, t, 0, 0, 0)),
            pl.BlockSpec((9, Cin, Cout), lambda n, t: (0, 0, 0)),
            pl.BlockSpec((1, Cout), lambda n, t: (0, 0)),
        ],
        out_specs=pl.BlockSpec((1, tile_hw, Cout), lambda n, t: (n, t, 0)),
        compiler_params=pltpu.CompilerParams(
            dimension_semantics=("parallel", "parallel"),
            vmem_limit_bytes=VMEM_LIMIT),
    )(xh, w9, shift)


# --------------------------------------------------------------------------
# Constant matrices (host-side numpy, baked as constants)
# --------------------------------------------------------------------------
def pooling_matrix(L, H, W):
    """AdaptiveAvgPool2d((L,L)) for H,W divisible by L, as (L*L, H*W) matrix."""
    bh, bw = H // L, W // L
    Ah = (np.arange(H)[None, :] // bh == np.arange(L)[:, None]).astype(np.float32) / bh
    Aw = (np.arange(W)[None, :] // bw == np.arange(L)[:, None]).astype(np.float32) / bw
    return np.kron(Ah, Aw)                       # (L*L, H*W)


def interp_matrix_1d(out_size, in_size):
    """1-D linear interpolation matrix, align_corners=True."""
    if in_size == 1:
        return np.ones((out_size, 1), np.float32)
    s = np.arange(out_size, dtype=np.float32) * ((in_size - 1) / (out_size - 1))
    idx = np.arange(in_size, dtype=np.float32)
    return np.clip(1.0 - np.abs(s[:, None] - idx[None, :]), 0.0, 1.0).astype(np.float32)


def upsample_matrix(L, H, W):
    return np.kron(interp_matrix_1d(H, L), interp_matrix_1d(W, L)).astype(np.float32)


# --------------------------------------------------------------------------
# Parameters (deterministic synthetic init, shapes per PSP.__init__)
# --------------------------------------------------------------------------
def init_params(key, inch, levels):
    O = inch // len(levels)
    params = {"stages": [], "conv": {}}
    keys = jax.random.split(key, len(levels) + 1)
    for level, k in zip(levels, keys[:-1]):
        kw, kb, kg, kbe = jax.random.split(k, 4)
        sp = {
            "w": 0.1 * jax.random.normal(kw, (O, inch), jnp.float32),   # Conv2d 1x1
            "b": 0.1 * jax.random.normal(kb, (O,), jnp.float32),
        }
        if level != 1:   # BatchNorm2d only when level != 1 (matches makeStages)
            sp["gamma"] = 1.0 + 0.1 * jax.random.normal(kg, (O,), jnp.float32)
            sp["beta"] = 0.1 * jax.random.normal(kbe, (O,), jnp.float32)
        params["stages"].append(sp)
    kw, kb, kg, kbe = jax.random.split(keys[-1], 4)
    params["conv"] = {   # Conv3x3_bn_relu(inch*2, inch, padding=1)
        "w": 0.1 * jax.random.normal(kw, (inch, 2 * inch, 3, 3), jnp.float32),
        "b": 0.1 * jax.random.normal(kb, (inch,), jnp.float32),
        "gamma": 1.0 + 0.1 * jax.random.normal(kg, (inch,), jnp.float32),
        "beta": 0.1 * jax.random.normal(kbe, (inch,), jnp.float32),
    }
    return params


# --------------------------------------------------------------------------
# Forward pass (Pallas)
# --------------------------------------------------------------------------
def psp_forward(x_nchw, params, levels, *, row_tile=8):
    N, C, H, W = x_nchw.shape
    HW = H * W
    assert all(H % l == 0 and W % l == 0 for l in levels), \
        "adaptive pooling implemented as exact block-mean (H,W must divide levels)"
    if H % row_tile != 0:
        row_tile = H            # fall back to one tile covering the full height
    assert H % row_tile == 0 and (row_tile * W) % 8 == 0

    x_flat = jnp.transpose(x_nchw, (0, 2, 3, 1)).reshape(N, HW, C)

    O = params["stages"][0]["w"].shape[0]
    n_levels = len(levels)
    SO = n_levels * O
    LLtot = sum(l * l for l in levels)
    LLp = _round_up(LLtot, 8)

    # ---- fused pyramid constants (host numpy -> baked constants) ----
    P_all = np.zeros((LLp, HW), np.float32)
    U_all = np.zeros((HW, LLp), np.float32)
    mask = np.zeros((LLp, SO), np.float32)
    row0 = 0
    for i, level in enumerate(levels):
        ll = level * level
        P_all[row0:row0 + ll, :] = pooling_matrix(level, H, W)
        U_all[:, row0:row0 + ll] = upsample_matrix(level, H, W)
        mask[row0:row0 + ll, i * O:(i + 1) * O] = 1.0
        row0 += ll

    # ---- fold conv bias + eval-mode BN into the 1x1 weights / a shift ----
    w_cols, shifts = [], []
    for sp in params["stages"]:
        if "gamma" in sp:
            g = sp["gamma"] / jnp.sqrt(1.0 + BN_EPS)
            shifts.append(sp["b"] * g + sp["beta"])
        else:
            g = jnp.ones_like(sp["b"])
            shifts.append(sp["b"])
        w_cols.append(sp["w"].T * g[None, :])                    # (C, O)
    Wb = jnp.concatenate(w_cols, axis=1)                         # (C, SO)
    shift_all = jnp.concatenate(shifts).reshape(1, SO)

    # one kernel: pooling + 1x1 conv + BN + ReLU + upsample for every level,
    # output written side-by-side with x (== torch.cat(x1 + [x], dim=1)).
    cat = run_fused_pyramid(x_flat, jnp.asarray(P_all), Wb, shift_all,
                            jnp.asarray(mask), jnp.asarray(U_all))  # (N,HW,SO+C)

    # ---- 3x3 conv: pad + overlapping row tiles (halo), no im2col ----
    Cin = SO + C
    x_img = cat.reshape(N, H, W, Cin)
    xp = jnp.pad(x_img, ((0, 0), (1, 1), (1, 1), (0, 0)))
    n_tiles = H // row_tile
    xh = jnp.stack(
        [xp[:, t * row_tile:t * row_tile + row_tile + 2] for t in range(n_tiles)],
        axis=1)                                                  # (N,T,TMR+2,W+2,Cin)

    cp = params["conv"]
    Cout = cp["w"].shape[0]
    g2 = cp["gamma"] / jnp.sqrt(1.0 + BN_EPS)
    w9 = jnp.transpose(cp["w"], (2, 3, 1, 0)).reshape(9, Cin, Cout) * g2[None, None, :]
    shift2 = (cp["b"] * g2 + cp["beta"]).reshape(1, Cout)

    out_flat = run_conv3x3(xh, w9, shift2, HW, W, row_tile)      # (N, HW, Cout)
    return jnp.transpose(out_flat.reshape(N, H, W, Cout), (0, 3, 1, 2))  # NCHW


# --------------------------------------------------------------------------
# Pure-JAX reference (mirrors the PyTorch forward, eval-mode BN)
# --------------------------------------------------------------------------
def _bilinear_upsample_ac(a, H, W):
    N, O, L, _ = a.shape
    if L == 1:
        return jnp.broadcast_to(a, (N, O, H, W))
    sy = jnp.arange(H, dtype=jnp.float32) * ((L - 1) / (H - 1))
    sx = jnp.arange(W, dtype=jnp.float32) * ((L - 1) / (W - 1))
    i0 = jnp.floor(sy).astype(jnp.int32); i1 = jnp.minimum(i0 + 1, L - 1); wy = sy - i0
    j0 = jnp.floor(sx).astype(jnp.int32); j1 = jnp.minimum(j0 + 1, L - 1); wx = sx - j0
    a00 = a[:, :, i0[:, None], j0[None, :]]
    a01 = a[:, :, i0[:, None], j1[None, :]]
    a10 = a[:, :, i1[:, None], j0[None, :]]
    a11 = a[:, :, i1[:, None], j1[None, :]]
    wy = wy[:, None]; wx = wx[None, :]
    return (a00 * (1 - wy) * (1 - wx) + a01 * (1 - wy) * wx
            + a10 * wy * (1 - wx) + a11 * wy * wx)


def psp_reference(x, params, levels):
    N, C, H, W = x.shape
    HIGH = lax.Precision.HIGHEST
    ups = []
    for level, sp in zip(levels, params["stages"]):
        bh, bw = H // level, W // level
        pooled = x.reshape(N, C, level, bh, level, bw).mean(axis=(3, 5))
        z = jnp.einsum("oc,nclm->nolm", sp["w"], pooled, precision=HIGH) \
            + sp["b"][None, :, None, None]
        if "gamma" in sp:
            z = z / jnp.sqrt(1.0 + BN_EPS) * sp["gamma"][None, :, None, None] \
                + sp["beta"][None, :, None, None]
        z = jnp.maximum(z, 0.0)
        ups.append(_bilinear_upsample_ac(z, H, W))
    xcat = jnp.concatenate(ups + [x], axis=1)
    cp = params["conv"]
    y = lax.conv_general_dilated(xcat, cp["w"], (1, 1), ((1, 1), (1, 1)),
                                 dimension_numbers=("NCHW", "OIHW", "NCHW"),
                                 precision=HIGH) + cp["b"][None, :, None, None]
    y = y / jnp.sqrt(1.0 + BN_EPS) * cp["gamma"][None, :, None, None] \
        + cp["beta"][None, :, None, None]
    return jnp.maximum(y, 0.0)


# --------------------------------------------------------------------------
if __name__ == "__main__":
    levels = (1, 2, 4, 8)
    N, C, H, W = 2, 16, 16, 16          # inch=16 -> outch per stage = 4, cat = 32

    key = jax.random.PRNGKey(0)
    kx, kp = jax.random.split(key)
    x = jax.random.normal(kx, (N, C, H, W), jnp.float32)
    params = init_params(kp, C, levels)

    fwd = jax.jit(lambda xx, pp: psp_forward(xx, pp, levels))
    out = jax.block_until_ready(fwd(x, params))
    assert out.shape == (N, C, H, W)

    ref = psp_reference(x, params, levels)
    if not np.allclose(np.asarray(out), np.asarray(ref), atol=2e-3, rtol=2e-3):
        err = np.max(np.abs(np.asarray(out) - np.asarray(ref)))
        raise AssertionError(f"Pallas output mismatch vs reference, max |err| = {err}")

    print("KERNEL_OK")
</pallas_src>

<mosaic_0001>
module attributes {stable_mosaic.version = 11 : i64} {
  func.func @fused_pyramid_kernel(%arg0: i32, %arg1: memref<1x256x16xf32, #tpu.memory_space<vmem>>, %arg2: memref<88x256xf32, #tpu.memory_space<vmem>>, %arg3: memref<16x16xf32, #tpu.memory_space<vmem>>, %arg4: memref<1x16xf32, #tpu.memory_space<vmem>>, %arg5: memref<88x16xf32, #tpu.memory_space<vmem>>, %arg6: memref<256x88xf32, #tpu.memory_space<vmem>>, %arg7: memref<1x256x32xf32, #tpu.memory_space<vmem>>) attributes {dimension_semantics = [#tpu.dimension_semantics<parallel>], iteration_bounds = array<i64: 2>, scalar_prefetch = 0 : i64, scratch_operands = 0 : i64, tpu.core_type = #tpu.core_type<tc>, window_params = [{transform_indices = @transform_0, window_bounds = array<i64: 1, 256, 16>}, {pipeline_mode = #tpu.pipeline_mode<synchronous>, transform_indices = @transform_1, window_bounds = array<i64: 88, 256>}, {pipeline_mode = #tpu.pipeline_mode<synchronous>, transform_indices = @transform_2, window_bounds = array<i64: 16, 16>}, {pipeline_mode = #tpu.pipeline_mode<synchronous>, transform_indices = @transform_3, window_bounds = array<i64: 1, 16>}, {pipeline_mode = #tpu.pipeline_mode<synchronous>, transform_indices = @transform_4, window_bounds = array<i64: 88, 16>}, {pipeline_mode = #tpu.pipeline_mode<synchronous>, transform_indices = @transform_5, window_bounds = array<i64: 256, 88>}, {transform_indices = @transform_6, window_bounds = array<i64: 1, 256, 32>}]} {
    %c0 = arith.constant 0 : index
    %c0_0 = arith.constant 0 : index
    %c0_1 = arith.constant 0 : index
    %0 = vector.load %arg1[%c0, %c0_0, %c0_1] : memref<1x256x16xf32, #tpu.memory_space<vmem>>, vector<1x256x16xf32>
    %1 = vector.shape_cast %0 : vector<1x256x16xf32> to vector<256x16xf32>
    %c0_2 = arith.constant 0 : index
    %c0_3 = arith.constant 0 : index
    %2 = vector.load %arg2[%c0_2, %c0_3] : memref<88x256xf32, #tpu.memory_space<vmem>>, vector<88x256xf32>
    %cst = arith.constant dense<0.000000e+00> : vector<88x16xf32>
    %3 = tpu.matmul %2, %1, %cst {dimension_numbers = #tpu.dot_dimension_numbers<[1], [0], [0], [1], [0, 0, 1, 1], [], []>} : vector<88x256xf32>, vector<256x16xf32>, vector<88x16xf32> -> vector<88x16xf32>
    %c0_4 = arith.constant 0 : index
    %c0_5 = arith.constant 0 : index
    %4 = vector.load %arg3[%c0_4, %c0_5] : memref<16x16xf32, #tpu.memory_space<vmem>>, vector<16x16xf32>
    %cst_6 = arith.constant dense<0.000000e+00> : vector<88x16xf32>
    %5 = tpu.matmul %3, %4, %cst_6 {dimension_numbers = #tpu.dot_dimension_numbers<[1], [0], [0], [1], [0, 0, 1, 1], [], []>} : vector<88x16xf32>, vector<16x16xf32>, vector<88x16xf32> -> vector<88x16xf32>
    %c0_7 = arith.constant 0 : index
    %c0_8 = arith.constant 0 : index
    %6 = vector.load %arg4[%c0_7, %c0_8] : memref<1x16xf32, #tpu.memory_space<vmem>>, vector<1x16xf32>
    %7 = vector.broadcast %6 : vector<1x16xf32> to vector<88x16xf32>
    %8 = arith.addf %5, %7 : vector<88x16xf32>
    %c0_9 = arith.constant 0 : index
    %c0_10 = arith.constant 0 : index
    %9 = vector.load %arg5[%c0_9, %c0_10] : memref<88x16xf32, #tpu.memory_space<vmem>>, vector<88x16xf32>
    %10 = arith.mulf %8, %9 : vector<88x16xf32>
    %cst_11 = arith.constant 0.000000e+00 : f32
    %11 = vector.broadcast %cst_11 : f32 to vector<88x16xf32>
    %12 = arith.maximumf %10, %11 : vector<88x16xf32>
    %c0_12 = arith.constant 0 : index
    %c0_13 = arith.constant 0 : index
    %13 = vector.load %arg6[%c0_12, %c0_13] : memref<256x88xf32, #tpu.memory_space<vmem>>, vector<256x88xf32>
    %cst_14 = arith.constant dense<0.000000e+00> : vector<256x16xf32>
    %14 = tpu.matmul %13, %12, %cst_14 {dimension_numbers = #tpu.dot_dimension_numbers<[1], [0], [0], [1], [0, 0, 1, 1], [], []>} : vector<256x88xf32>, vector<88x16xf32>, vector<256x16xf32> -> vector<256x16xf32>
    %c0_15 = arith.constant 0 : index
    %c0_16 = arith.constant 0 : index
    %c0_17 = arith.constant 0 : index
    %15 = vector.load %arg7[%c0_15, %c0_16, %c0_17] : memref<1x256x32xf32, #tpu.memory_space<vmem>>, vector<1x256x16xf32>
    %16 = vector.shape_cast %15 : vector<1x256x16xf32> to vector<256x16xf32>
    %17 = vector.shape_cast %14 : vector<256x16xf32> to vector<1x256x16xf32>
    tpu.vector_store %arg7[%c0_15, %c0_16, %c0_17], %17 {strides = array<i32>} : memref<1x256x32xf32, #tpu.memory_space<vmem>>, vector<1x256x16xf32>,
    %c0_18 = arith.constant 0 : index
    %c0_19 = arith.constant 0 : index
    %c16 = arith.constant 16 : index
    %18 = vector.load %arg7[%c0_18, %c0_19, %c16] : memref<1x256x32xf32, #tpu.memory_space<vmem>>, vector<1x256x16xf32>
    %19 = vector.shape_cast %18 : vector<1x256x16xf32> to vector<256x16xf32>
    %20 = vector.shape_cast %1 : vector<256x16xf32> to vector<1x256x16xf32>
    tpu.vector_store %arg7[%c0_18, %c0_19, %c16], %20 {strides = array<i32>} : memref<1x256x32xf32, #tpu.memory_space<vmem>>, vector<1x256x16xf32>,
    return
  }
  func.func @transform_0(%arg0: i32) -> (i32, i32, i32) {
    %c0_i32 = arith.constant 0 : i32
    %c0_i32_0 = arith.constant 0 : i32
    %c0_i32_1 = arith.constant 0 : i32
    return %arg0, %c0_i32, %c0_i32_0 : i32, i32, i32
  }
  func.func @transform_1(%arg0: i32) -> (i32, i32) {
    %c0_i32 = arith.constant 0 : i32
    %c0_i32_0 = arith.constant 0 : i32
    %c0_i32_1 = arith.constant 0 : i32
    return %c0_i32, %c0_i32_0 : i32, i32
  }
  func.func @transform_2(%arg0: i32) -> (i32, i32) {
    %c0_i32 = arith.constant 0 : i32
    %c0_i32_0 = arith.constant 0 : i32
    %c0_i32_1 = arith.constant 0 : i32
    return %c0_i32, %c0_i32_0 : i32, i32
  }
  func.func @transform_3(%arg0: i32) -> (i32, i32) {
    %c0_i32 = arith.constant 0 : i32
    %c0_i32_0 = arith.constant 0 : i32
    %c0_i32_1 = arith.constant 0 : i32
    return %c0_i32, %c0_i32_0 : i32, i32
  }
  func.func @transform_4(%arg0: i32) -> (i32, i32) {
    %c0_i32 = arith.constant 0 : i32
    %c0_i32_0 = arith.constant 0 : i32
    %c0_i32_1 = arith.constant 0 : i32
    return %c0_i32, %c0_i32_0 : i32, i32
  }
  func.func @transform_5(%arg0: i32) -> (i32, i32) {
    %c0_i32 = arith.constant 0 : i32
    %c0_i32_0 = arith.constant 0 : i32
    %c0_i32_1 = arith.constant 0 : i32
    return %c0_i32, %c0_i32_0 : i32, i32
  }
  func.func @transform_6(%arg0: i32) -> (i32, i32, i32) {
    %c0_i32 = arith.constant 0 : i32
    %c0_i32_0 = arith.constant 0 : i32
    %c0_i32_1 = arith.constant 0 : i32
    return %arg0, %c0_i32, %c0_i32_0 : i32, i32, i32
  }
}

module attributes {stable_mosaic.version = 11 : i64} {
  func.func @conv3x3_bn_relu_kernel(%arg0: i32, %arg1: i32, %arg2: memref<1x1x10x18x32xf32, #tpu.memory_space<vmem>>, %arg3: memref<9x32x16xf32, #tpu.memory_space<vmem>>, %arg4: memref<1x16xf32, #tpu.memory_space<vmem>>, %arg5: memref<1x128x16xf32, #tpu.memory_space<vmem>>) attributes {dimension_semantics = [#tpu.dimension_semantics<parallel>, #tpu.dimension_semantics<parallel>], iteration_bounds = array<i64: 2, 2>, scalar_prefetch = 0 : i64, scratch_operands = 0 : i64, tpu.core_type = #tpu.core_type<tc>, window_params = [{transform_indices = @transform_0, window_bounds = array<i64: 1, 1, 10, 18, 32>}, {pipeline_mode = #tpu.pipeline_mode<synchronous>, transform_indices = @transform_1, window_bounds = array<i64: 9, 32, 16>}, {pipeline_mode = #tpu.pipeline_mode<synchronous>, transform_indices = @transform_2, window_bounds = array<i64: 1, 16>}, {transform_indices = @transform_3, window_bounds = array<i64: 1, 128, 16>}]} {
    %c0 = arith.constant 0 : index
    %c0_0 = arith.constant 0 : index
    %c0_1 = arith.constant 0 : index
    %c0_2 = arith.constant 0 : index
    %c0_3 = arith.constant 0 : index
    %0 = vector.load %arg2[%c0, %c0_0, %c0_1, %c0_2, %c0_3] : memref<1x1x10x18x32xf32, #tpu.memory_space<vmem>>, vector<1x1x10x18x32xf32>
    %1 = vector.shape_cast %0 : vector<1x1x10x18x32xf32> to vector<10x18x32xf32>
    %c0_4 = arith.constant 0 : index
    %c0_5 = arith.constant 0 : index
    %2 = vector.load %arg4[%c0_4, %c0_5] : memref<1x16xf32, #tpu.memory_space<vmem>>, vector<1x16xf32>
    %cst = arith.constant 0.000000e+00 : f32
    %3 = vector.broadcast %cst : f32 to vector<128x16xf32>
    %4 = vector.extract_strided_slice %1 {offsets = [0, 0, 0], sizes = [8, 16, 32], strides = [1, 1, 1]} : vector<10x18x32xf32> to vector<8x16x32xf32>
    %5 = vector.shape_cast %4 : vector<8x16x32xf32> to vector<128x32xf32>
    %c0_6 = arith.constant 0 : index
    %c0_7 = arith.constant 0 : index
    %c0_8 = arith.constant 0 : index
    %6 = vector.load %arg3[%c0_6, %c0_7, %c0_8] : memref<9x32x16xf32, #tpu.memory_space<vmem>>, vector<1x32x16xf32>
    %7 = vector.shape_cast %6 : vector<1x32x16xf32> to vector<32x16xf32>
    %cst_9 = arith.constant dense<0.000000e+00> : vector<128x16xf32>
    %8 = tpu.matmul %5, %7, %cst_9 {dimension_numbers = #tpu.dot_dimension_numbers<[1], [0], [0], [1], [0, 0, 1, 1], [], []>} : vector<128x32xf32>, vector<32x16xf32>, vector<128x16xf32> -> vector<128x16xf32>
    %9 = arith.addf %3, %8 : vector<128x16xf32>
    %10 = vector.extract_strided_slice %1 {offsets = [0, 1, 0], sizes = [8, 16, 32], strides = [1, 1, 1]} : vector<10x18x32xf32> to vector<8x16x32xf32>
    %11 = vector.shape_cast %10 : vector<8x16x32xf32> to vector<128x32xf32>
    %c1 = arith.constant 1 : index
    %c0_10 = arith.constant 0 : index
    %c0_11 = arith.constant 0 : index
    %12 = vector.load %arg3[%c1, %c0_10, %c0_11] : memref<9x32x16xf32, #tpu.memory_space<vmem>>, vector<1x32x16xf32>
    %13 = vector.shape_cast %12 : vector<1x32x16xf32> to vector<32x16xf32>
    %cst_12 = arith.constant dense<0.000000e+00> : vector<128x16xf32>
    %14 = tpu.matmul %11, %13, %cst_12 {dimension_numbers = #tpu.dot_dimension_numbers<[1], [0], [0], [1], [0, 0, 1, 1], [], []>} : vector<128x32xf32>, vector<32x16xf32>, vector<128x16xf32> -> vector<128x16xf32>
    %15 = arith.addf %9, %14 : vector<128x16xf32>
    %16 = vector.extract_strided_slice %1 {offsets = [0, 2, 0], sizes = [8, 16, 32], strides = [1, 1, 1]} : vector<10x18x32xf32> to vector<8x16x32xf32>
    %17 = vector.shape_cast %16 : vector<8x16x32xf32> to vector<128x32xf32>
    %c2 = arith.constant 2 : index
    %c0_13 = arith.constant 0 : index
    %c0_14 = arith.constant 0 : index
    %18 = vector.load %arg3[%c2, %c0_13, %c0_14] : memref<9x32x16xf32, #tpu.memory_space<vmem>>, vector<1x32x16xf32>
    %19 = vector.shape_cast %18 : vector<1x32x16xf32> to vector<32x16xf32>
    %cst_15 = arith.constant dense<0.000000e+00> : vector<128x16xf32>
    %20 = tpu.matmul %17, %19, %cst_15 {dimension_numbers = #tpu.dot_dimension_numbers<[1], [0], [0], [1], [0, 0, 1, 1], [], []>} : vector<128x32xf32>, vector<32x16xf32>, vector<128x16xf32> -> vector<128x16xf32>
    %21 = arith.addf %15, %20 : vector<128x16xf32>
    %22 = vector.extract_strided_slice %1 {offsets = [1, 0, 0], sizes = [8, 16, 32], strides = [1, 1, 1]} : vector<10x18x32xf32> to vector<8x16x32xf32>
    %23 = vector.shape_cast %22 : vector<8x16x32xf32> to vector<128x32xf32>
    %c3 = arith.constant 3 : index
    %c0_16 = arith.constant 0 : index
    %c0_17 = arith.constant 0 : index
    %24 = vector.load %arg3[%c3, %c0_16, %c0_17] : memref<9x32x16xf32, #tpu.memory_space<vmem>>, vector<1x32x16xf32>
    %25 = vector.shape_cast %24 : vector<1x32x16xf32> to vector<32x16xf32>
    %cst_18 = arith.constant dense<0.000000e+00> : vector<128x16xf32>
    %26 = tpu.matmul %23, %25, %cst_18 {dimension_numbers = #tpu.dot_dimension_numbers<[1], [0], [0], [1], [0, 0, 1, 1], [], []>} : vector<128x32xf32>, vector<32x16xf32>, vector<128x16xf32> -> vector<128x16xf32>
    %27 = arith.addf %21, %26 : vector<128x16xf32>
    %28 = vector.extract_strided_slice %1 {offsets = [1, 1, 0], sizes = [8, 16, 32], strides = [1, 1, 1]} : vector<10x18x32xf32> to vector<8x16x32xf32>
    %29 = vector.shape_cast %28 : vector<8x16x32xf32> to vector<128x32xf32>
    %c4 = arith.constant 4 : index
    %c0_19 = arith.constant 0 : index
    %c0_20 = arith.constant 0 : index
    %30 = vector.load %arg3[%c4, %c0_19, %c0_20] : memref<9x32x16xf32, #tpu.memory_space<vmem>>, vector<1x32x16xf32>
    %31 = vector.shape_cast %30 : vector<1x32x16xf32> to vector<32x16xf32>
    %cst_21 = arith.constant dense<0.000000e+00> : vector<128x16xf32>
    %32 = tpu.matmul %29, %31, %cst_21 {dimension_numbers = #tpu.dot_dimension_numbers<[1], [0], [0], [1], [0, 0, 1, 1], [], []>} : vector<128x32xf32>, vector<32x16xf32>, vector<128x16xf32> -> vector<128x16xf32>
    %33 = arith.addf %27, %32 : vector<128x16xf32>
    %34 = vector.extract_strided_slice %1 {offsets = [1, 2, 0], sizes = [8, 16, 32], strides = [1, 1, 1]} : vector<10x18x32xf32> to vector<8x16x32xf32>
    %35 = vector.shape_cast %34 : vector<8x16x32xf32> to vector<128x32xf32>
    %c5 = arith.constant 5 : index
    %c0_22 = arith.constant 0 : index
    %c0_23 = arith.constant 0 : index
    %36 = vector.load %arg3[%c5, %c0_22, %c0_23] : memref<9x32x16xf32, #tpu.memory_space<vmem>>, vector<1x32x16xf32>
    %37 = vector.shape_cast %36 : vector<1x32x16xf32> to vector<32x16xf32>
    %cst_24 = arith.constant dense<0.000000e+00> : vector<128x16xf32>
    %38 = tpu.matmul %35, %37, %cst_24 {dimension_numbers = #tpu.dot_dimension_numbers<[1], [0], [0], [1], [0, 0, 1, 1], [], []>} : vector<128x32xf32>, vector<32x16xf32>, vector<128x16xf32> -> vector<128x16xf32>
    %39 = arith.addf %33, %38 : vector<128x16xf32>
    %40 = vector.extract_strided_slice %1 {offsets = [2, 0, 0], sizes = [8, 16, 32], strides = [1, 1, 1]} : vector<10x18x32xf32> to vector<8x16x32xf32>
    %41 = vector.shape_cast %40 : vector<8x16x32xf32> to vector<128x32xf32>
    %c6 = arith.constant 6 : index
    %c0_25 = arith.constant 0 : index
    %c0_26 = arith.constant 0 : index
    %42 = vector.load %arg3[%c6, %c0_25, %c0_26] : memref<9x32x16xf32, #tpu.memory_space<vmem>>, vector<1x32x16xf32>
    %43 = vector.shape_cast %42 : vector<1x32x16xf32> to vector<32x16xf32>
    %cst_27 = arith.constant dense<0.000000e+00> : vector<128x16xf32>
    %44 = tpu.matmul %41, %43, %cst_27 {dimension_numbers = #tpu.dot_dimension_numbers<[1], [0], [0], [1], [0, 0, 1, 1], [], []>} : vector<128x32xf32>, vector<32x16xf32>, vector<128x16xf32> -> vector<128x16xf32>
    %45 = arith.addf %39, %44 : vector<128x16xf32>
    %46 = vector.extract_strided_slice %1 {offsets = [2, 1, 0], sizes = [8, 16, 32], strides = [1, 1, 1]} : vector<10x18x32xf32> to vector<8x16x32xf32>
    %47 = vector.shape_cast %46 : vector<8x16x32xf32> to vector<128x32xf32>
    %c7 = arith.constant 7 : index
    %c0_28 = arith.constant 0 : index
    %c0_29 = arith.constant 0 : index
    %48 = vector.load %arg3[%c7, %c0_28, %c0_29] : memref<9x32x16xf32, #tpu.memory_space<vmem>>, vector<1x32x16xf32>
    %49 = vector.shape_cast %48 : vector<1x32x16xf32> to vector<32x16xf32>
    %cst_30 = arith.constant dense<0.000000e+00> : vector<128x16xf32>
    %50 = tpu.matmul %47, %49, %cst_30 {dimension_numbers = #tpu.dot_dimension_numbers<[1], [0], [0], [1], [0, 0, 1, 1], [], []>} : vector<128x32xf32>, vector<32x16xf32>, vector<128x16xf32> -> vector<128x16xf32>
    %51 = arith.addf %45, %50 : vector<128x16xf32>
    %52 = vector.extract_strided_slice %1 {offsets = [2, 2, 0], sizes = [8, 16, 32], strides = [1, 1, 1]} : vector<10x18x32xf32> to vector<8x16x32xf32>
    %53 = vector.shape_cast %52 : vector<8x16x32xf32> to vector<128x32xf32>
    %c8 = arith.constant 8 : index
    %c0_31 = arith.constant 0 : index
    %c0_32 = arith.constant 0 : index
    %54 = vector.load %arg3[%c8, %c0_31, %c0_32] : memref<9x32x16xf32, #tpu.memory_space<vmem>>, vector<1x32x16xf32>
    %55 = vector.shape_cast %54 : vector<1x32x16xf32> to vector<32x16xf32>
    %cst_33 = arith.constant dense<0.000000e+00> : vector<128x16xf32>
    %56 = tpu.matmul %53, %55, %cst_33 {dimension_numbers = #tpu.dot_dimension_numbers<[1], [0], [0], [1], [0, 0, 1, 1], [], []>} : vector<128x32xf32>, vector<32x16xf32>, vector<128x16xf32> -> vector<128x16xf32>
    %57 = arith.addf %51, %56 : vector<128x16xf32>
    %58 = vector.broadcast %2 : vector<1x16xf32> to vector<128x16xf32>
    %59 = arith.addf %57, %58 : vector<128x16xf32>
    %cst_34 = arith.constant 0.000000e+00 : f32
    %60 = vector.broadcast %cst_34 : f32 to vector<128x16xf32>
    %61 = arith.maximumf %59, %60 : vector<128x16xf32>
    %c0_35 = arith.constant 0 : index
    %c0_36 = arith.constant 0 : index
    %c0_37 = arith.constant 0 : index
    %62 = vector.load %arg5[%c0_35, %c0_36, %c0_37] : memref<1x128x16xf32, #tpu.memory_space<vmem>>, vector<1x128x16xf32>
    %63 = vector.shape_cast %62 : vector<1x128x16xf32> to vector<128x16xf32>
    %64 = vector.shape_cast %61 : vector<128x16xf32> to vector<1x128x16xf32>
    tpu.vector_store %arg5[%c0_35, %c0_36, %c0_37], %64 {strides = array<i32>} : memref<1x128x16xf32, #tpu.memory_space<vmem>>, vector<1x128x16xf32>,
    return
  }
  func.func @transform_0(%arg0: i32, %arg1: i32) -> (i32, i32, i32, i32, i32) {
    %c0_i32 = arith.constant 0 : i32
    %c0_i32_0 = arith.constant 0 : i32
    %c0_i32_1 = arith.constant 0 : i32
    %c0_i32_2 = arith.constant 0 : i32
    return %arg0, %arg1, %c0_i32, %c0_i32_0, %c0_i32_1 : i32, i32, i32, i32, i32
  }
  func.func @transform_1(%arg0: i32, %arg1: i32) -> (i32, i32, i32) {
    %c0_i32 = arith.constant 0 : i32
    %c0_i32_0 = arith.constant 0 : i32
    %c0_i32_1 = arith.constant 0 : i32
    %c0_i32_2 = arith.constant 0 : i32
    return %c0_i32, %c0_i32_0, %c0_i32_1 : i32, i32, i32
  }
  func.func @transform_2(%arg0: i32, %arg1: i32) -> (i32, i32) {
    %c0_i32 = arith.constant 0 : i32
    %c0_i32_0 = arith.constant 0 : i32
    %c0_i32_1 = arith.constant 0 : i32
    return %c0_i32, %c0_i32_0 : i32, i32
  }
  func.func @transform_3(%arg0: i32, %arg1: i32) -> (i32, i32, i32) {
    %c0_i32 = arith.constant 0 : i32
    %c0_i32_0 = arith.constant 0 : i32
    return %arg0, %arg1, %c0_i32 : i32, i32, i32
  }
}

</mosaic_0001>

<llo_original>
// kernel: _lambda_.2
$region0: #{_lambda_.2}
  #allocation0 [shape = 'u32[]', space=smem, size = 0x4, offset = 0x4, fixed_abs, tag = 'smem constant byte address 0x4 - core index']
  #allocation1 [shape = 'u32[144,128]{1,0:T(1,128)}', space=vmem, size = 0x12000, scoped, tag = 'internal scratch']
  %s0 = inlined_call_operand.vmem [shape: f32[2,256,16], index: 0, kind: input, shape index: {}]
  %s1 = inlined_call_operand.vmem [shape: f32[88,256], index: 1, kind: input, shape index: {}]
  %s2 = inlined_call_operand.vmem [shape: f32[16,16], index: 2, kind: input, shape index: {}]
  %s3 = inlined_call_operand.vmem [shape: f32[1,16], index: 3, kind: input, shape index: {}]
  %s4 = inlined_call_operand.vmem [shape: f32[88,16], index: 4, kind: input, shape index: {}]
  %s5 = inlined_call_operand.vmem [shape: f32[256,88], index: 5, kind: input, shape index: {}]
  %s6 = inlined_call_operand.vmem [shape: f32[2,256,32], index: 6, kind: output, shape index: {}]
  %s7 = sld [smem:[#allocation0]]
  $region57: #{_lambda_.2} parent=0
    _
  %s9 = ssub.s32 1, %s7
  %s10 = scalar_select 0, %s9, %s7
  loop: start=0, step=1, limit=4
  $region2: #{_lambda_.2} parent=0 // loop_pre_header
    _
  $region3: #{_lambda_.2} parent=0 // loop_header
    %s12 = sphi 0, %s16
    %p13 = scmp.ge.s32.totalorder %s12, 4
    %s22 = sphi 0, %s24
    %s25 = sphi 0, %s22
    %s26 = sphi 0, %s25
    %s42 = sphi 0, %s26
    %s46 = sphi 0, %s46
    %s48 = sphi 0, %s46
    %s49 = sphi 0, %s48
    %s63 = sphi 0, %s49
    %s67 = sphi 0, %s67
    %s69 = sphi 0, %s67
    %s70 = sphi 0, %s69
    %s84 = sphi 0, %s70
    %s88 = sphi 0, %s88
    %s90 = sphi 0, %s88
    %s91 = sphi 0, %s90
    %s105 = sphi 0, %s91
    %s109 = sphi 0, %s109
    %s111 = sphi 0, %s109
    %s112 = sphi 0, %s111
    %s126 = sphi 0, %s112
    %s130 = sphi 0, %s130
    %s132 = sphi 0, %s130
    %s133 = sphi 0, %s132
    %s147 = sphi 0, %s133
    %s153 = sphi 0, %s155
    %s156 = sphi 0, %s153
    %s157 = sphi 0, %s156
    %s173 = sphi 0, %s157
  $region4: #{_lambda_.2} parent=0 // loop_header_branch
    %15 = sbr.rel (%p13) target = $region8
  $region5: #{_lambda_.2} parent=0 // loop_body
    %s17 = ssub.s32 %s12, 1
    %s18 = ssub.s32 %s12, 2
    %s19 = sadd.s32 %s12, 1
    %s20 = ssub.s32 %s12, %s19
    %p21 = scmp.eq.s32.totalorder %s20, 0
    %s23 = sadd.s32 %s22, 1
    %s24 = scalar_select %p21, %s22, %s23
    %p27 = pneg %p21
    %p28 = scmp.eq.s32.totalorder %s12, 1
    %p29 = por %p27, %p28
    %p30 = scmp.ne.s32.totalorder %s22, %s25
    %p31 = scmp.eq.s32.totalorder %s12, 0
    %p32 = por %p30, %p31
    %p33 = scmp.ne.s32.totalorder %s22, %s25
    %p34 = scmp.eq.s32.totalorder %s17, 1
    %p35 = por %p33, %p34
    %p36 = scmp.ne.s32.totalorder %s25, %s26
    %p37 = scmp.eq.s32.totalorder %s17, 0
    %p38 = por %p36, %p37
    %p39 = scmp.ne.s32.totalorder %s25, %s26
    %p40 = scmp.eq.s32.totalorder %s18, 1
    %p41 = por %p39, %p40
    %p43 = scmp.ne.s32.totalorder %s26, %s42
    %p44 = scmp.eq.s32.totalorder %s18, 0
    %p45 = por %p43, %p44
    %s47 = sadd.s32 %s46, 1
    %p50 = scmp.eq.s32.totalorder %s12, 1
    %p51 = scmp.ne.s32.totalorder %s46, %s48
    %p52 = scmp.eq.s32.totalorder %s12, 0
    %p53 = por %p51, %p52
    %p54 = scmp.ne.s32.totalorder %s46, %s48
    %p55 = scmp.eq.s32.totalorder %s17, 1
    %p56 = por %p54, %p55
    %p57 = scmp.ne.s32.totalorder %s48, %s49
    %p58 = scmp.eq.s32.totalorder %s17, 0
    %p59 = por %p57, %p58
    %p60 = scmp.ne.s32.totalorder %s48, %s49
    %p61 = scmp.eq.s32.totalorder %s18, 1
    %p62 = por %p60, %p61
    %p64 = scmp.ne.s32.totalorder %s49, %s63
    %p65 = scmp.eq.s32.totalorder %s18, 0
    %p66 = por %p64, %p65
    %s68 = sadd.s32 %s67, 1
    %p71 = scmp.eq.s32.totalorder %s12, 1
    %p72 = scmp.ne.s32.totalorder %s67, %s69
    %p73 = scmp.eq.s32.totalorder %s12, 0
    %p74 = por %p72, %p73
    %p75 = scmp.ne.s32.totalorder %s67, %s69
    %p76 = scmp.eq.s32.totalorder %s17, 1
    %p77 = por %p75, %p76
    %p78 = scmp.ne.s32.totalorder %s69, %s70
    %p79 = scmp.eq.s32.totalorder %s17, 0
    %p80 = por %p78, %p79
    %p81 = scmp.ne.s32.totalorder %s69, %s70
    %p82 = scmp.eq.s32.totalorder %s18, 1
    %p83 = por %p81, %p82
    %p85 = scmp.ne.s32.totalorder %s70, %s84
    %p86 = scmp.eq.s32.totalorder %s18, 0
    %p87 = por %p85, %p86
    %s89 = sadd.s32 %s88, 1
    %p92 = scmp.eq.s32.totalorder %s12, 1
    %p93 = scmp.ne.s32.totalorder %s88, %s90
    %p94 = scmp.eq.s32.totalorder %s12, 0
    %p95 = por %p93, %p94
    %p96 = scmp.ne.s32.totalorder %s88, %s90
    %p97 = scmp.eq.s32.totalorder %s17, 1
    %p98 = por %p96, %p97
    %p99 = scmp.ne.s32.totalorder %s90, %s91
    %p100 = scmp.eq.s32.totalorder %s17, 0
    %p101 = por %p99, %p100
    %p102 = scmp.ne.s32.totalorder %s90, %s91
    %p103 = scmp.eq.s32.totalorder %s18, 1
    %p104 = por %p102, %p103
    %p106 = scmp.ne.s32.totalorder %s91, %s105
    %p107 = scmp.eq.s32.totalorder %s18, 0
    %p108 = por %p106, %p107
    %s110 = sadd.s32 %s109, 1
    %p113 = scmp.eq.s32.totalorder %s12, 1
    %p114 = scmp.ne.s32.totalorder %s109, %s111
    %p115 = scmp.eq.s32.totalorder %s12, 0
    %p116 = por %p114, %p115
    %p117 = scmp.ne.s32.totalorder %s109, %s111
    %p118 = scmp.eq.s32.totalorder %s17, 1
    %p119 = por %p117, %p118
    %p120 = scmp.ne.s32.totalorder %s111, %s112
    %p121 = scmp.eq.s32.totalorder %s17, 0
    %p122 = por %p120, %p121
    %p123 = scmp.ne.s32.totalorder %s111, %s112
    %p124 = scmp.eq.s32.totalorder %s18, 1
    %p125 = por %p123, %p124
    %p127 = scmp.ne.s32.totalorder %s112, %s126
    %p128 = scmp.eq.s32.totalorder %s18, 0
    %p129 = por %p127, %p128
    %s131 = sadd.s32 %s130, 1
    %p134 = scmp.eq.s32.totalorder %s12, 1
    %p135 = scmp.ne.s32.totalorder %s130, %s132
    %p136 = scmp.eq.s32.totalorder %s12, 0
    %p137 = por %p135, %p136
    %p138 = scmp.ne.s32.totalorder %s130, %s132
    %p139 = scmp.eq.s32.totalorder %s17, 1
    %p140 = por %p138, %p139
    %p141 = scmp.ne.s32.totalorder %s132, %s133
    %p142 = scmp.eq.s32.totalorder %s17, 0
    %p143 = por %p141, %p142
    %p144 = scmp.ne.s32.totalorder %s132, %s133
    %p145 = scmp.eq.s32.totalorder %s18, 1
    %p146 = por %p144, %p145
    %p148 = scmp.ne.s32.totalorder %s133, %s147
    %p149 = scmp.eq.s32.totalorder %s18, 0
    %p150 = por %p148, %p149
    %s151 = ssub.s32 %s12, %s19
    %p152 = scmp.eq.s32.totalorder %s151, 0
    %s154 = sadd.s32 %s153, 1
    %s155 = scalar_select %p152, %s153, %s154
    %p158 = pneg %p152
    %p159 = scmp.eq.s32.totalorder %s12, 1
    %p160 = por %p158, %p159
    %p161 = scmp.ne.s32.totalorder %s153, %s156
    %p162 = scmp.eq.s32.totalorder %s12, 0
    %p163 = por %p161, %p162
    %p164 = scmp.ne.s32.totalorder %s153, %s156
    %p165 = scmp.eq.s32.totalorder %s17, 1
    %p166 = por %p164, %p165
    %p167 = scmp.ne.s32.totalorder %s156, %s157
    %p168 = scmp.eq.s32.totalorder %s17, 0
    %p169 = por %p167, %p168
    %p170 = scmp.ne.s32.totalorder %s156, %s157
    %p171 = scmp.eq.s32.totalorder %s18, 1
    %p172 = por %p170, %p171
    %p174 = scmp.ne.s32.totalorder %s157, %s173
    %p175 = scmp.eq.s32.totalorder %s18, 0
    %p176 = por %p174, %p175
    %p177 = scmp.le.s32.totalorder 1, %s12
    %p178 = scmp.lt.s32.totalorder %s12, 3
    %p179 = pnand %p177, %p178
    %p180 = pneg %p179
    // Predicated region
    $region9: #{_lambda_.2} parent=5 // pred_check
      _
    $region10: #{_lambda_.2} parent=5 // pred_check_branch
      %182 = sbr.rel (%p179) target = $region12
    $region11: #{_lambda_.2} parent=5 // pred_region
      %s183 = ssub.s32 %s12, 1
      // Predicated region
      $region13: #{_lambda_.2} parent=11 // pred_check
        %p184 = pneg %p59
      $region14: #{_lambda_.2} parent=11 // pred_check_branch
        %186 = sbr.rel (%p184) target = $region16
      $region15: #{_lambda_.2} parent=11 // pred_region
        _
      $region16: #{_lambda_.2} parent=11 // pred_fallthru
        _
      // Predicated region
      $region17: #{_lambda_.2} parent=11 // pred_check
        %p187 = pneg %p80
      $region18: #{_lambda_.2} parent=11 // pred_check_branch
        %189 = sbr.rel (%p187) target = $region20
      $region19: #{_lambda_.2} parent=11 // pred_region
        _
      $region20: #{_lambda_.2} parent=11 // pred_fallthru
        _
      // Predicated region
      $region21: #{_lambda_.2} parent=11 // pred_check
        %p190 = pneg %p101
      $region22: #{_lambda_.2} parent=11 // pred_check_branch
        %192 = sbr.rel (%p190) target = $region24
      $region23: #{_lambda_.2} parent=11 // pred_region
        _
      $region24: #{_lambda_.2} parent=11 // pred_fallthru
        _
      // Predicated region
      $region25: #{_lambda_.2} parent=11 // pred_check
        %p193 = pneg %p122
      $region26: #{_lambda_.2} parent=11 // pred_check_branch
        %195 = sbr.rel (%p193) target = $region28
      $region27: #{_lambda_.2} parent=11 // pred_region
        _
      $region28: #{_lambda_.2} parent=11 // pred_fallthru
        _
      // Predicated region
      $region29: #{_lambda_.2} parent=11 // pred_check
        %p196 = pneg %p143
      $region30: #{_lambda_.2} parent=11 // pred_check_branch
        %198 = sbr.rel (%p196) target = $region32
      $region31: #{_lambda_.2} parent=11 // pred_region
        _
      $region32: #{_lambda_.2} parent=11 // pred_fallthru
        _
    $region12: #{_lambda_.2} parent=5 // pred_fallthru
      _
    %p199 = scmp.lt.s32.totalorder %s12, 2
    // Predicated region
    $region33: #{_lambda_.2} parent=5 // pred_check
      %p200 = pneg %p199
    $region34: #{_lambda_.2} parent=5 // pred_check_branch
      %202 = sbr.rel (%p200) target = $region36
    $region35: #{_lambda_.2} parent=5 // pred_region
      // Predicated region
      $region37: #{_lambda_.2} parent=35 // pred_check
        %p203 = pneg %p32
      $region38: #{_lambda_.2} parent=35 // pred_check_branch
        %205 = sbr.rel (%p203) target = $region40
      $region39: #{_lambda_.2} parent=35 // pred_region
        %p206 = scmp.lt.s32.totalorder %s12, 1
        %s207 = scalar_select %p206, %s12, 1
        %s208 = smul.addr %s207, 32
        %s209 = smul.addr %s208, 8
        %s210 = scalar_lea.vmem %s0, %s209
      $region40: #{_lambda_.2} parent=35 // pred_fallthru
        _
    $region36: #{_lambda_.2} parent=5 // pred_fallthru
      _
    %p211 = scmp.le.s32.totalorder 1, %s12
    %p212 = scmp.lt.s32.totalorder %s12, 3
    %p213 = pnand %p211, %p212
    %p214 = pneg %p213
    // Predicated region
    $region41: #{_lambda_.2} parent=5 // pred_check
      _
    $region42: #{_lambda_.2} parent=5 // pred_check_branch
      %216 = sbr.rel (%p213) target = $region44
    $region43: #{_lambda_.2} parent=5 // pred_region
      %s217 = ssub.s32 %s12, 1
      %p218 = scmp.lt.s32.totalorder %s17, 1
      %s219 = scalar_select %p218, %s17, 1
      %s220 = smul.addr %s219, 32
      %s221 = smul.addr %s220, 8
      %s222 = scalar_lea.vmem %s0, %s221
      %p223 = pneg %p38
      %p224 = pneg %p35
      %p225 = pneg %p59
      %p226 = pneg %p56
      %p227 = pneg %p80
      %p228 = pneg %p77
      %p229 = pneg %p101
      %p230 = pneg %p98
      %p231 = pneg %p122
      %p232 = pneg %p119
      %p233 = pneg %p143
      %p234 = pneg %p140
      %p235 = pneg %p169
      %p236 = pneg %p166
      %p237 = scmp.lt.s32.totalorder %s17, 1
      %s238 = scalar_select %p237, %s17, 1
      %s239 = smul.addr %s238, 32
      %s240 = smul.addr %s239, 8
      %s241 = scalar_lea.vmem %s6, %s240
      %p242 = scmp.lt.s32.totalorder %s17, 1
      %s243 = scalar_select %p242, %s17, 1
      %s244 = smul.addr %s243, 32
      %s245 = smul.addr %s244, 8
      %s246 = scalar_lea.vmem %s0, %s245
      %p247 = scmp.lt.s32.totalorder %s17, 1
      %s248 = scalar_select %p247, %s17, 1
      %s249 = smul.addr %s248, 32
      %s250 = smul.addr %s249, 8
      %s251 = scalar_lea.vmem %s6, %s250
      %v252 = vld [vmem:[%s246] sm:$0xff]
      %v253 = vld [vmem:[%s246 + $0x8] sm:$0xff]
      %v254 = vld [vmem:[%s246 + $0x10] sm:$0xff]
      %v255 = vld [vmem:[%s246 + $0x18] sm:$0xff]
      %v256 = vld [vmem:[%s246 + $0x20] sm:$0xff]
      %v257 = vld [vmem:[%s246 + $0x28] sm:$0xff]
      %v258 = vld [vmem:[%s246 + $0x30] sm:$0xff]
      %v259 = vld [vmem:[%s246 + $0x38] sm:$0xff]
      %v260 = vld [vmem:[%s246 + $0x40] sm:$0xff]
      %v261 = vld [vmem:[%s246 + $0x48] sm:$0xff]
      %v262 = vld [vmem:[%s246 + $0x50] sm:$0xff]
      %v263 = vld [vmem:[%s246 + $0x58] sm:$0xff]
      %v264 = vld [vmem:[%s246 + $0x60] sm:$0xff]
      %v265 = vld [vmem:[%s246 + $0x68] sm:$0xff]
      %v266 = vld [vmem:[%s246 + $0x70] sm:$0xff]
      %v267 = vld [vmem:[%s246 + $0x78] sm:$0xff]
      %v268 = vld [vmem:[%s246 + $0x80] sm:$0xff]
      %v269 = vld [vmem:[%s246 + $0x88] sm:$0xff]
      %v270 = vld [vmem:[%s246 + $0x90] sm:$0xff]
      %v271 = vld [vmem:[%s246 + $0x98] sm:$0xff]
      %v272 = vld [vmem:[%s246 + $0xa0] sm:$0xff]
      %v273 = vld [vmem:[%s246 + $0xa8] sm:$0xff]
      %v274 = vld [vmem:[%s246 + $0xb0] sm:$0xff]
      %v275 = vld [vmem:[%s246 + $0xb8] sm:$0xff]
      %v276 = vld [vmem:[%s246 + $0xc0] sm:$0xff]
      %v277 = vld [vmem:[%s246 + $0xc8] sm:$0xff]
      %v278 = vld [vmem:[%s246 + $0xd0] sm:$0xff]
      %v279 = vld [vmem:[%s246 + $0xd8] sm:$0xff]
      %v280 = vld [vmem:[%s246 + $0xe0] sm:$0xff]
      %v281 = vld [vmem:[%s246 + $0xe8] sm:$0xff]
      %v282 = vld [vmem:[%s246 + $0xf0] sm:$0xff]
      %v283 = vld [vmem:[%s246 + $0xf8] sm:$0xff]
      %v284 = vld [vmem:[%s1] sm:$0xff]
      %v285 = vld [vmem:[%s1 + $0x8] sm:$0xff]
      %v286 = vld [vmem:[%s1 + $0x10] sm:$0xff]
      %v287 = vld [vmem:[%s1 + $0x18] sm:$0xff]
      %v288 = vld [vmem:[%s1 + $0x20] sm:$0xff]
      %v289 = vld [vmem:[%s1 + $0x28] sm:$0xff]
      %v290 = vld [vmem:[%s1 + $0x30] sm:$0xff]
      %v291 = vld [vmem:[%s1 + $0x38] sm:$0xff]
      %v292 = vld [vmem:[%s1 + $0x40] sm:$0xff]
      %v293 = vld [vmem:[%s1 + $0x48] sm:$0xff]
      %v294 = vld [vmem:[%s1 + $0x50] sm:$0xff]
      %v295 = vld [vmem:[%s1 + $0x58] sm:$0xff]
      %v296 = vld [vmem:[%s1 + $0x60] sm:$0xff]
      %v297 = vld [vmem:[%s1 + $0x68] sm:$0xff]
      %v298 = vld [vmem:[%s1 + $0x70] sm:$0xff]
      %v299 = vld [vmem:[%s1 + $0x78] sm:$0xff]
      %v300 = vld [vmem:[%s1 + $0x80] sm:$0xff]
      %v301 = vld [vmem:[%s1 + $0x88] sm:$0xff]
      %v302 = vld [vmem:[%s1 + $0x90] sm:$0xff]
      %v303 = vld [vmem:[%s1 + $0x98] sm:$0xff]
      %v304 = vld [vmem:[%s1 + $0xa0] sm:$0xff]
      %v305 = vld [vmem:[%s1 + $0xa8] sm:$0xff]
      %306 = vmatprep.subr.mxu0 0.0
      %307 = vmatpush1.msra.mxu0 %v267
      %308 = vmatprep.subr.mxu0 0.0
      %309 = vmatpush1.msra.mxu0 %v266
      %310 = vmatprep.subr.mxu0 0.0
      %311 = vmatpush1.msra.mxu0 %v265
      %312 = vmatprep.subr.mxu0 0.0
      %313 = vmatpush1.msra.mxu0 %v264
      %314 = vmatprep.subr.mxu0 0.0
      %315 = vmatpush1.msra.mxu0 %v263
      %316 = vmatprep.subr.mxu0 0.0
      %317 = vmatpush1.msra.mxu0 %v262
      %318 = vmatprep.subr.mxu0 0.0
      %319 = vmatpush1.msra.mxu0 %v261
      %320 = vmatprep.subr.mxu0 0.0
      %321 = vmatpush1.msra.mxu0 %v260
      %322 = vmatprep.subr.mxu0 0.0
      %323 = vmatpush1.msra.mxu0 %v259
      %324 = vmatprep.subr.mxu0 0.0
      %325 = vmatpush1.msra.mxu0 %v258
      %326 = vmatprep.subr.mxu0 0.0
      %327 = vmatpush1.msra.mxu0 %v257
      %328 = vmatprep.subr.mxu0 0.0
      %329 = vmatpush1.msra.mxu0 %v256
      %330 = vmatprep.subr.mxu0 0.0
      %331 = vmatpush1.msra.mxu0 %v255
      %332 = vmatprep.subr.mxu0 0.0
      %333 = vmatpush1.msra.mxu0 %v254
      %334 = vmatprep.subr.mxu0 0.0
      %335 = vmatpush1.msra.mxu0 %v253
      %336 = vmatprep.subr.mxu0 0.0
      %337 = vmatpush1.msra.mxu0 %v252
      %338 = vmatprep.subr.mxu0 0.0
      %339 = vmatpush2.msra.mxu0 %v283
      %340 = vmatprep.subr.mxu0 0.0
      %341 = vmatpush2.msra.mxu0 %v282
      %342 = vmatprep.subr.mxu0 0.0
      %343 = vmatpush2.msra.mxu0 %v281
      %344 = vmatprep.subr.mxu0 0.0
      %345 = vmatpush2.msra.mxu0 %v280
      %346 = vmatprep.subr.mxu0 0.0
      %347 = vmatpush2.msra.mxu0 %v279
      %348 = vmatprep.subr.mxu0 0.0
      %349 = vmatpush2.msra.mxu0 %v278
      %350 = vmatprep.subr.mxu0 0.0
      %351 = vmatpush2.msra.mxu0 %v277
      %352 = vmatprep.subr.mxu0 0.0
      %353 = vmatpush2.msra.mxu0 %v276
      %354 = vmatprep.subr.mxu0 0.0
      %355 = vmatpush2.msra.mxu0 %v275
      %356 = vmatprep.subr.mxu0 0.0
      %357 = vmatpush2.msra.mxu0 %v274
      %358 = vmatprep.subr.mxu0 0.0
      %359 = vmatpush2.msra.mxu0 %v273
      %360 = vmatprep.subr.mxu0 0.0
      %361 = vmatpush2.msra.mxu0 %v272
      %362 = vmatprep.subr.mxu0 0.0
      %363 = vmatpush2.msra.mxu0 %v271
      %364 = vmatprep.subr.mxu0 0.0
      %365 = vmatpush2.msra.mxu0 %v270
      %366 = vmatprep.subr.mxu0 0.0
      %367 = vmatpush2.msra.mxu0 %v269
      %368 = vmatprep.subr.mxu0 0.0
      %369 = vmatpush2.msra.mxu0 %v268
      %370 = vmatprep.mubr.f32.mxu0 %v285
      %371 = vmatmul.mubr.f32.gmra.mxu0 %v284
      %v372 = vpop.f32.mrf.mxu0
      %v373 = vadd.f32 0.0, %v372
      %v374 = vpop.f32.mrf.mxu0
      %375 = vmatprep.mubr.f32.mxu0 %v287
      %376 = vmatmul.mubr.f32.gmra.mxu0 %v286
      %v377 = vpop.f32.mrf.mxu0
      %v378 = vadd.f32 0.0, %v377
      %v379 = vpop.f32.mrf.mxu0
      %380 = vmatprep.mubr.f32.mxu0 %v289
      %381 = vmatmul.mubr.f32.gmra.mxu0 %v288
      %v382 = vpop.f32.mrf.mxu0
      %v383 = vadd.f32 0.0, %v382
      %v384 = vpop.f32.mrf.mxu0
      %385 = vmatprep.mubr.f32.mxu0 %v291
      %386 = vmatmul.mubr.f32.gmra.mxu0 %v290
      %v387 = vpop.f32.mrf.mxu0
      %v388 = vadd.f32 0.0, %v387
      %v389 = vpop.f32.mrf.mxu0
      %390 = vmatprep.mubr.f32.mxu0 %v293
      %391 = vmatmul.mubr.f32.gmra.mxu0 %v292
      %v392 = vpop.f32.mrf.mxu0
      %v393 = vadd.f32 0.0, %v392
      %v394 = vpop.f32.mrf.mxu0
      %395 = vmatprep.mubr.f32.mxu0 %v295
      %396 = vmatmul.mubr.f32.gmra.mxu0 %v294
      %v397 = vpop.f32.mrf.mxu0
      %v398 = vadd.f32 0.0, %v397
      %v399 = vpop.f32.mrf.mxu0
      %400 = vmatprep.mubr.f32.mxu0 %v297
      %401 = vmatmul.mubr.f32.gmra.mxu0 %v296
      %v402 = vpop.f32.mrf.mxu0
      %v403 = vadd.f32 0.0, %v402
      %v404 = vpop.f32.mrf.mxu0
      %405 = vmatprep.mubr.f32.mxu0 %v299
      %406 = vmatmul.mubr.f32.gmra.mxu0 %v298
      %v407 = vpop.f32.mrf.mxu0
      %v408 = vadd.f32 0.0, %v407
      %v409 = vpop.f32.mrf.mxu0
      %410 = vmatprep.mubr.f32.mxu0 %v301
      %411 = vmatmul.mubr.f32.gmra.mxu0 %v300
      %v412 = vpop.f32.mrf.mxu0
      %v413 = vadd.f32 0.0, %v412
      %v414 = vpop.f32.mrf.mxu0
      %415 = vmatprep.mubr.f32.mxu0 %v303
      %416 = vmatmul.mubr.f32.gmra.mxu0 %v302
      %v417 = vpop.f32.mrf.mxu0
      %v418 = vadd.f32 0.0, %v417
      %v419 = vpop.f32.mrf.mxu0
      %420 = vmatprep.mubr.f32.mxu0 %v305
      %421 = vmatmul.mubr.f32.gmra.mxu0 %v304
      %v422 = vpop.f32.mrf.mxu0
      %v423 = vadd.f32 0.0, %v422
      %v424 = vpop.f32.mrf.mxu0
      %425 = vdwg.mxu0
      %v426 = vld [vmem:[%s2] sm:$0xff]
      %v427 = vld [vmem:[%s2 + $0x8] sm:$0xff]
      %v428 = vld [vmem:[%s3] sm:$0x1]
      %v430 = vlaneseq
      %v431 = vshrl.u32 %v430, 7
      %v432 = vsub.s32 0, %v431
      %v433 = vrot.slane %v428, %v432
      %vm435 = vcmask 130048
      %v437 = vsel %vm435, %v373, 0
      %v440 = vsel %vm435, %v378, 0
      %v443 = vsel %vm435, %v383, 0
      %v446 = vsel %vm435, %v388, 0
      %v449 = vsel %vm435, %v393, 0
      %v452 = vsel %vm435, %v398, 0
      %v455 = vsel %vm435, %v403, 0
      %v458 = vsel %vm435, %v408, 0
      %v461 = vsel %vm435, %v413, 0
      %v464 = vsel %vm435, %v418, 0
      %v467 = vsel %vm435, %v423, 0
      %469 = vmatprep.subr.mxu0 0.0
      %470 = vmatpush1.msra.mxu0 0.0
      %471 = vmatprep.subr.mxu0 0.0
      %472 = vmatpush1.msra.mxu0 0.0
      %473 = vmatprep.subr.mxu0 0.0
      %474 = vmatpush1.msra.mxu0 0.0
      %475 = vmatprep.subr.mxu0 0.0
      %476 = vmatpush1.msra.mxu0 0.0
      %477 = vmatprep.subr.mxu0 0.0
      %478 = vmatpush1.msra.mxu0 0.0
      %479 = vmatprep.subr.mxu0 0.0
      %480 = vmatpush1.msra.mxu0 0.0
      %481 = vmatprep.subr.mxu0 0.0
      %482 = vmatpush1.msra.mxu0 0.0
      %483 = vmatprep.subr.mxu0 0.0
      %484 = vmatpush1.msra.mxu0 0.0
      %485 = vmatprep.subr.mxu0 0.0
      %486 = vmatpush1.msra.mxu0 0.0
      %487 = vmatprep.subr.mxu0 0.0
      %488 = vmatpush1.msra.mxu0 0.0
      %489 = vmatprep.subr.mxu0 0.0
      %490 = vmatpush1.msra.mxu0 0.0
      %491 = vmatprep.subr.mxu0 0.0
      %492 = vmatpush1.msra.mxu0 0.0
      %493 = vmatprep.subr.mxu0 0.0
      %494 = vmatpush1.msra.mxu0 0.0
      %495 = vmatprep.subr.mxu0 0.0
      %496 = vmatpush1.msra.mxu0 0.0
      %497 = vmatprep.subr.mxu0 0.0
      %498 = vmatpush1.msra.mxu0 %v427
      %499 = vmatprep.subr.mxu0 0.0
      %500 = vmatpush1.msra.mxu0 %v426
      %501 = vmatprep.subr.mxu0 0.0
      %502 = vmatpush2.msra.mxu0 0.0
      %503 = vmatprep.subr.mxu0 0.0
      %504 = vmatpush2.msra.mxu0 0.0
      %505 = vmatprep.subr.mxu0 0.0
      %506 = vmatpush2.msra.mxu0 0.0
      %507 = vmatprep.subr.mxu0 0.0
      %508 = vmatpush2.msra.mxu0 0.0
      %509 = vmatprep.subr.mxu0 0.0
      %510 = vmatpush2.msra.mxu0 0.0
      %511 = vmatprep.subr.mxu0 0.0
      %512 = vmatpush2.msra.mxu0 0.0
      %513 = vmatprep.subr.mxu0 0.0
      %514 = vmatpush2.msra.mxu0 0.0
      %515 = vmatprep.subr.mxu0 0.0
      %516 = vmatpush2.msra.mxu0 0.0
      %517 = vmatprep.subr.mxu0 0.0
      %518 = vmatpush2.msra.mxu0 0.0
      %519 = vmatprep.subr.mxu0 0.0
      %520 = vmatpush2.msra.mxu0 0.0
      %521 = vmatprep.subr.mxu0 0.0
      %522 = vmatpush2.msra.mxu0 0.0
      %523 = vmatprep.subr.mxu0 0.0
      %524 = vmatpush2.msra.mxu0 0.0
      %525 = vmatprep.subr.mxu0 0.0
      %526 = vmatpush2.msra.mxu0 0.0
      %527 = vmatprep.subr.mxu0 0.0
      %528 = vmatpush2.msra.mxu0 0.0
      %529 = vmatprep.subr.mxu0 0.0
      %530 = vmatpush2.msra.mxu0 0.0
      %531 = vmatprep.subr.mxu0 0.0
      %532 = vmatpush2.msra.mxu0 0.0
      %533 = vmatprep.mubr.f32.mxu0 0.0
      %534 = vmatmul.mubr.f32.gmra.mxu0 %v437
      %v535 = vpop.f32.mrf.mxu0
      %v536 = vadd.f32 %v433, %v535
      %v537 = vpop.f32.mrf.mxu0
      %538 = vmatprep.mubr.f32.mxu0 0.0
      %539 = vmatmul.mubr.f32.gmra.mxu0 %v440
      %v540 = vpop.f32.mrf.mxu0
      %v541 = vadd.f32 %v433, %v540
      %v542 = vpop.f32.mrf.mxu0
      %543 = vmatprep.mubr.f32.mxu0 0.0
      %544 = vmatmul.mubr.f32.gmra.mxu0 %v443
      %v545 = vpop.f32.mrf.mxu0
      %v546 = vadd.f32 %v433, %v545
      %v547 = vpop.f32.mrf.mxu0
      %548 = vmatprep.mubr.f32.mxu0 0.0
      %549 = vmatmul.mubr.f32.gmra.mxu0 %v446
      %v550 = vpop.f32.mrf.mxu0
      %v551 = vadd.f32 %v433, %v550
      %v552 = vpop.f32.mrf.mxu0
      %553 = vmatprep.mubr.f32.mxu0 0.0
      %554 = vmatmul.mubr.f32.gmra.mxu0 %v449
      %v555 = vpop.f32.mrf.mxu0
      %v556 = vadd.f32 %v433, %v555
      %v557 = vpop.f32.mrf.mxu0
      %558 = vmatprep.mubr.f32.mxu0 0.0
      %559 = vmatmul.mubr.f32.gmra.mxu0 %v452
      %v560 = vpop.f32.mrf.mxu0
      %v561 = vadd.f32 %v433, %v560
      %v562 = vpop.f32.mrf.mxu0
      %563 = vmatprep.mubr.f32.mxu0 0.0
      %564 = vmatmul.mubr.f32.gmra.mxu0 %v455
      %v565 = vpop.f32.mrf.mxu0
      %v566 = vadd.f32 %v433, %v565
      %v567 = vpop.f32.mrf.mxu0
      %568 = vmatprep.mubr.f32.mxu0 0.0
      %569 = vmatmul.mubr.f32.gmra.mxu0 %v458
      %v570 = vpop.f32.mrf.mxu0
      %v571 = vadd.f32 %v433, %v570
      %v572 = vpop.f32.mrf.mxu0
      %573 = vmatprep.mubr.f32.mxu0 0.0
      %574 = vmatmul.mubr.f32.gmra.mxu0 %v461
      %v575 = vpop.f32.mrf.mxu0
      %v576 = vadd.f32 %v433, %v575
      %v577 = vpop.f32.mrf.mxu0
      %578 = vmatprep.mubr.f32.mxu0 0.0
      %579 = vmatmul.mubr.f32.gmra.mxu0 %v464
      %v580 = vpop.f32.mrf.mxu0
      %v581 = vadd.f32 %v433, %v580
      %v582 = vpop.f32.mrf.mxu0
      %583 = vmatprep.mubr.f32.mxu0 0.0
      %584 = vmatmul.mubr.f32.gmra.mxu0 %v467
      %v585 = vpop.f32.mrf.mxu0
      %v586 = vadd.f32 %v433, %v585
      %v587 = vpop.f32.mrf.mxu0
      %588 = vdwg.mxu0
      %v589 = vld [vmem:[%s4] sm:$0xff]
      %v590 = vld [vmem:[%s4 + $0x8] sm:$0xff]
      %v591 = vld [vmem:[%s4 + $0x10] sm:$0xff]
      %v592 = vld [vmem:[%s4 + $0x18] sm:$0xff]
      %v593 = vld [vmem:[%s4 + $0x20] sm:$0xff]
      %v594 = vld [vmem:[%s4 + $0x28] sm:$0xff]
      %v595 = vld [vmem:[%s4 + $0x30] sm:$0xff]
      %v596 = vld [vmem:[%s4 + $0x38] sm:$0xff]
      %v597 = vld [vmem:[%s4 + $0x40] sm:$0xff]
      %v598 = vld [vmem:[%s4 + $0x48] sm:$0xff]
      %v599 = vld [vmem:[%s4 + $0x50] sm:$0xff]
      %v600 = vmul.f32 %v536, %v589
      %v601 = vmul.f32 %v541, %v590
      %v602 = vmul.f32 %v546, %v591
      %v603 = vmul.f32 %v551, %v592
      %v604 = vmul.f32 %v556, %v593
      %v605 = vmul.f32 %v561, %v594
      %v606 = vmul.f32 %v566, %v595
      %v607 = vmul.f32 %v571, %v596
      %v608 = vmul.f32 %v576, %v597
      %v609 = vmul.f32 %v581, %v598
      %v610 = vmul.f32 %v586, %v599
      %v611 = vmax.f32 %v600, 0.0
      %v612 = vmax.f32 %v601, 0.0
      %v613 = vmax.f32 %v602, 0.0
      %v614 = vmax.f32 %v603, 0.0
      %v615 = vmax.f32 %v604, 0.0
      %v616 = vmax.f32 %v605, 0.0
      %v617 = vmax.f32 %v606, 0.0
      %v618 = vmax.f32 %v607, 0.0
      %v619 = vmax.f32 %v608, 0.0
      %v620 = vmax.f32 %v609, 0.0
      %v621 = vmax.f32 %v610, 0.0
      %v622 = vld [vmem:[%s5] sm:$0xff]
      %v623 = vld [vmem:[%s5 + $0x8] sm:$0xff]
      %v624 = vld [vmem:[%s5 + $0x10] sm:$0xff]
      %v625 = vld [vmem:[%s5 + $0x18] sm:$0xff]
      %v626 = vld [vmem:[%s5 + $0x20] sm:$0xff]
      %v627 = vld [vmem:[%s5 + $0x28] sm:$0xff]
      %v628 = vld [vmem:[%s5 + $0x30] sm:$0xff]
      %v629 = vld [vmem:[%s5 + $0x38] sm:$0xff]
      %v630 = vld [vmem:[%s5 + $0x40] sm:$0xff]
      %v631 = vld [vmem:[%s5 + $0x48] sm:$0xff]
      %v632 = vld [vmem:[%s5 + $0x50] sm:$0xff]
      %v633 = vld [vmem:[%s5 + $0x58] sm:$0xff]
      %v634 = vld [vmem:[%s5 + $0x60] sm:$0xff]
      %v635 = vld [vmem:[%s5 + $0x68] sm:$0xff]
      %v636 = vld [vmem:[%s5 + $0x70] sm:$0xff]
      %v637 = vld [vmem:[%s5 + $0x78] sm:$0xff]
      %v638 = vld [vmem:[%s5 + $0x80] sm:$0xff]
      %v639 = vld [vmem:[%s5 + $0x88] sm:$0xff]
      %v640 = vld [vmem:[%s5 + $0x90] sm:$0xff]
      %v641 = vld [vmem:[%s5 + $0x98] sm:$0xff]
      %v642 = vld [vmem:[%s5 + $0xa0] sm:$0xff]
      %v643 = vld [vmem:[%s5 + $0xa8] sm:$0xff]
      %v644 = vld [vmem:[%s5 + $0xb0] sm:$0xff]
      %v645 = vld [vmem:[%s5 + $0xb8] sm:$0xff]
      %v646 = vld [vmem:[%s5 + $0xc0] sm:$0xff]
      %v647 = vld [vmem:[%s5 + $0xc8] sm:$0xff]
      %v648 = vld [vmem:[%s5 + $0xd0] sm:$0xff]
      %v649 = vld [vmem:[%s5 + $0xd8] sm:$0xff]
      %v650 = vld [vmem:[%s5 + $0xe0] sm:$0xff]
      %v651 = vld [vmem:[%s5 + $0xe8] sm:$0xff]
      %v652 = vld [vmem:[%s5 + $0xf0] sm:$0xff]
      %v653 = vld [vmem:[%s5 + $0xf8] sm:$0xff]
      %vm654 = vcmask 719872
      %v656 = vsel %vm654, %v622, 0
      %v659 = vsel %vm654, %v623, 0
      %v662 = vsel %vm654, %v624, 0
      %v665 = vsel %vm654, %v625, 0
      %v668 = vsel %vm654, %v626, 0
      %v671 = vsel %vm654, %v627, 0
      %v674 = vsel %vm654, %v628, 0
      %v677 = vsel %vm654, %v629, 0
      %v680 = vsel %vm654, %v630, 0
      %v683 = vsel %vm654, %v631, 0
      %v686 = vsel %vm654, %v632, 0
      %v689 = vsel %vm654, %v633, 0
      %v692 = vsel %vm654, %v634, 0
      %v695 = vsel %vm654, %v635, 0
      %v698 = vsel %vm654, %v636, 0
      %v701 = vsel %vm654, %v637, 0
      %v704 = vsel %vm654, %v638, 0
      %v707 = vsel %vm654, %v639, 0
      %v710 = vsel %vm654, %v640, 0
      %v713 = vsel %vm654, %v641, 0
      %v716 = vsel %vm654, %v642, 0
      %v719 = vsel %vm654, %v643, 0
      %v722 = vsel %vm654, %v644, 0
      %v725 = vsel %vm654, %v645, 0
      %v728 = vsel %vm654, %v646, 0
      %v731 = vsel %vm654, %v647, 0
      %v734 = vsel %vm654, %v648, 0
      %v737 = vsel %vm654, %v649, 0
      %v740 = vsel %vm654, %v650, 0
      %v743 = vsel %vm654, %v651, 0
      %v746 = vsel %vm654, %v652, 0
      %v749 = vsel %vm654, %v653, 0
      %751 = vmatprep.subr.mxu0 0.0
      %752 = vmatpush1.msra.mxu0 0.0
      %753 = vmatprep.subr.mxu0 0.0
      %754 = vmatpush1.msra.mxu0 0.0
      %755 = vmatprep.subr.mxu0 0.0
      %756 = vmatpush1.msra.mxu0 0.0
      %757 = vmatprep.subr.mxu0 0.0
      %758 = vmatpush1.msra.mxu0 0.0
      %759 = vmatprep.subr.mxu0 0.0
      %760 = vmatpush1.msra.mxu0 0.0
      %761 = vmatprep.subr.mxu0 0.0
      %762 = vmatpush1.msra.mxu0 %v621
      %763 = vmatprep.subr.mxu0 0.0
      %764 = vmatpush1.msra.mxu0 %v620
      %765 = vmatprep.subr.mxu0 0.0
      %766 = vmatpush1.msra.mxu0 %v619
      %767 = vmatprep.subr.mxu0 0.0
      %768 = vmatpush1.msra.mxu0 %v618
      %769 = vmatprep.subr.mxu0 0.0
      %770 = vmatpush1.msra.mxu0 %v617
      %771 = vmatprep.subr.mxu0 0.0
      %772 = vmatpush1.msra.mxu0 %v616
      %773 = vmatprep.subr.mxu0 0.0
      %774 = vmatpush1.msra.mxu0 %v615
      %775 = vmatprep.subr.mxu0 0.0
      %776 = vmatpush1.msra.mxu0 %v614
      %777 = vmatprep.subr.mxu0 0.0
      %778 = vmatpush1.msra.mxu0 %v613
      %779 = vmatprep.subr.mxu0 0.0
      %780 = vmatpush1.msra.mxu0 %v612
      %781 = vmatprep.subr.mxu0 0.0
      %782 = vmatpush1.msra.mxu0 %v611
      %783 = vmatprep.subr.mxu0 0.0
      %784 = vmatpush2.msra.mxu0 0.0
      %785 = vmatprep.subr.mxu0 0.0
      %786 = vmatpush2.msra.mxu0 0.0
      %787 = vmatprep.subr.mxu0 0.0
      %788 = vmatpush2.msra.mxu0 0.0
      %789 = vmatprep.subr.mxu0 0.0
      %790 = vmatpush2.msra.mxu0 0.0
      %791 = vmatprep.subr.mxu0 0.0
      %792 = vmatpush2.msra.mxu0 0.0
      %793 = vmatprep.subr.mxu0 0.0
      %794 = vmatpush2.msra.mxu0 0.0
      %795 = vmatprep.subr.mxu0 0.0
      %796 = vmatpush2.msra.mxu0 0.0
      %797 = vmatprep.subr.mxu0 0.0
      %798 = vmatpush2.msra.mxu0 0.0
      %799 = vmatprep.subr.mxu0 0.0
      %800 = vmatpush2.msra.mxu0 0.0
      %801 = vmatprep.subr.mxu0 0.0
      %802 = vmatpush2.msra.mxu0 0.0
      %803 = vmatprep.subr.mxu0 0.0
      %804 = vmatpush2.msra.mxu0 0.0
      %805 = vmatprep.subr.mxu0 0.0
      %806 = vmatpush2.msra.mxu0 0.0
      %807 = vmatprep.subr.mxu0 0.0
      %808 = vmatpush2.msra.mxu0 0.0
      %809 = vmatprep.subr.mxu0 0.0
      %810 = vmatpush2.msra.mxu0 0.0
      %811 = vmatprep.subr.mxu0 0.0
      %812 = vmatpush2.msra.mxu0 0.0
      %813 = vmatprep.subr.mxu0 0.0
      %814 = vmatpush2.msra.mxu0 0.0
      %815 = vmatprep.mubr.f32.mxu0 0.0
      %816 = vmatmul.mubr.f32.gmra.mxu0 %v656
      %v817 = vpop.f32.mrf.mxu0
      %v818 = vadd.f32 0.0, %v817
      %v819 = vpop.f32.mrf.mxu0
      %820 = vmatprep.mubr.f32.mxu0 0.0
      %821 = vmatmul.mubr.f32.gmra.mxu0 %v659
      %v822 = vpop.f32.mrf.mxu0
      %v823 = vadd.f32 0.0, %v822
      %v824 = vpop.f32.mrf.mxu0
      %825 = vmatprep.mubr.f32.mxu0 0.0
      %826 = vmatmul.mubr.f32.gmra.mxu0 %v662
      %v827 = vpop.f32.mrf.mxu0
      %v828 = vadd.f32 0.0, %v827
      %v829 = vpop.f32.mrf.mxu0
      %830 = vmatprep.mubr.f32.mxu0 0.0
      %831 = vmatmul.mubr.f32.gmra.mxu0 %v665
      %v832 = vpop.f32.mrf.mxu0
      %v833 = vadd.f32 0.0, %v832
      %v834 = vpop.f32.mrf.mxu0
      %835 = vmatprep.mubr.f32.mxu0 0.0
      %836 = vmatmul.mubr.f32.gmra.mxu0 %v668
      %v837 = vpop.f32.mrf.mxu0
      %v838 = vadd.f32 0.0, %v837
      %v839 = vpop.f32.mrf.mxu0
      %840 = vmatprep.mubr.f32.mxu0 0.0
      %841 = vmatmul.mubr.f32.gmra.mxu0 %v671
      %v842 = vpop.f32.mrf.mxu0
      %v843 = vadd.f32 0.0, %v842
      %v844 = vpop.f32.mrf.mxu0
      %845 = vmatprep.mubr.f32.mxu0 0.0
      %846 = vmatmul.mubr.f32.gmra.mxu0 %v674
      %v847 = vpop.f32.mrf.mxu0
      %v848 = vadd.f32 0.0, %v847
      %v849 = vpop.f32.mrf.mxu0
      %850 = vmatprep.mubr.f32.mxu0 0.0
      %851 = vmatmul.mubr.f32.gmra.mxu0 %v677
      %v852 = vpop.f32.mrf.mxu0
      %v853 = vadd.f32 0.0, %v852
      %v854 = vpop.f32.mrf.mxu0
      %855 = vmatprep.mubr.f32.mxu0 0.0
      %856 = vmatmul.mubr.f32.gmra.mxu0 %v680
      %v857 = vpop.f32.mrf.mxu0
      %v858 = vadd.f32 0.0, %v857
      %v859 = vpop.f32.mrf.mxu0
      %860 = vmatprep.mubr.f32.mxu0 0.0
      %861 = vmatmul.mubr.f32.gmra.mxu0 %v683
      %v862 = vpop.f32.mrf.mxu0
      %v863 = vadd.f32 0.0, %v862
      %v864 = vpop.f32.mrf.mxu0
      %865 = vmatprep.mubr.f32.mxu0 0.0
      %866 = vmatmul.mubr.f32.gmra.mxu0 %v686
      %v867 = vpop.f32.mrf.mxu0
      %v868 = vadd.f32 0.0, %v867
      %v869 = vpop.f32.mrf.mxu0
      %870 = vmatprep.mubr.f32.mxu0 0.0
      %871 = vmatmul.mubr.f32.gmra.mxu0 %v689
      %v872 = vpop.f32.mrf.mxu0
      %v873 = vadd.f32 0.0, %v872
      %v874 = vpop.f32.mrf.mxu0
      %875 = vmatprep.mubr.f32.mxu0 0.0
      %876 = vmatmul.mubr.f32.gmra.mxu0 %v692
      %v877 = vpop.f32.mrf.mxu0
      %v878 = vadd.f32 0.0, %v877
      %v879 = vpop.f32.mrf.mxu0
      %880 = vmatprep.mubr.f32.mxu0 0.0
      %881 = vmatmul.mubr.f32.gmra.mxu0 %v695
      %v882 = vpop.f32.mrf.mxu0
      %v883 = vadd.f32 0.0, %v882
      %v884 = vpop.f32.mrf.mxu0
      %885 = vmatprep.mubr.f32.mxu0 0.0
      %886 = vmatmul.mubr.f32.gmra.mxu0 %v698
      %v887 = vpop.f32.mrf.mxu0
      %v888 = vadd.f32 0.0, %v887
      %v889 = vpop.f32.mrf.mxu0
      %890 = vmatprep.mubr.f32.mxu0 0.0
      %891 = vmatmul.mubr.f32.gmra.mxu0 %v701
      %v892 = vpop.f32.mrf.mxu0
      %v893 = vadd.f32 0.0, %v892
      %v894 = vpop.f32.mrf.mxu0
      %895 = vmatprep.mubr.f32.mxu0 0.0
      %896 = vmatmul.mubr.f32.gmra.mxu0 %v704
      %v897 = vpop.f32.mrf.mxu0
      %v898 = vadd.f32 0.0, %v897
      %v899 = vpop.f32.mrf.mxu0
      %900 = vmatprep.mubr.f32.mxu0 0.0
      %901 = vmatmul.mubr.f32.gmra.mxu0 %v707
      %v902 = vpop.f32.mrf.mxu0
      %v903 = vadd.f32 0.0, %v902
      %v904 = vpop.f32.mrf.mxu0
      %905 = vmatprep.mubr.f32.mxu0 0.0
      %906 = vmatmul.mubr.f32.gmra.mxu0 %v710
      %v907 = vpop.f32.mrf.mxu0
      %v908 = vadd.f32 0.0, %v907
      %v909 = vpop.f32.mrf.mxu0
      %910 = vmatprep.mubr.f32.mxu0 0.0
      %911 = vmatmul.mubr.f32.gmra.mxu0 %v713
      %v912 = vpop.f32.mrf.mxu0
      %v913 = vadd.f32 0.0, %v912
      %v914 = vpop.f32.mrf.mxu0
      %915 = vmatprep.mubr.f32.mxu0 0.0
      %916 = vmatmul.mubr.f32.gmra.mxu0 %v716
      %v917 = vpop.f32.mrf.mxu0
      %v918 = vadd.f32 0.0, %v917
      %v919 = vpop.f32.mrf.mxu0
      %920 = vmatprep.mubr.f32.mxu0 0.0
      %921 = vmatmul.mubr.f32.gmra.mxu0 %v719
      %v922 = vpop.f32.mrf.mxu0
      %v923 = vadd.f32 0.0, %v922
      %v924 = vpop.f32.mrf.mxu0
      %925 = vmatprep.mubr.f32.mxu0 0.0
      %926 = vmatmul.mubr.f32.gmra.mxu0 %v722
      %v927 = vpop.f32.mrf.mxu0
      %v928 = vadd.f32 0.0, %v927
      %v929 = vpop.f32.mrf.mxu0
      %930 = vmatprep.mubr.f32.mxu0 0.0
      %931 = vmatmul.mubr.f32.gmra.mxu0 %v725
      %v932 = vpop.f32.mrf.mxu0
      %v933 = vadd.f32 0.0, %v932
      %v934 = vpop.f32.mrf.mxu0
      %935 = vmatprep.mubr.f32.mxu0 0.0
      %936 = vmatmul.mubr.f32.gmra.mxu0 %v728
      %v937 = vpop.f32.mrf.mxu0
      %v938 = vadd.f32 0.0, %v937
      %v939 = vpop.f32.mrf.mxu0
      %940 = vmatprep.mubr.f32.mxu0 0.0
      %941 = vmatmul.mubr.f32.gmra.mxu0 %v731
      %v942 = vpop.f32.mrf.mxu0
      %v943 = vadd.f32 0.0, %v942
      %v944 = vpop.f32.mrf.mxu0
      %945 = vmatprep.mubr.f32.mxu0 0.0
      %946 = vmatmul.mubr.f32.gmra.mxu0 %v734
      %v947 = vpop.f32.mrf.mxu0
      %v948 = vadd.f32 0.0, %v947
      %v949 = vpop.f32.mrf.mxu0
      %950 = vmatprep.mubr.f32.mxu0 0.0
      %951 = vmatmul.mubr.f32.gmra.mxu0 %v737
      %v952 = vpop.f32.mrf.mxu0
      %v953 = vadd.f32 0.0, %v952
      %v954 = vpop.f32.mrf.mxu0
      %955 = vmatprep.mubr.f32.mxu0 0.0
      %956 = vmatmul.mubr.f32.gmra.mxu0 %v740
      %v957 = vpop.f32.mrf.mxu0
      %v958 = vadd.f32 0.0, %v957
      %v959 = vpop.f32.mrf.mxu0
      %960 = vmatprep.mubr.f32.mxu0 0.0
      %961 = vmatmul.mubr.f32.gmra.mxu0 %v743
      %v962 = vpop.f32.mrf.mxu0
      %v963 = vadd.f32 0.0, %v962
      %v964 = vpop.f32.mrf.mxu0
      %965 = vmatprep.mubr.f32.mxu0 0.0
      %966 = vmatmul.mubr.f32.gmra.mxu0 %v746
      %v967 = vpop.f32.mrf.mxu0
      %v968 = vadd.f32 0.0, %v967
      %v969 = vpop.f32.mrf.mxu0
      %970 = vmatprep.mubr.f32.mxu0 0.0
      %971 = vmatmul.mubr.f32.gmra.mxu0 %v749
      %v972 = vpop.f32.mrf.mxu0
      %v973 = vadd.f32 0.0, %v972
      %v974 = vpop.f32.mrf.mxu0
      %975 = vdwg.mxu0
      %976 = vst.msk [vmem:[%s251] sm:$0xff] %vm435, %v818
      %977 = vst.msk [vmem:[%s251 + $0x8] sm:$0xff] %vm435, %v823
      %978 = vst.msk [vmem:[%s251 + $0x10] sm:$0xff] %vm435, %v828
      %979 = vst.msk [vmem:[%s251 + $0x18] sm:$0xff] %vm435, %v833
      %980 = vst.msk [vmem:[%s251 + $0x20] sm:$0xff] %vm435, %v838
      %981 = vst.msk [vmem:[%s251 + $0x28] sm:$0xff] %vm435, %v843
      %982 = vst.msk [vmem:[%s251 + $0x30] sm:$0xff] %vm435, %v848
      %983 = vst.msk [vmem:[%s251 + $0x38] sm:$0xff] %vm435, %v853
      %984 = vst.msk [vmem:[%s251 + $0x40] sm:$0xff] %vm435, %v858
      %985 = vst.msk [vmem:[%s251 + $0x48] sm:$0xff] %vm435, %v863
      %986 = vst.msk [vmem:[%s251 + $0x50] sm:$0xff] %vm435, %v868
      %987 = vst.msk [vmem:[%s251 + $0x58] sm:$0xff] %vm435, %v873
      %988 = vst.msk [vmem:[%s251 + $0x60] sm:$0xff] %vm435, %v878
      %989 = vst.msk [vmem:[%s251 + $0x68] sm:$0xff] %vm435, %v883
      %990 = vst.msk [vmem:[%s251 + $0x70] sm:$0xff] %vm435, %v888
      %991 = vst.msk [vmem:[%s251 + $0x78] sm:$0xff] %vm435, %v893
      %992 = vst.msk [vmem:[%s251 + $0x80] sm:$0xff] %vm435, %v898
      %993 = vst.msk [vmem:[%s251 + $0x88] sm:$0xff] %vm435, %v903
      %994 = vst.msk [vmem:[%s251 + $0x90] sm:$0xff] %vm435, %v908
      %995 = vst.msk [vmem:[%s251 + $0x98] sm:$0xff] %vm435, %v913
      %996 = vst.msk [vmem:[%s251 + $0xa0] sm:$0xff] %vm435, %v918
      %997 = vst.msk [vmem:[%s251 + $0xa8] sm:$0xff] %vm435, %v923
      %998 = vst.msk [vmem:[%s251 + $0xb0] sm:$0xff] %vm435, %v928
      %999 = vst.msk [vmem:[%s251 + $0xb8] sm:$0xff] %vm435, %v933
      %1000 = vst.msk [vmem:[%s251 + $0xc0] sm:$0xff] %vm435, %v938
      %1001 = vst.msk [vmem:[%s251 + $0xc8] sm:$0xff] %vm435, %v943
      %1002 = vst.msk [vmem:[%s251 + $0xd0] sm:$0xff] %vm435, %v948
      %1003 = vst.msk [vmem:[%s251 + $0xd8] sm:$0xff] %vm435, %v953
      %1004 = vst.msk [vmem:[%s251 + $0xe0] sm:$0xff] %vm435, %v958
      %1005 = vst.msk [vmem:[%s251 + $0xe8] sm:$0xff] %vm435, %v963
      %1006 = vst.msk [vmem:[%s251 + $0xf0] sm:$0xff] %vm435, %v968
      %1007 = vst.msk [vmem:[%s251 + $0xf8] sm:$0xff] %vm435, %v973
      %1040 = vrot.lane.b32.xlu0 %v252, 16
      %v1041 = vpop.permute.xlu0 %1040
      %1042 = vrot.lane.b32.xlu0 %v253, 16
      %v1043 = vpop.permute.xlu0 %1042
      %1044 = vrot.lane.b32.xlu0 %v254, 16
      %v1045 = vpop.permute.xlu0 %1044
      %1046 = vrot.lane.b32.xlu0 %v255, 16
      %v1047 = vpop.permute.xlu0 %1046
      %1048 = vrot.lane.b32.xlu0 %v256, 16
      %v1049 = vpop.permute.xlu0 %1048
      %1050 = vrot.lane.b32.xlu0 %v257, 16
      %v1051 = vpop.permute.xlu0 %1050
      %1052 = vrot.lane.b32.xlu0 %v258, 16
      %v1053 = vpop.permute.xlu0 %1052
      %1054 = vrot.lane.b32.xlu0 %v259, 16
      %v1055 = vpop.permute.xlu0 %1054
      %1056 = vrot.lane.b32.xlu0 %v260, 16
      %v1057 = vpop.permute.xlu0 %1056
      %1058 = vrot.lane.b32.xlu0 %v261, 16
      %v1059 = vpop.permute.xlu0 %1058
      %1060 = vrot.lane.b32.xlu0 %v262, 16
      %v1061 = vpop.permute.xlu0 %1060
      %1062 = vrot.lane.b32.xlu0 %v263, 16
      %v1063 = vpop.permute.xlu0 %1062
      %1064 = vrot.lane.b32.xlu0 %v264, 16
      %v1065 = vpop.permute.xlu0 %1064
      %1066 = vrot.lane.b32.xlu0 %v265, 16
      %v1067 = vpop.permute.xlu0 %1066
      %1068 = vrot.lane.b32.xlu0 %v266, 16
      %v1069 = vpop.permute.xlu0 %1068
      %1070 = vrot.lane.b32.xlu0 %v267, 16
      %v1071 = vpop.permute.xlu0 %1070
      %1072 = vrot.lane.b32.xlu0 %v268, 16
      %v1073 = vpop.permute.xlu0 %1072
      %1074 = vrot.lane.b32.xlu0 %v269, 16
      %v1075 = vpop.permute.xlu0 %1074
      %1076 = vrot.lane.b32.xlu0 %v270, 16
      %v1077 = vpop.permute.xlu0 %1076
      %1078 = vrot.lane.b32.xlu0 %v271, 16
      %v1079 = vpop.permute.xlu0 %1078
      %1080 = vrot.lane.b32.xlu0 %v272, 16
      %v1081 = vpop.permute.xlu0 %1080
      %1082 = vrot.lane.b32.xlu0 %v273, 16
      %v1083 = vpop.permute.xlu0 %1082
      %1084 = vrot.lane.b32.xlu0 %v274, 16
      %v1085 = vpop.permute.xlu0 %1084
      %1086 = vrot.lane.b32.xlu0 %v275, 16
      %v1087 = vpop.permute.xlu0 %1086
      %1088 = vrot.lane.b32.xlu0 %v276, 16
      %v1089 = vpop.permute.xlu0 %1088
      %1090 = vrot.lane.b32.xlu0 %v277, 16
      %v1091 = vpop.permute.xlu0 %1090
      %1092 = vrot.lane.b32.xlu0 %v278, 16
      %v1093 = vpop.permute.xlu0 %1092
      %1094 = vrot.lane.b32.xlu0 %v279, 16
      %v1095 = vpop.permute.xlu0 %1094
      %1096 = vrot.lane.b32.xlu0 %v280, 16
      %v1097 = vpop.permute.xlu0 %1096
      %1098 = vrot.lane.b32.xlu0 %v281, 16
      %v1099 = vpop.permute.xlu0 %1098
      %1100 = vrot.lane.b32.xlu0 %v282, 16
      %v1101 = vpop.permute.xlu0 %1100
      %1102 = vrot.lane.b32.xlu0 %v283, 16
      %v1103 = vpop.permute.xlu0 %1102
      %vm1136 = vcmask 261248
      %1137 = vst.msk [vmem:[%s251] sm:$0xff] %vm1136, %v1041
      %1138 = vst.msk [vmem:[%s251 + $0x8] sm:$0xff] %vm1136, %v1043
      %1139 = vst.msk [vmem:[%s251 + $0x10] sm:$0xff] %vm1136, %v1045
      %1140 = vst.msk [vmem:[%s251 + $0x18] sm:$0xff] %vm1136, %v1047
      %1141 = vst.msk [vmem:[%s251 + $0x20] sm:$0xff] %vm1136, %v1049
      %1142 = vst.msk [vmem:[%s251 + $0x28] sm:$0xff] %vm1136, %v1051
      %1143 = vst.msk [vmem:[%s251 + $0x30] sm:$0xff] %vm1136, %v1053
      %1144 = vst.msk [vmem:[%s251 + $0x38] sm:$0xff] %vm1136, %v1055
      %1145 = vst.msk [vmem:[%s251 + $0x40] sm:$0xff] %vm1136, %v1057
      %1146 = vst.msk [vmem:[%s251 + $0x48] sm:$0xff] %vm1136, %v1059
      %1147 = vst.msk [vmem:[%s251 + $0x50] sm:$0xff] %vm1136, %v1061
      %1148 = vst.msk [vmem:[%s251 + $0x58] sm:$0xff] %vm1136, %v1063
      %1149 = vst.msk [vmem:[%s251 + $0x60] sm:$0xff] %vm1136, %v1065
      %1150 = vst.msk [vmem:[%s251 + $0x68] sm:$0xff] %vm1136, %v1067
      %1151 = vst.msk [vmem:[%s251 + $0x70] sm:$0xff] %vm1136, %v1069
      %1152 = vst.msk [vmem:[%s251 + $0x78] sm:$0xff] %vm1136, %v1071
      %1153 = vst.msk [vmem:[%s251 + $0x80] sm:$0xff] %vm1136, %v1073
      %1154 = vst.msk [vmem:[%s251 + $0x88] sm:$0xff] %vm1136, %v1075
      %1155 = vst.msk [vmem:[%s251 + $0x90] sm:$0xff] %vm1136, %v1077
      %1156 = vst.msk [vmem:[%s251 + $0x98] sm:$0xff] %vm1136, %v1079
      %1157 = vst.msk [vmem:[%s251 + $0xa0] sm:$0xff] %vm1136, %v1081
      %1158 = vst.msk [vmem:[%s251 + $0xa8] sm:$0xff] %vm1136, %v1083
      %1159 = vst.msk [vmem:[%s251 + $0xb0] sm:$0xff] %vm1136, %v1085
      %1160 = vst.msk [vmem:[%s251 + $0xb8] sm:$0xff] %vm1136, %v1087
      %1161 = vst.msk [vmem:[%s251 + $0xc0] sm:$0xff] %vm1136, %v1089
      %1162 = vst.msk [vmem:[%s251 + $0xc8] sm:$0xff] %vm1136, %v1091
      %1163 = vst.msk [vmem:[%s251 + $0xd0] sm:$0xff] %vm1136, %v1093
      %1164 = vst.msk [vmem:[%s251 + $0xd8] sm:$0xff] %vm1136, %v1095
      %1165 = vst.msk [vmem:[%s251 + $0xe0] sm:$0xff] %vm1136, %v1097
      %1166 = vst.msk [vmem:[%s251 + $0xe8] sm:$0xff] %vm1136, %v1099
      %1167 = vst.msk [vmem:[%s251 + $0xf0] sm:$0xff] %vm1136, %v1101
      %1168 = vst.msk [vmem:[%s251 + $0xf8] sm:$0xff] %vm1136, %v1103
      %p1169 = scmp.lt.s32.totalorder %s17, 1
      %s1170 = scalar_select %p1169, %s17, 1
      %s1171 = smul.addr %s1170, 32
      %s1172 = smul.addr %s1171, 8
      %s1173 = scalar_lea.vmem %s6, %s1172
      // Predicated region
      $region45: #{_lambda_.2} parent=43 // pred_check
        %p1174 = pneg %p166
      $region46: #{_lambda_.2} parent=43 // pred_check_branch
        %1176 = sbr.rel (%p1174) target = $region48
      $region47: #{_lambda_.2} parent=43 // pred_region
        _
      $region48: #{_lambda_.2} parent=43 // pred_fallthru
        _
    $region44: #{_lambda_.2} parent=5 // pred_fallthru
      _
    %p1177 = scmp.le.s32.totalorder 2, %s12
    // Predicated region
    $region49: #{_lambda_.2} parent=5 // pred_check
      %p1178 = pneg %p1177
    $region50: #{_lambda_.2} parent=5 // pred_check_branch
      %1180 = sbr.rel (%p1178) target = $region52
    $region51: #{_lambda_.2} parent=5 // pred_region
      %s1181 = ssub.s32 %s12, 2
      // Predicated region
      $region53: #{_lambda_.2} parent=51 // pred_check
        %p1182 = pneg %p172
      $region54: #{_lambda_.2} parent=51 // pred_check_branch
        %1184 = sbr.rel (%p1182) target = $region56
      $region55: #{_lambda_.2} parent=51 // pred_region
        %p1185 = scmp.lt.s32.totalorder %s18, 1
        %s1186 = scalar_select %p1185, %s18, 1
        %s1187 = smul.addr %s1186, 32
        %s1188 = smul.addr %s1187, 8
        %s1189 = scalar_lea.vmem %s6, %s1188
      $region56: #{_lambda_.2} parent=51 // pred_fallthru
        _
    $region52: #{_lambda_.2} parent=5 // pred_fallthru
      _
  $region6: #{_lambda_.2} parent=0 // loop_footer
    %s16 = sadd.s32 1, %s12
  $region7: #{_lambda_.2} parent=0 // loop_footer_branch
    %11 = sbr.rel target = $region3
  $region8: #{_lambda_.2} parent=0 // loop_exit
    _

// kernel: _lambda_.3
$region0: #{_lambda_.3}
  #allocation0 [shape = 'u32[]', space=smem, size = 0x4, offset = 0x4, fixed_abs, tag = 'smem constant byte address 0x4 - core index']
  #allocation1 [shape = 'u32[144,128]{1,0:T(1,128)}', space=vmem, size = 0x12000, scoped, tag = 'internal scratch']
  %s0 = inlined_call_operand.vmem [shape: f32[2,2,10,18,32], index: 0, kind: input, shape index: {}]
  %s1 = inlined_call_operand.vmem [shape: f32[9,32,16], index: 1, kind: input, shape index: {}]
  %s2 = inlined_call_operand.vmem [shape: f32[1,16], index: 2, kind: input, shape index: {}]
  %s3 = inlined_call_operand.vmem [shape: f32[2,256,16], index: 3, kind: output, shape index: {}]
  %s4 = sld [smem:[#allocation0]]
  $region45: #{_lambda_.3} parent=0
    _
  %s6 = ssub.s32 1, %s4
  %s7 = scalar_select 0, %s6, %s4
  loop: start=0, step=1, limit=6
  $region2: #{_lambda_.3} parent=0 // loop_pre_header
    _
  $region3: #{_lambda_.3} parent=0 // loop_header
    %s9 = sphi 0, %s13
    %p10 = scmp.ge.s32.totalorder %s9, 6
    %s16 = sphi 0, %s28
    %s17 = sphi 0, %s24
    %s18 = sphi 0, %s16
    %s19 = sphi 0, %s17
    %s20 = sphi 0, %s18
    %s21 = sphi 0, %s19
    %s33 = sphi 0, %s35
    %s36 = sphi 0, %s33
    %s37 = sphi 0, %s36
    %s53 = sphi 0, %s37
    %s57 = sphi 0, %s57
    %s59 = sphi 0, %s57
    %s60 = sphi 0, %s59
    %s74 = sphi 0, %s60
    %s78 = sphi 0, %s78
    %s80 = sphi 0, %s78
    %s81 = sphi 0, %s80
    %s95 = sphi 0, %s81
    %s103 = sphi 0, %s105
    %s106 = sphi 0, %s103
    %s107 = sphi 0, %s106
    %s123 = sphi 0, %s107
  $region4: #{_lambda_.3} parent=0 // loop_header_branch
    %12 = sbr.rel (%p10) target = $region8
  $region5: #{_lambda_.3} parent=0 // loop_body
    %s14 = ssub.s32 %s9, 1
    %s15 = ssub.s32 %s9, 2
    %s22 = sadd.s32 1, %s17
    %p23 = scmp.ge.s32.totalorder %s22, 2
    %s24 = scalar_select %p23, 0, %s22
    %s25 = sadd.s32 1, %s16
    %s26 = scalar_select %p23, %s25, %s16
    %p27 = scmp.ge.s32.totalorder %s26, 2
    %s28 = scalar_select %p27, 0, %s26
    %s29 = ssub.s32 %s16, %s28
    %s30 = ssub.s32 %s17, %s24
    %s31 = sor.u32 %s29, %s30
    %p32 = scmp.eq.s32.totalorder %s31, 0
    %s34 = sadd.s32 %s33, 1
    %s35 = scalar_select %p32, %s33, %s34
    %p38 = pneg %p32
    %p39 = scmp.eq.s32.totalorder %s9, 3
    %p40 = por %p38, %p39
    %p41 = scmp.ne.s32.totalorder %s33, %s36
    %p42 = scmp.eq.s32.totalorder %s9, 0
    %p43 = por %p41, %p42
    %p44 = scmp.ne.s32.totalorder %s33, %s36
    %p45 = scmp.eq.s32.totalorder %s14, 3
    %p46 = por %p44, %p45
    %p47 = scmp.ne.s32.totalorder %s36, %s37
    %p48 = scmp.eq.s32.totalorder %s14, 0
    %p49 = por %p47, %p48
    %p50 = scmp.ne.s32.totalorder %s36, %s37
    %p51 = scmp.eq.s32.totalorder %s15, 3
    %p52 = por %p50, %p51
    %p54 = scmp.ne.s32.totalorder %s37, %s53
    %p55 = scmp.eq.s32.totalorder %s15, 0
    %p56 = por %p54, %p55
    %s58 = sadd.s32 %s57, 1
    %p61 = scmp.eq.s32.totalorder %s9, 3
    %p62 = scmp.ne.s32.totalorder %s57, %s59
    %p63 = scmp.eq.s32.totalorder %s9, 0
    %p64 = por %p62, %p63
    %p65 = scmp.ne.s32.totalorder %s57, %s59
    %p66 = scmp.eq.s32.totalorder %s14, 3
    %p67 = por %p65, %p66
    %p68 = scmp.ne.s32.totalorder %s59, %s60
    %p69 = scmp.eq.s32.totalorder %s14, 0
    %p70 = por %p68, %p69
    %p71 = scmp.ne.s32.totalorder %s59, %s60
    %p72 = scmp.eq.s32.totalorder %s15, 3
    %p73 = por %p71, %p72
    %p75 = scmp.ne.s32.totalorder %s60, %s74
    %p76 = scmp.eq.s32.totalorder %s15, 0
    %p77 = por %p75, %p76
    %s79 = sadd.s32 %s78, 1
    %p82 = scmp.eq.s32.totalorder %s9, 3
    %p83 = scmp.ne.s32.totalorder %s78, %s80
    %p84 = scmp.eq.s32.totalorder %s9, 0
    %p85 = por %p83, %p84
    %p86 = scmp.ne.s32.totalorder %s78, %s80
    %p87 = scmp.eq.s32.totalorder %s14, 3
    %p88 = por %p86, %p87
    %p89 = scmp.ne.s32.totalorder %s80, %s81
    %p90 = scmp.eq.s32.totalorder %s14, 0
    %p91 = por %p89, %p90
    %p92 = scmp.ne.s32.totalorder %s80, %s81
    %p93 = scmp.eq.s32.totalorder %s15, 3
    %p94 = por %p92, %p93
    %p96 = scmp.ne.s32.totalorder %s81, %s95
    %p97 = scmp.eq.s32.totalorder %s15, 0
    %p98 = por %p96, %p97
    %s99 = ssub.s32 %s16, %s28
    %s100 = ssub.s32 %s17, %s24
    %s101 = sor.u32 %s99, %s100
    %p102 = scmp.eq.s32.totalorder %s101, 0
    %s104 = sadd.s32 %s103, 1
    %s105 = scalar_select %p102, %s103, %s104
    %p108 = pneg %p102
    %p109 = scmp.eq.s32.totalorder %s9, 3
    %p110 = por %p108, %p109
    %p111 = scmp.ne.s32.totalorder %s103, %s106
    %p112 = scmp.eq.s32.totalorder %s9, 0
    %p113 = por %p111, %p112
    %p114 = scmp.ne.s32.totalorder %s103, %s106
    %p115 = scmp.eq.s32.totalorder %s14, 3
    %p116 = por %p114, %p115
    %p117 = scmp.ne.s32.totalorder %s106, %s107
    %p118 = scmp.eq.s32.totalorder %s14, 0
    %p119 = por %p117, %p118
    %p120 = scmp.ne.s32.totalorder %s106, %s107
    %p121 = scmp.eq.s32.totalorder %s15, 3
    %p122 = por %p120, %p121
    %p124 = scmp.ne.s32.totalorder %s107, %s123
    %p125 = scmp.eq.s32.totalorder %s15, 0
    %p126 = por %p124, %p125
    %p127 = scmp.le.s32.totalorder 1, %s9
    %p128 = scmp.lt.s32.totalorder %s9, 5
    %p129 = pnand %p127, %p128
    %p130 = pneg %p129
    // Predicated region
    $region9: #{_lambda_.3} parent=5 // pred_check
      _
    $region10: #{_lambda_.3} parent=5 // pred_check_branch
      %132 = sbr.rel (%p129) target = $region12
    $region11: #{_lambda_.3} parent=5 // pred_region
      %s133 = ssub.s32 %s9, 1
      // Predicated region
      $region13: #{_lambda_.3} parent=11 // pred_check
        %p134 = pneg %p70
      $region14: #{_lambda_.3} parent=11 // pred_check_branch
        %136 = sbr.rel (%p134) target = $region16
      $region15: #{_lambda_.3} parent=11 // pred_region
        _
      $region16: #{_lambda_.3} parent=11 // pred_fallthru
        _
      // Predicated region
      $region17: #{_lambda_.3} parent=11 // pred_check
        %p137 = pneg %p91
      $region18: #{_lambda_.3} parent=11 // pred_check_branch
        %139 = sbr.rel (%p137) target = $region20
      $region19: #{_lambda_.3} parent=11 // pred_region
        _
      $region20: #{_lambda_.3} parent=11 // pred_fallthru
        _
    $region12: #{_lambda_.3} parent=5 // pred_fallthru
      _
    %p140 = scmp.lt.s32.totalorder %s9, 4
    // Predicated region
    $region21: #{_lambda_.3} parent=5 // pred_check
      %p141 = pneg %p140
    $region22: #{_lambda_.3} parent=5 // pred_check_branch
      %143 = sbr.rel (%p141) target = $region24
    $region23: #{_lambda_.3} parent=5 // pred_region
      // Predicated region
      $region25: #{_lambda_.3} parent=23 // pred_check
        %p144 = pneg %p43
      $region26: #{_lambda_.3} parent=23 // pred_check_branch
        %146 = sbr.rel (%p144) target = $region28
      $region27: #{_lambda_.3} parent=23 // pred_region
        %p147 = scmp.lt.s32.totalorder %s16, 1
        %s148 = scalar_select %p147, %s16, 1
        %p149 = scmp.lt.s32.totalorder %s17, 1
        %s150 = scalar_select %p149, %s17, 1
        %s151 = smul.addr %s150, 30
        %s152 = smul.addr %s148, 60
        %s153 = sadd.s32 %s151, %s152
        %s154 = smul.addr %s153, 8
        %s155 = scalar_lea.vmem %s0, %s154
      $region28: #{_lambda_.3} parent=23 // pred_fallthru
        _
    $region24: #{_lambda_.3} parent=5 // pred_fallthru
      _
    %p156 = scmp.le.s32.totalorder 1, %s9
    %p157 = scmp.lt.s32.totalorder %s9, 5
    %p158 = pnand %p156, %p157
    %p159 = pneg %p158
    // Predicated region
    $region29: #{_lambda_.3} parent=5 // pred_check
      _
    $region30: #{_lambda_.3} parent=5 // pred_check_branch
      %161 = sbr.rel (%p158) target = $region32
    $region31: #{_lambda_.3} parent=5 // pred_region
      %s162 = ssub.s32 %s9, 1
      %p163 = scmp.lt.s32.totalorder %s18, 1
      %s164 = scalar_select %p163, %s18, 1
      %p165 = scmp.lt.s32.totalorder %s19, 1
      %s166 = scalar_select %p165, %s19, 1
      %s167 = smul.addr %s166, 30
      %s168 = smul.addr %s164, 60
      %s169 = sadd.s32 %s167, %s168
      %s170 = smul.addr %s169, 8
      %s171 = scalar_lea.vmem %s0, %s170
      %p172 = pneg %p49
      %p173 = pneg %p46
      %p174 = pneg %p70
      %p175 = pneg %p67
      %p176 = pneg %p91
      %p177 = pneg %p88
      %p178 = pneg %p119
      %p179 = pneg %p116
      %s180 = smul.u32 16, %s19
      %p181 = scmp.lt.s32.totalorder %s18, 1
      %s182 = scalar_select %p181, %s18, 1
      %p183 = scmp.lt.s32.totalorder %s180, 31
      %s184 = scalar_select %p183, %s180, 31
      %s185 = smul.addr %s182, 32
      %s186 = sadd.s32 %s184, %s185
      %s187 = smul.addr %s186, 8
      %s188 = scalar_lea.vmem %s3, %s187
      %p189 = scmp.lt.s32.totalorder %s18, 1
      %s190 = scalar_select %p189, %s18, 1
      %p191 = scmp.lt.s32.totalorder %s19, 1
      %s192 = scalar_select %p191, %s19, 1
      %s193 = smul.addr %s192, 30
      %s194 = smul.addr %s190, 60
      %s195 = sadd.s32 %s193, %s194
      %s196 = smul.addr %s195, 8
      %s197 = scalar_lea.vmem %s0, %s196
      %s198 = smul.u32 16, %s19
      %p199 = scmp.lt.s32.totalorder %s18, 1
      %s200 = scalar_select %p199, %s18, 1
      %p201 = scmp.lt.s32.totalorder %s198, 31
      %s202 = scalar_select %p201, %s198, 31
      %s203 = smul.addr %s200, 32
      %s204 = sadd.s32 %s202, %s203
      %s205 = smul.addr %s204, 8
      %s206 = scalar_lea.vmem %s3, %s205
      %s207 = smul.u32 16, %s19
      %v208 = vld [vmem:[%s197] sm:$0xff]
      %v209 = vld [vmem:[%s197 + $0x8] sm:$0xff]
      %v210 = vld [vmem:[%s197 + $0x10] sm:$0x3]
      %v211 = vld [vmem:[%s197 + $0x18] sm:$0xff]
      %v212 = vld [vmem:[%s197 + $0x20] sm:$0xff]
      %v213 = vld [vmem:[%s197 + $0x28] sm:$0x3]
      %v214 = vld [vmem:[%s197 + $0x30] sm:$0xff]
      %v215 = vld [vmem:[%s197 + $0x38] sm:$0xff]
      %v216 = vld [vmem:[%s197 + $0x40] sm:$0x3]
      %v217 = vld [vmem:[%s197 + $0x48] sm:$0xff]
      %v218 = vld [vmem:[%s197 + $0x50] sm:$0xff]
      %v219 = vld [vmem:[%s197 + $0x58] sm:$0x3]
      %v220 = vld [vmem:[%s197 + $0x60] sm:$0xff]
      %v221 = vld [vmem:[%s197 + $0x68] sm:$0xff]
      %v222 = vld [vmem:[%s197 + $0x70] sm:$0x3]
      %v223 = vld [vmem:[%s197 + $0x78] sm:$0xff]
      %v224 = vld [vmem:[%s197 + $0x80] sm:$0xff]
      %v225 = vld [vmem:[%s197 + $0x88] sm:$0x3]
      %v226 = vld [vmem:[%s197 + $0x90] sm:$0xff]
      %v227 = vld [vmem:[%s197 + $0x98] sm:$0xff]
      %v228 = vld [vmem:[%s197 + $0xa0] sm:$0x3]
      %v229 = vld [vmem:[%s197 + $0xa8] sm:$0xff]
      %v230 = vld [vmem:[%s197 + $0xb0] sm:$0xff]
      %v231 = vld [vmem:[%s197 + $0xb8] sm:$0x3]
      %v232 = vld [vmem:[%s197 + $0xc0] sm:$0xff]
      %v233 = vld [vmem:[%s197 + $0xc8] sm:$0xff]
      %v234 = vld [vmem:[%s197 + $0xd0] sm:$0x3]
      %v235 = vld [vmem:[%s197 + $0xd8] sm:$0xff]
      %v236 = vld [vmem:[%s197 + $0xe0] sm:$0xff]
      %v237 = vld [vmem:[%s197 + $0xe8] sm:$0x3]
      %v238 = vld [vmem:[%s2] sm:$0x1]
      %v239 = vld [vmem:[%s1] sm:$0xff]
      %v240 = vld [vmem:[%s1 + $0x8] sm:$0xff]
      %v241 = vld [vmem:[%s1 + $0x10] sm:$0xff]
      %v242 = vld [vmem:[%s1 + $0x18] sm:$0xff]
      %vm267 = vcmask 1046528
      %v268 = vrot.slane %v208, 1
      %v269 = vrot.slane %v209, 1
      %v270 = vsel %vm267, %v268, %v269
      %v271 = vrot.slane %v210, 1
      %v272 = vsel %vm267, %v269, %v271
      %v273 = vrot.slane %v211, 1
      %v274 = vrot.slane %v212, 1
      %v275 = vsel %vm267, %v273, %v274
      %v276 = vrot.slane %v213, 1
      %v277 = vsel %vm267, %v274, %v276
      %v278 = vrot.slane %v214, 1
      %v279 = vrot.slane %v215, 1
      %v280 = vsel %vm267, %v278, %v279
      %v281 = vrot.slane %v216, 1
      %v282 = vsel %vm267, %v279, %v281
      %v283 = vrot.slane %v217, 1
      %v284 = vrot.slane %v218, 1
      %v285 = vsel %vm267, %v283, %v284
      %v286 = vrot.slane %v219, 1
      %v287 = vsel %vm267, %v284, %v286
      %v288 = vrot.slane %v220, 1
      %v289 = vrot.slane %v221, 1
      %v290 = vsel %vm267, %v288, %v289
      %v291 = vrot.slane %v222, 1
      %v292 = vsel %vm267, %v289, %v291
      %v293 = vrot.slane %v223, 1
      %v294 = vrot.slane %v224, 1
      %v295 = vsel %vm267, %v293, %v294
      %v296 = vrot.slane %v225, 1
      %v297 = vsel %vm267, %v294, %v296
      %v298 = vrot.slane %v226, 1
      %v299 = vrot.slane %v227, 1
      %v300 = vsel %vm267, %v298, %v299
      %v301 = vrot.slane %v228, 1
      %v302 = vsel %vm267, %v299, %v301
      %v303 = vrot.slane %v229, 1
      %v304 = vrot.slane %v230, 1
      %v305 = vsel %vm267, %v303, %v304
      %v306 = vrot.slane %v231, 1
      %v307 = vsel %vm267, %v304, %v306
      %s308 = scalar_lea.vmem %s1, 32
      %v309 = vld [vmem:[%s308] sm:$0xff]
      %v310 = vld [vmem:[%s308 + $0x8] sm:$0xff]
      %v311 = vld [vmem:[%s308 + $0x10] sm:$0xff]
      %v312 = vld [vmem:[%s308 + $0x18] sm:$0xff]
      %vm313 = vcmask 261120
      %v314 = vsel %vm313, %v270, 0
      %v316 = vsel %vm313, %v272, 0
      %v318 = vsel %vm313, %v275, 0
      %v320 = vsel %vm313, %v277, 0
      %v322 = vsel %vm313, %v280, 0
      %v324 = vsel %vm313, %v282, 0
      %v326 = vsel %vm313, %v285, 0
      %v328 = vsel %vm313, %v287, 0
      %v330 = vsel %vm313, %v290, 0
      %v332 = vsel %vm313, %v292, 0
      %v334 = vsel %vm313, %v295, 0
      %v336 = vsel %vm313, %v297, 0
      %v338 = vsel %vm313, %v300, 0
      %v340 = vsel %vm313, %v302, 0
      %v342 = vsel %vm313, %v305, 0
      %v344 = vsel %vm313, %v307, 0
      %346 = vmatprep.subr.mxu0 0.0
      %347 = vmatpush1.msra.mxu0 0.0
      %348 = vmatprep.subr.mxu0 0.0
      %349 = vmatpush1.msra.mxu0 0.0
      %350 = vmatprep.subr.mxu0 0.0
      %351 = vmatpush1.msra.mxu0 0.0
      %352 = vmatprep.subr.mxu0 0.0
      %353 = vmatpush1.msra.mxu0 0.0
      %354 = vmatprep.subr.mxu0 0.0
      %355 = vmatpush1.msra.mxu0 0.0
      %356 = vmatprep.subr.mxu0 0.0
      %357 = vmatpush1.msra.mxu0 0.0
      %358 = vmatprep.subr.mxu0 0.0
      %359 = vmatpush1.msra.mxu0 0.0
      %360 = vmatprep.subr.mxu0 0.0
      %361 = vmatpush1.msra.mxu0 0.0
      %362 = vmatprep.subr.mxu0 0.0
      %363 = vmatpush1.msra.mxu0 0.0
      %364 = vmatprep.subr.mxu0 0.0
      %365 = vmatpush1.msra.mxu0 0.0
      %366 = vmatprep.subr.mxu0 0.0
      %367 = vmatpush1.msra.mxu0 0.0
      %368 = vmatprep.subr.mxu0 0.0
      %369 = vmatpush1.msra.mxu0 0.0
      %370 = vmatprep.subr.mxu0 0.0
      %371 = vmatpush1.msra.mxu0 %v312
      %372 = vmatprep.subr.mxu0 0.0
      %373 = vmatpush1.msra.mxu0 %v311
      %374 = vmatprep.subr.mxu0 0.0
      %375 = vmatpush1.msra.mxu0 %v310
      %376 = vmatprep.subr.mxu0 0.0
      %377 = vmatpush1.msra.mxu0 %v309
      %378 = vmatprep.subr.mxu0 0.0
      %379 = vmatpush2.msra.mxu0 0.0
      %380 = vmatprep.subr.mxu0 0.0
      %381 = vmatpush2.msra.mxu0 0.0
      %382 = vmatprep.subr.mxu0 0.0
      %383 = vmatpush2.msra.mxu0 0.0
      %384 = vmatprep.subr.mxu0 0.0
      %385 = vmatpush2.msra.mxu0 0.0
      %386 = vmatprep.subr.mxu0 0.0
      %387 = vmatpush2.msra.mxu0 0.0
      %388 = vmatprep.subr.mxu0 0.0
      %389 = vmatpush2.msra.mxu0 0.0
      %390 = vmatprep.subr.mxu0 0.0
      %391 = vmatpush2.msra.mxu0 0.0
      %392 = vmatprep.subr.mxu0 0.0
      %393 = vmatpush2.msra.mxu0 0.0
      %394 = vmatprep.subr.mxu0 0.0
      %395 = vmatpush2.msra.mxu0 0.0
      %396 = vmatprep.subr.mxu0 0.0
      %397 = vmatpush2.msra.mxu0 0.0
      %398 = vmatprep.subr.mxu0 0.0
      %399 = vmatpush2.msra.mxu0 0.0
      %400 = vmatprep.subr.mxu0 0.0
      %401 = vmatpush2.msra.mxu0 0.0
      %402 = vmatprep.subr.mxu0 0.0
      %403 = vmatpush2.msra.mxu0 0.0
      %404 = vmatprep.subr.mxu0 0.0
      %405 = vmatpush2.msra.mxu0 0.0
      %406 = vmatprep.subr.mxu0 0.0
      %407 = vmatpush2.msra.mxu0 0.0
      %408 = vmatprep.subr.mxu0 0.0
      %409 = vmatpush2.msra.mxu0 0.0
      %410 = vmatprep.mubr.f32.mxu0 0.0
      %411 = vmatmul.mubr.f32.gmra.mxu0 %v314
      %v412 = vpop.f32.mrf.mxu0
      %v413 = vadd.f32 0.0, %v412
      %v414 = vpop.f32.mrf.mxu0
      %415 = vmatprep.mubr.f32.mxu0 0.0
      %416 = vmatmul.mubr.f32.gmra.mxu0 %v316
      %v417 = vpop.f32.mrf.mxu0
      %v418 = vadd.f32 0.0, %v417
      %v419 = vpop.f32.mrf.mxu0
      %420 = vmatprep.mubr.f32.mxu0 0.0
      %421 = vmatmul.mubr.f32.gmra.mxu0 %v318
      %v422 = vpop.f32.mrf.mxu0
      %v423 = vadd.f32 0.0, %v422
      %v424 = vpop.f32.mrf.mxu0
      %425 = vmatprep.mubr.f32.mxu0 0.0
      %426 = vmatmul.mubr.f32.gmra.mxu0 %v320
      %v427 = vpop.f32.mrf.mxu0
      %v428 = vadd.f32 0.0, %v427
      %v429 = vpop.f32.mrf.mxu0
      %430 = vmatprep.mubr.f32.mxu0 0.0
      %431 = vmatmul.mubr.f32.gmra.mxu0 %v322
      %v432 = vpop.f32.mrf.mxu0
      %v433 = vadd.f32 0.0, %v432
      %v434 = vpop.f32.mrf.mxu0
      %435 = vmatprep.mubr.f32.mxu0 0.0
      %436 = vmatmul.mubr.f32.gmra.mxu0 %v324
      %v437 = vpop.f32.mrf.mxu0
      %v438 = vadd.f32 0.0, %v437
      %v439 = vpop.f32.mrf.mxu0
      %440 = vmatprep.mubr.f32.mxu0 0.0
      %441 = vmatmul.mubr.f32.gmra.mxu0 %v326
      %v442 = vpop.f32.mrf.mxu0
      %v443 = vadd.f32 0.0, %v442
      %v444 = vpop.f32.mrf.mxu0
      %445 = vmatprep.mubr.f32.mxu0 0.0
      %446 = vmatmul.mubr.f32.gmra.mxu0 %v328
      %v447 = vpop.f32.mrf.mxu0
      %v448 = vadd.f32 0.0, %v447
      %v449 = vpop.f32.mrf.mxu0
      %450 = vmatprep.mubr.f32.mxu0 0.0
      %451 = vmatmul.mubr.f32.gmra.mxu0 %v330
      %v452 = vpop.f32.mrf.mxu0
      %v453 = vadd.f32 0.0, %v452
      %v454 = vpop.f32.mrf.mxu0
      %455 = vmatprep.mubr.f32.mxu0 0.0
      %456 = vmatmul.mubr.f32.gmra.mxu0 %v332
      %v457 = vpop.f32.mrf.mxu0
      %v458 = vadd.f32 0.0, %v457
      %v459 = vpop.f32.mrf.mxu0
      %460 = vmatprep.mubr.f32.mxu0 0.0
      %461 = vmatmul.mubr.f32.gmra.mxu0 %v334
      %v462 = vpop.f32.mrf.mxu0
      %v463 = vadd.f32 0.0, %v462
      %v464 = vpop.f32.mrf.mxu0
      %465 = vmatprep.mubr.f32.mxu0 0.0
      %466 = vmatmul.mubr.f32.gmra.mxu0 %v336
      %v467 = vpop.f32.mrf.mxu0
      %v468 = vadd.f32 0.0, %v467
      %v469 = vpop.f32.mrf.mxu0
      %470 = vmatprep.mubr.f32.mxu0 0.0
      %471 = vmatmul.mubr.f32.gmra.mxu0 %v338
      %v472 = vpop.f32.mrf.mxu0
      %v473 = vadd.f32 0.0, %v472
      %v474 = vpop.f32.mrf.mxu0
      %475 = vmatprep.mubr.f32.mxu0 0.0
      %476 = vmatmul.mubr.f32.gmra.mxu0 %v340
      %v477 = vpop.f32.mrf.mxu0
      %v478 = vadd.f32 0.0, %v477
      %v479 = vpop.f32.mrf.mxu0
      %480 = vmatprep.mubr.f32.mxu0 0.0
      %481 = vmatmul.mubr.f32.gmra.mxu0 %v342
      %v482 = vpop.f32.mrf.mxu0
      %v483 = vadd.f32 0.0, %v482
      %v484 = vpop.f32.mrf.mxu0
      %485 = vmatprep.mubr.f32.mxu0 0.0
      %486 = vmatmul.mubr.f32.gmra.mxu0 %v344
      %v487 = vpop.f32.mrf.mxu0
      %v488 = vadd.f32 0.0, %v487
      %v489 = vpop.f32.mrf.mxu0
      %490 = vdwg.mxu0
      %v491 = vsel %vm313, %v208, 0
      %v493 = vsel %vm313, %v209, 0
      %v495 = vsel %vm313, %v211, 0
      %v497 = vsel %vm313, %v212, 0
      %v499 = vsel %vm313, %v214, 0
      %v501 = vsel %vm313, %v215, 0
      %v503 = vsel %vm313, %v217, 0
      %v505 = vsel %vm313, %v218, 0
      %v507 = vsel %vm313, %v220, 0
      %v509 = vsel %vm313, %v221, 0
      %v511 = vsel %vm313, %v223, 0
      %v513 = vsel %vm313, %v224, 0
      %v515 = vsel %vm313, %v226, 0
      %v517 = vsel %vm313, %v227, 0
      %v519 = vsel %vm313, %v229, 0
      %v521 = vsel %vm313, %v230, 0
      %523 = vmatprep.subr.mxu0 0.0
      %524 = vmatpush1.msra.mxu0 0.0
      %525 = vmatprep.subr.mxu0 0.0
      %526 = vmatpush1.msra.mxu0 0.0
      %527 = vmatprep.subr.mxu0 0.0
      %528 = vmatpush1.msra.mxu0 0.0
      %529 = vmatprep.subr.mxu0 0.0
      %530 = vmatpush1.msra.mxu0 0.0
      %531 = vmatprep.subr.mxu0 0.0
      %532 = vmatpush1.msra.mxu0 0.0
      %533 = vmatprep.subr.mxu0 0.0
      %534 = vmatpush1.msra.mxu0 0.0
      %535 = vmatprep.subr.mxu0 0.0
      %536 = vmatpush1.msra.mxu0 0.0
      %537 = vmatprep.subr.mxu0 0.0
      %538 = vmatpush1.msra.mxu0 0.0
      %539 = vmatprep.subr.mxu0 0.0
      %540 = vmatpush1.msra.mxu0 0.0
      %541 = vmatprep.subr.mxu0 0.0
      %542 = vmatpush1.msra.mxu0 0.0
      %543 = vmatprep.subr.mxu0 0.0
      %544 = vmatpush1.msra.mxu0 0.0
      %545 = vmatprep.subr.mxu0 0.0
      %546 = vmatpush1.msra.mxu0 0.0
      %547 = vmatprep.subr.mxu0 0.0
      %548 = vmatpush1.msra.mxu0 %v242
      %549 = vmatprep.subr.mxu0 0.0
      %550 = vmatpush1.msra.mxu0 %v241
      %551 = vmatprep.subr.mxu0 0.0
      %552 = vmatpush1.msra.mxu0 %v240
      %553 = vmatprep.subr.mxu0 0.0
      %554 = vmatpush1.msra.mxu0 %v239
      %555 = vmatprep.subr.mxu0 0.0
      %556 = vmatpush2.msra.mxu0 0.0
      %557 = vmatprep.subr.mxu0 0.0
      %558 = vmatpush2.msra.mxu0 0.0
      %559 = vmatprep.subr.mxu0 0.0
      %560 = vmatpush2.msra.mxu0 0.0
      %561 = vmatprep.subr.mxu0 0.0
      %562 = vmatpush2.msra.mxu0 0.0
      %563 = vmatprep.subr.mxu0 0.0
      %564 = vmatpush2.msra.mxu0 0.0
      %565 = vmatprep.subr.mxu0 0.0
      %566 = vmatpush2.msra.mxu0 0.0
      %567 = vmatprep.subr.mxu0 0.0
      %568 = vmatpush2.msra.mxu0 0.0
      %569 = vmatprep.subr.mxu0 0.0
      %570 = vmatpush2.msra.mxu0 0.0
      %571 = vmatprep.subr.mxu0 0.0
      %572 = vmatpush2.msra.mxu0 0.0
      %573 = vmatprep.subr.mxu0 0.0
      %574 = vmatpush2.msra.mxu0 0.0
      %575 = vmatprep.subr.mxu0 0.0
      %576 = vmatpush2.msra.mxu0 0.0
      %577 = vmatprep.subr.mxu0 0.0
      %578 = vmatpush2.msra.mxu0 0.0
      %579 = vmatprep.subr.mxu0 0.0
      %580 = vmatpush2.msra.mxu0 0.0
      %581 = vmatprep.subr.mxu0 0.0
      %582 = vmatpush2.msra.mxu0 0.0
      %583 = vmatprep.subr.mxu0 0.0
      %584 = vmatpush2.msra.mxu0 0.0
      %585 = vmatprep.subr.mxu0 0.0
      %586 = vmatpush2.msra.mxu0 0.0
      %587 = vmatprep.mubr.f32.mxu0 0.0
      %588 = vmatmul.mubr.f32.gmra.mxu0 %v491
      %v589 = vpop.f32.mrf.mxu0
      %v590 = vadd.f32 %v413, %v589
      %v591 = vpop.f32.mrf.mxu0
      %592 = vmatprep.mubr.f32.mxu0 0.0
      %593 = vmatmul.mubr.f32.gmra.mxu0 %v493
      %v594 = vpop.f32.mrf.mxu0
      %v595 = vadd.f32 %v418, %v594
      %v596 = vpop.f32.mrf.mxu0
      %597 = vmatprep.mubr.f32.mxu0 0.0
      %598 = vmatmul.mubr.f32.gmra.mxu0 %v495
      %v599 = vpop.f32.mrf.mxu0
      %v600 = vadd.f32 %v423, %v599
      %v601 = vpop.f32.mrf.mxu0
      %602 = vmatprep.mubr.f32.mxu0 0.0
      %603 = vmatmul.mubr.f32.gmra.mxu0 %v497
      %v604 = vpop.f32.mrf.mxu0
      %v605 = vadd.f32 %v428, %v604
      %v606 = vpop.f32.mrf.mxu0
      %607 = vmatprep.mubr.f32.mxu0 0.0
      %608 = vmatmul.mubr.f32.gmra.mxu0 %v499
      %v609 = vpop.f32.mrf.mxu0
      %v610 = vadd.f32 %v433, %v609
      %v611 = vpop.f32.mrf.mxu0
      %612 = vmatprep.mubr.f32.mxu0 0.0
      %613 = vmatmul.mubr.f32.gmra.mxu0 %v501
      %v614 = vpop.f32.mrf.mxu0
      %v615 = vadd.f32 %v438, %v614
      %v616 = vpop.f32.mrf.mxu0
      %617 = vmatprep.mubr.f32.mxu0 0.0
      %618 = vmatmul.mubr.f32.gmra.mxu0 %v503
      %v619 = vpop.f32.mrf.mxu0
      %v620 = vadd.f32 %v443, %v619
      %v621 = vpop.f32.mrf.mxu0
      %622 = vmatprep.mubr.f32.mxu0 0.0
      %623 = vmatmul.mubr.f32.gmra.mxu0 %v505
      %v624 = vpop.f32.mrf.mxu0
      %v625 = vadd.f32 %v448, %v624
      %v626 = vpop.f32.mrf.mxu0
      %627 = vmatprep.mubr.f32.mxu0 0.0
      %628 = vmatmul.mubr.f32.gmra.mxu0 %v507
      %v629 = vpop.f32.mrf.mxu0
      %v630 = vadd.f32 %v453, %v629
      %v631 = vpop.f32.mrf.mxu0
      %632 = vmatprep.mubr.f32.mxu0 0.0
      %633 = vmatmul.mubr.f32.gmra.mxu0 %v509
      %v634 = vpop.f32.mrf.mxu0
      %v635 = vadd.f32 %v458, %v634
      %v636 = vpop.f32.mrf.mxu0
      %637 = vmatprep.mubr.f32.mxu0 0.0
      %638 = vmatmul.mubr.f32.gmra.mxu0 %v511
      %v639 = vpop.f32.mrf.mxu0
      %v640 = vadd.f32 %v463, %v639
      %v641 = vpop.f32.mrf.mxu0
      %642 = vmatprep.mubr.f32.mxu0 0.0
      %643 = vmatmul.mubr.f32.gmra.mxu0 %v513
      %v644 = vpop.f32.mrf.mxu0
      %v645 = vadd.f32 %v468, %v644
      %v646 = vpop.f32.mrf.mxu0
      %647 = vmatprep.mubr.f32.mxu0 0.0
      %648 = vmatmul.mubr.f32.gmra.mxu0 %v515
      %v649 = vpop.f32.mrf.mxu0
      %v650 = vadd.f32 %v473, %v649
      %v651 = vpop.f32.mrf.mxu0
      %652 = vmatprep.mubr.f32.mxu0 0.0
      %653 = vmatmul.mubr.f32.gmra.mxu0 %v517
      %v654 = vpop.f32.mrf.mxu0
      %v655 = vadd.f32 %v478, %v654
      %v656 = vpop.f32.mrf.mxu0
      %657 = vmatprep.mubr.f32.mxu0 0.0
      %658 = vmatmul.mubr.f32.gmra.mxu0 %v519
      %v659 = vpop.f32.mrf.mxu0
      %v660 = vadd.f32 %v483, %v659
      %v661 = vpop.f32.mrf.mxu0
      %662 = vmatprep.mubr.f32.mxu0 0.0
      %663 = vmatmul.mubr.f32.gmra.mxu0 %v521
      %v664 = vpop.f32.mrf.mxu0
      %v665 = vadd.f32 %v488, %v664
      %v666 = vpop.f32.mrf.mxu0
      %667 = vdwg.mxu0
      %vm668 = vcmask 1045504
      %v669 = vrot.slane %v208, 2
      %v670 = vrot.slane %v209, 2
      %v671 = vsel %vm668, %v669, %v670
      %v672 = vrot.slane %v210, 2
      %v673 = vsel %vm668, %v670, %v672
      %v674 = vrot.slane %v211, 2
      %v675 = vrot.slane %v212, 2
      %v676 = vsel %vm668, %v674, %v675
      %v677 = vrot.slane %v213, 2
      %v678 = vsel %vm668, %v675, %v677
      %v679 = vrot.slane %v214, 2
      %v680 = vrot.slane %v215, 2
      %v681 = vsel %vm668, %v679, %v680
      %v682 = vrot.slane %v216, 2
      %v683 = vsel %vm668, %v680, %v682
      %v684 = vrot.slane %v217, 2
      %v685 = vrot.slane %v218, 2
      %v686 = vsel %vm668, %v684, %v685
      %v687 = vrot.slane %v219, 2
      %v688 = vsel %vm668, %v685, %v687
      %v689 = vrot.slane %v220, 2
      %v690 = vrot.slane %v221, 2
      %v691 = vsel %vm668, %v689, %v690
      %v692 = vrot.slane %v222, 2
      %v693 = vsel %vm668, %v690, %v692
      %v694 = vrot.slane %v223, 2
      %v695 = vrot.slane %v224, 2
      %v696 = vsel %vm668, %v694, %v695
      %v697 = vrot.slane %v225, 2
      %v698 = vsel %vm668, %v695, %v697
      %v699 = vrot.slane %v226, 2
      %v700 = vrot.slane %v227, 2
      %v701 = vsel %vm668, %v699, %v700
      %v702 = vrot.slane %v228, 2
      %v703 = vsel %vm668, %v700, %v702
      %v704 = vrot.slane %v229, 2
      %v705 = vrot.slane %v230, 2
      %v706 = vsel %vm668, %v704, %v705
      %v707 = vrot.slane %v231, 2
      %v708 = vsel %vm668, %v705, %v707
      %s709 = scalar_lea.vmem %s1, 64
      %v710 = vld [vmem:[%s709] sm:$0xff]
      %v711 = vld [vmem:[%s709 + $0x8] sm:$0xff]
      %v712 = vld [vmem:[%s709 + $0x10] sm:$0xff]
      %v713 = vld [vmem:[%s709 + $0x18] sm:$0xff]
      %v714 = vsel %vm313, %v671, 0
      %v716 = vsel %vm313, %v673, 0
      %v718 = vsel %vm313, %v676, 0
      %v720 = vsel %vm313, %v678, 0
      %v722 = vsel %vm313, %v681, 0
      %v724 = vsel %vm313, %v683, 0
      %v726 = vsel %vm313, %v686, 0
      %v728 = vsel %vm313, %v688, 0
      %v730 = vsel %vm313, %v691, 0
      %v732 = vsel %vm313, %v693, 0
      %v734 = vsel %vm313, %v696, 0
      %v736 = vsel %vm313, %v698, 0
      %v738 = vsel %vm313, %v701, 0
      %v740 = vsel %vm313, %v703, 0
      %v742 = vsel %vm313, %v706, 0
      %v744 = vsel %vm313, %v708, 0
      %746 = vmatprep.subr.mxu0 0.0
      %747 = vmatpush1.msra.mxu0 0.0
      %748 = vmatprep.subr.mxu0 0.0
      %749 = vmatpush1.msra.mxu0 0.0
      %750 = vmatprep.subr.mxu0 0.0
      %751 = vmatpush1.msra.mxu0 0.0
      %752 = vmatprep.subr.mxu0 0.0
      %753 = vmatpush1.msra.mxu0 0.0
      %754 = vmatprep.subr.mxu0 0.0
      %755 = vmatpush1.msra.mxu0 0.0
      %756 = vmatprep.subr.mxu0 0.0
      %757 = vmatpush1.msra.mxu0 0.0
      %758 = vmatprep.subr.mxu0 0.0
      %759 = vmatpush1.msra.mxu0 0.0
      %760 = vmatprep.subr.mxu0 0.0
      %761 = vmatpush1.msra.mxu0 0.0
      %762 = vmatprep.subr.mxu0 0.0
      %763 = vmatpush1.msra.mxu0 0.0
      %764 = vmatprep.subr.mxu0 0.0
      %765 = vmatpush1.msra.mxu0 0.0
      %766 = vmatprep.subr.mxu0 0.0
      %767 = vmatpush1.msra.mxu0 0.0
      %768 = vmatprep.subr.mxu0 0.0
      %769 = vmatpush1.msra.mxu0 0.0
      %770 = vmatprep.subr.mxu0 0.0
      %771 = vmatpush1.msra.mxu0 %v713
      %772 = vmatprep.subr.mxu0 0.0
      %773 = vmatpush1.msra.mxu0 %v712
      %774 = vmatprep.subr.mxu0 0.0
      %775 = vmatpush1.msra.mxu0 %v711
      %776 = vmatprep.subr.mxu0 0.0
      %777 = vmatpush1.msra.mxu0 %v710
      %778 = vmatprep.subr.mxu0 0.0
      %779 = vmatpush2.msra.mxu0 0.0
      %780 = vmatprep.subr.mxu0 0.0
      %781 = vmatpush2.msra.mxu0 0.0
      %782 = vmatprep.subr.mxu0 0.0
      %783 = vmatpush2.msra.mxu0 0.0
      %784 = vmatprep.subr.mxu0 0.0
      %785 = vmatpush2.msra.mxu0 0.0
      %786 = vmatprep.subr.mxu0 0.0
      %787 = vmatpush2.msra.mxu0 0.0
      %788 = vmatprep.subr.mxu0 0.0
      %789 = vmatpush2.msra.mxu0 0.0
      %790 = vmatprep.subr.mxu0 0.0
      %791 = vmatpush2.msra.mxu0 0.0
      %792 = vmatprep.subr.mxu0 0.0
      %793 = vmatpush2.msra.mxu0 0.0
      %794 = vmatprep.subr.mxu0 0.0
      %795 = vmatpush2.msra.mxu0 0.0
      %796 = vmatprep.subr.mxu0 0.0
      %797 = vmatpush2.msra.mxu0 0.0
      %798 = vmatprep.subr.mxu0 0.0
      %799 = vmatpush2.msra.mxu0 0.0
      %800 = vmatprep.subr.mxu0 0.0
      %801 = vmatpush2.msra.mxu0 0.0
      %802 = vmatprep.subr.mxu0 0.0
      %803 = vmatpush2.msra.mxu0 0.0
      %804 = vmatprep.subr.mxu0 0.0
      %805 = vmatpush2.msra.mxu0 0.0
      %806 = vmatprep.subr.mxu0 0.0
      %807 = vmatpush2.msra.mxu0 0.0
      %808 = vmatprep.subr.mxu0 0.0
      %809 = vmatpush2.msra.mxu0 0.0
      %810 = vmatprep.mubr.f32.mxu0 0.0
      %811 = vmatmul.mubr.f32.gmra.mxu0 %v714
      %v812 = vpop.f32.mrf.mxu0
      %v813 = vadd.f32 0.0, %v812
      %v814 = vpop.f32.mrf.mxu0
      %815 = vmatprep.mubr.f32.mxu0 0.0
      %816 = vmatmul.mubr.f32.gmra.mxu0 %v716
      %v817 = vpop.f32.mrf.mxu0
      %v818 = vadd.f32 0.0, %v817
      %v819 = vpop.f32.mrf.mxu0
      %820 = vmatprep.mubr.f32.mxu0 0.0
      %821 = vmatmul.mubr.f32.gmra.mxu0 %v718
      %v822 = vpop.f32.mrf.mxu0
      %v823 = vadd.f32 0.0, %v822
      %v824 = vpop.f32.mrf.mxu0
      %825 = vmatprep.mubr.f32.mxu0 0.0
      %826 = vmatmul.mubr.f32.gmra.mxu0 %v720
      %v827 = vpop.f32.mrf.mxu0
      %v828 = vadd.f32 0.0, %v827
      %v829 = vpop.f32.mrf.mxu0
      %830 = vmatprep.mubr.f32.mxu0 0.0
      %831 = vmatmul.mubr.f32.gmra.mxu0 %v722
      %v832 = vpop.f32.mrf.mxu0
      %v833 = vadd.f32 0.0, %v832
      %v834 = vpop.f32.mrf.mxu0
      %835 = vmatprep.mubr.f32.mxu0 0.0
      %836 = vmatmul.mubr.f32.gmra.mxu0 %v724
      %v837 = vpop.f32.mrf.mxu0
      %v838 = vadd.f32 0.0, %v837
      %v839 = vpop.f32.mrf.mxu0
      %840 = vmatprep.mubr.f32.mxu0 0.0
      %841 = vmatmul.mubr.f32.gmra.mxu0 %v726
      %v842 = vpop.f32.mrf.mxu0
      %v843 = vadd.f32 0.0, %v842
      %v844 = vpop.f32.mrf.mxu0
      %845 = vmatprep.mubr.f32.mxu0 0.0
      %846 = vmatmul.mubr.f32.gmra.mxu0 %v728
      %v847 = vpop.f32.mrf.mxu0
      %v848 = vadd.f32 0.0, %v847
      %v849 = vpop.f32.mrf.mxu0
      %850 = vmatprep.mubr.f32.mxu0 0.0
      %851 = vmatmul.mubr.f32.gmra.mxu0 %v730
      %v852 = vpop.f32.mrf.mxu0
      %v853 = vadd.f32 0.0, %v852
      %v854 = vpop.f32.mrf.mxu0
      %855 = vmatprep.mubr.f32.mxu0 0.0
      %856 = vmatmul.mubr.f32.gmra.mxu0 %v732
      %v857 = vpop.f32.mrf.mxu0
      %v858 = vadd.f32 0.0, %v857
      %v859 = vpop.f32.mrf.mxu0
      %860 = vmatprep.mubr.f32.mxu0 0.0
      %861 = vmatmul.mubr.f32.gmra.mxu0 %v734
      %v862 = vpop.f32.mrf.mxu0
      %v863 = vadd.f32 0.0, %v862
      %v864 = vpop.f32.mrf.mxu0
      %865 = vmatprep.mubr.f32.mxu0 0.0
      %866 = vmatmul.mubr.f32.gmra.mxu0 %v736
      %v867 = vpop.f32.mrf.mxu0
      %v868 = vadd.f32 0.0, %v867
      %v869 = vpop.f32.mrf.mxu0
      %870 = vmatprep.mubr.f32.mxu0 0.0
      %871 = vmatmul.mubr.f32.gmra.mxu0 %v738
      %v872 = vpop.f32.mrf.mxu0
      %v873 = vadd.f32 0.0, %v872
      %v874 = vpop.f32.mrf.mxu0
      %875 = vmatprep.mubr.f32.mxu0 0.0
      %876 = vmatmul.mubr.f32.gmra.mxu0 %v740
      %v877 = vpop.f32.mrf.mxu0
      %v878 = vadd.f32 0.0, %v877
      %v879 = vpop.f32.mrf.mxu0
      %880 = vmatprep.mubr.f32.mxu0 0.0
      %881 = vmatmul.mubr.f32.gmra.mxu0 %v742
      %v882 = vpop.f32.mrf.mxu0
      %v883 = vadd.f32 0.0, %v882
      %v884 = vpop.f32.mrf.mxu0
      %885 = vmatprep.mubr.f32.mxu0 0.0
      %886 = vmatmul.mubr.f32.gmra.mxu0 %v744
      %v887 = vpop.f32.mrf.mxu0
      %v888 = vadd.f32 0.0, %v887
      %v889 = vpop.f32.mrf.mxu0
      %890 = vdwg.mxu0
      %v891 = vadd.f32 %v590, %v813
      %v892 = vadd.f32 %v595, %v818
      %v893 = vadd.f32 %v600, %v823
      %v894 = vadd.f32 %v605, %v828
      %v895 = vadd.f32 %v610, %v833
      %v896 = vadd.f32 %v615, %v838
      %v897 = vadd.f32 %v620, %v843
      %v898 = vadd.f32 %v625, %v848
      %v899 = vadd.f32 %v630, %v853
      %v900 = vadd.f32 %v635, %v858
      %v901 = vadd.f32 %v640, %v863
      %v902 = vadd.f32 %v645, %v868
      %v903 = vadd.f32 %v650, %v873
      %v904 = vadd.f32 %v655, %v878
      %v905 = vadd.f32 %v660, %v883
      %v906 = vadd.f32 %v665, %v888
      %s907 = scalar_lea.vmem %s1, 96
      %v908 = vld [vmem:[%s907] sm:$0xff]
      %v909 = vld [vmem:[%s907 + $0x8] sm:$0xff]
      %v910 = vld [vmem:[%s907 + $0x10] sm:$0xff]
      %v911 = vld [vmem:[%s907 + $0x18] sm:$0xff]
      %v913 = vsel %vm313, %v232, 0
      %v916 = vsel %vm313, %v233, 0
      %918 = vmatprep.subr.mxu0 0.0
      %919 = vmatpush1.msra.mxu0 0.0
      %920 = vmatprep.subr.mxu0 0.0
      %921 = vmatpush1.msra.mxu0 0.0
      %922 = vmatprep.subr.mxu0 0.0
      %923 = vmatpush1.msra.mxu0 0.0
      %924 = vmatprep.subr.mxu0 0.0
      %925 = vmatpush1.msra.mxu0 0.0
      %926 = vmatprep.subr.mxu0 0.0
      %927 = vmatpush1.msra.mxu0 0.0
      %928 = vmatprep.subr.mxu0 0.0
      %929 = vmatpush1.msra.mxu0 0.0
      %930 = vmatprep.subr.mxu0 0.0
      %931 = vmatpush1.msra.mxu0 0.0
      %932 = vmatprep.subr.mxu0 0.0
      %933 = vmatpush1.msra.mxu0 0.0
      %934 = vmatprep.subr.mxu0 0.0
      %935 = vmatpush1.msra.mxu0 0.0
      %936 = vmatprep.subr.mxu0 0.0
      %937 = vmatpush1.msra.mxu0 0.0
      %938 = vmatprep.subr.mxu0 0.0
      %939 = vmatpush1.msra.mxu0 0.0
      %940 = vmatprep.subr.mxu0 0.0
      %941 = vmatpush1.msra.mxu0 0.0
      %942 = vmatprep.subr.mxu0 0.0
      %943 = vmatpush1.msra.mxu0 %v911
      %944 = vmatprep.subr.mxu0 0.0
      %945 = vmatpush1.msra.mxu0 %v910
      %946 = vmatprep.subr.mxu0 0.0
      %947 = vmatpush1.msra.mxu0 %v909
      %948 = vmatprep.subr.mxu0 0.0
      %949 = vmatpush1.msra.mxu0 %v908
      %950 = vmatprep.subr.mxu0 0.0
      %951 = vmatpush2.msra.mxu0 0.0
      %952 = vmatprep.subr.mxu0 0.0
      %953 = vmatpush2.msra.mxu0 0.0
      %954 = vmatprep.subr.mxu0 0.0
      %955 = vmatpush2.msra.mxu0 0.0
      %956 = vmatprep.subr.mxu0 0.0
      %957 = vmatpush2.msra.mxu0 0.0
      %958 = vmatprep.subr.mxu0 0.0
      %959 = vmatpush2.msra.mxu0 0.0
      %960 = vmatprep.subr.mxu0 0.0
      %961 = vmatpush2.msra.mxu0 0.0
      %962 = vmatprep.subr.mxu0 0.0
      %963 = vmatpush2.msra.mxu0 0.0
      %964 = vmatprep.subr.mxu0 0.0
      %965 = vmatpush2.msra.mxu0 0.0
      %966 = vmatprep.subr.mxu0 0.0
      %967 = vmatpush2.msra.mxu0 0.0
      %968 = vmatprep.subr.mxu0 0.0
      %969 = vmatpush2.msra.mxu0 0.0
      %970 = vmatprep.subr.mxu0 0.0
      %971 = vmatpush2.msra.mxu0 0.0
      %972 = vmatprep.subr.mxu0 0.0
      %973 = vmatpush2.msra.mxu0 0.0
      %974 = vmatprep.subr.mxu0 0.0
      %975 = vmatpush2.msra.mxu0 0.0
      %976 = vmatprep.subr.mxu0 0.0
      %977 = vmatpush2.msra.mxu0 0.0
      %978 = vmatprep.subr.mxu0 0.0
      %979 = vmatpush2.msra.mxu0 0.0
      %980 = vmatprep.subr.mxu0 0.0
      %981 = vmatpush2.msra.mxu0 0.0
      %982 = vmatprep.mubr.f32.mxu0 0.0
      %983 = vmatmul.mubr.f32.gmra.mxu0 %v495
      %v984 = vpop.f32.mrf.mxu0
      %v985 = vadd.f32 0.0, %v984
      %v986 = vpop.f32.mrf.mxu0
      %987 = vmatprep.mubr.f32.mxu0 0.0
      %988 = vmatmul.mubr.f32.gmra.mxu0 %v497
      %v989 = vpop.f32.mrf.mxu0
      %v990 = vadd.f32 0.0, %v989
      %v991 = vpop.f32.mrf.mxu0
      %992 = vmatprep.mubr.f32.mxu0 0.0
      %993 = vmatmul.mubr.f32.gmra.mxu0 %v499
      %v994 = vpop.f32.mrf.mxu0
      %v995 = vadd.f32 0.0, %v994
      %v996 = vpop.f32.mrf.mxu0
      %997 = vmatprep.mubr.f32.mxu0 0.0
      %998 = vmatmul.mubr.f32.gmra.mxu0 %v501
      %v999 = vpop.f32.mrf.mxu0
      %v1000 = vadd.f32 0.0, %v999
      %v1001 = vpop.f32.mrf.mxu0
      %1002 = vmatprep.mubr.f32.mxu0 0.0
      %1003 = vmatmul.mubr.f32.gmra.mxu0 %v503
      %v1004 = vpop.f32.mrf.mxu0
      %v1005 = vadd.f32 0.0, %v1004
      %v1006 = vpop.f32.mrf.mxu0
      %1007 = vmatprep.mubr.f32.mxu0 0.0
      %1008 = vmatmul.mubr.f32.gmra.mxu0 %v505
      %v1009 = vpop.f32.mrf.mxu0
      %v1010 = vadd.f32 0.0, %v1009
      %v1011 = vpop.f32.mrf.mxu0
      %1012 = vmatprep.mubr.f32.mxu0 0.0
      %1013 = vmatmul.mubr.f32.gmra.mxu0 %v507
      %v1014 = vpop.f32.mrf.mxu0
      %v1015 = vadd.f32 0.0, %v1014
      %v1016 = vpop.f32.mrf.mxu0
      %1017 = vmatprep.mubr.f32.mxu0 0.0
      %1018 = vmatmul.mubr.f32.gmra.mxu0 %v509
      %v1019 = vpop.f32.mrf.mxu0
      %v1020 = vadd.f32 0.0, %v1019
      %v1021 = vpop.f32.mrf.mxu0
      %1022 = vmatprep.mubr.f32.mxu0 0.0
      %1023 = vmatmul.mubr.f32.gmra.mxu0 %v511
      %v1024 = vpop.f32.mrf.mxu0
      %v1025 = vadd.f32 0.0, %v1024
      %v1026 = vpop.f32.mrf.mxu0
      %1027 = vmatprep.mubr.f32.mxu0 0.0
      %1028 = vmatmul.mubr.f32.gmra.mxu0 %v513
      %v1029 = vpop.f32.mrf.mxu0
      %v1030 = vadd.f32 0.0, %v1029
      %v1031 = vpop.f32.mrf.mxu0
      %1032 = vmatprep.mubr.f32.mxu0 0.0
      %1033 = vmatmul.mubr.f32.gmra.mxu0 %v515
      %v1034 = vpop.f32.mrf.mxu0
      %v1035 = vadd.f32 0.0, %v1034
      %v1036 = vpop.f32.mrf.mxu0
      %1037 = vmatprep.mubr.f32.mxu0 0.0
      %1038 = vmatmul.mubr.f32.gmra.mxu0 %v517
      %v1039 = vpop.f32.mrf.mxu0
      %v1040 = vadd.f32 0.0, %v1039
      %v1041 = vpop.f32.mrf.mxu0
      %1042 = vmatprep.mubr.f32.mxu0 0.0
      %1043 = vmatmul.mubr.f32.gmra.mxu0 %v519
      %v1044 = vpop.f32.mrf.mxu0
      %v1045 = vadd.f32 0.0, %v1044
      %v1046 = vpop.f32.mrf.mxu0
      %1047 = vmatprep.mubr.f32.mxu0 0.0
      %1048 = vmatmul.mubr.f32.gmra.mxu0 %v521
      %v1049 = vpop.f32.mrf.mxu0
      %v1050 = vadd.f32 0.0, %v1049
      %v1051 = vpop.f32.mrf.mxu0
      %1052 = vmatprep.mubr.f32.mxu0 0.0
      %1053 = vmatmul.mubr.f32.gmra.mxu0 %v913
      %v1054 = vpop.f32.mrf.mxu0
      %v1055 = vadd.f32 0.0, %v1054
      %v1056 = vpop.f32.mrf.mxu0
      %1057 = vmatprep.mubr.f32.mxu0 0.0
      %1058 = vmatmul.mubr.f32.gmra.mxu0 %v916
      %v1059 = vpop.f32.mrf.mxu0
      %v1060 = vadd.f32 0.0, %v1059
      %v1061 = vpop.f32.mrf.mxu0
      %1062 = vdwg.mxu0
      %v1063 = vadd.f32 %v891, %v985
      %v1064 = vadd.f32 %v892, %v990
      %v1065 = vadd.f32 %v893, %v995
      %v1066 = vadd.f32 %v894, %v1000
      %v1067 = vadd.f32 %v895, %v1005
      %v1068 = vadd.f32 %v896, %v1010
      %v1069 = vadd.f32 %v897, %v1015
      %v1070 = vadd.f32 %v898, %v1020
      %v1071 = vadd.f32 %v899, %v1025
      %v1072 = vadd.f32 %v900, %v1030
      %v1073 = vadd.f32 %v901, %v1035
      %v1074 = vadd.f32 %v902, %v1040
      %v1075 = vadd.f32 %v903, %v1045
      %v1076 = vadd.f32 %v904, %v1050
      %v1077 = vadd.f32 %v905, %v1055
      %v1078 = vadd.f32 %v906, %v1060
      %v1080 = vrot.slane %v232, 1
      %v1081 = vrot.slane %v233, 1
      %v1082 = vsel %vm267, %v1080, %v1081
      %v1083 = vrot.slane %v234, 1
      %v1084 = vsel %vm267, %v1081, %v1083
      %s1085 = scalar_lea.vmem %s1, 128
      %v1086 = vld [vmem:[%s1085] sm:$0xff]
      %v1087 = vld [vmem:[%s1085 + $0x8] sm:$0xff]
      %v1088 = vld [vmem:[%s1085 + $0x10] sm:$0xff]
      %v1089 = vld [vmem:[%s1085 + $0x18] sm:$0xff]
      %v1090 = vsel %vm313, %v1082, 0
      %v1092 = vsel %vm313, %v1084, 0
      %1094 = vmatprep.subr.mxu0 0.0
      %1095 = vmatpush1.msra.mxu0 0.0
      %1096 = vmatprep.subr.mxu0 0.0
      %1097 = vmatpush1.msra.mxu0 0.0
      %1098 = vmatprep.subr.mxu0 0.0
      %1099 = vmatpush1.msra.mxu0 0.0
      %1100 = vmatprep.subr.mxu0 0.0
      %1101 = vmatpush1.msra.mxu0 0.0
      %1102 = vmatprep.subr.mxu0 0.0
      %1103 = vmatpush1.msra.mxu0 0.0
      %1104 = vmatprep.subr.mxu0 0.0
      %1105 = vmatpush1.msra.mxu0 0.0
      %1106 = vmatprep.subr.mxu0 0.0
      %1107 = vmatpush1.msra.mxu0 0.0
      %1108 = vmatprep.subr.mxu0 0.0
      %1109 = vmatpush1.msra.mxu0 0.0
      %1110 = vmatprep.subr.mxu0 0.0
      %1111 = vmatpush1.msra.mxu0 0.0
      %1112 = vmatprep.subr.mxu0 0.0
      %1113 = vmatpush1.msra.mxu0 0.0
      %1114 = vmatprep.subr.mxu0 0.0
      %1115 = vmatpush1.msra.mxu0 0.0
      %1116 = vmatprep.subr.mxu0 0.0
      %1117 = vmatpush1.msra.mxu0 0.0
      %1118 = vmatprep.subr.mxu0 0.0
      %1119 = vmatpush1.msra.mxu0 %v1089
      %1120 = vmatprep.subr.mxu0 0.0
      %1121 = vmatpush1.msra.mxu0 %v1088
      %1122 = vmatprep.subr.mxu0 0.0
      %1123 = vmatpush1.msra.mxu0 %v1087
      %1124 = vmatprep.subr.mxu0 0.0
      %1125 = vmatpush1.msra.mxu0 %v1086
      %1126 = vmatprep.subr.mxu0 0.0
      %1127 = vmatpush2.msra.mxu0 0.0
      %1128 = vmatprep.subr.mxu0 0.0
      %1129 = vmatpush2.msra.mxu0 0.0
      %1130 = vmatprep.subr.mxu0 0.0
      %1131 = vmatpush2.msra.mxu0 0.0
      %1132 = vmatprep.subr.mxu0 0.0
      %1133 = vmatpush2.msra.mxu0 0.0
      %1134 = vmatprep.subr.mxu0 0.0
      %1135 = vmatpush2.msra.mxu0 0.0
      %1136 = vmatprep.subr.mxu0 0.0
      %1137 = vmatpush2.msra.mxu0 0.0
      %1138 = vmatprep.subr.mxu0 0.0
      %1139 = vmatpush2.msra.mxu0 0.0
      %1140 = vmatprep.subr.mxu0 0.0
      %1141 = vmatpush2.msra.mxu0 0.0
      %1142 = vmatprep.subr.mxu0 0.0
      %1143 = vmatpush2.msra.mxu0 0.0
      %1144 = vmatprep.subr.mxu0 0.0
      %1145 = vmatpush2.msra.mxu0 0.0
      %1146 = vmatprep.subr.mxu0 0.0
      %1147 = vmatpush2.msra.mxu0 0.0
      %1148 = vmatprep.subr.mxu0 0.0
      %1149 = vmatpush2.msra.mxu0 0.0
      %1150 = vmatprep.subr.mxu0 0.0
      %1151 = vmatpush2.msra.mxu0 0.0
      %1152 = vmatprep.subr.mxu0 0.0
      %1153 = vmatpush2.msra.mxu0 0.0
      %1154 = vmatprep.subr.mxu0 0.0
      %1155 = vmatpush2.msra.mxu0 0.0
      %1156 = vmatprep.subr.mxu0 0.0
      %1157 = vmatpush2.msra.mxu0 0.0
      %1158 = vmatprep.mubr.f32.mxu0 0.0
      %1159 = vmatmul.mubr.f32.gmra.mxu0 %v318
      %v1160 = vpop.f32.mrf.mxu0
      %v1161 = vadd.f32 0.0, %v1160
      %v1162 = vpop.f32.mrf.mxu0
      %1163 = vmatprep.mubr.f32.mxu0 0.0
      %1164 = vmatmul.mubr.f32.gmra.mxu0 %v320
      %v1165 = vpop.f32.mrf.mxu0
      %v1166 = vadd.f32 0.0, %v1165
      %v1167 = vpop.f32.mrf.mxu0
      %1168 = vmatprep.mubr.f32.mxu0 0.0
      %1169 = vmatmul.mubr.f32.gmra.mxu0 %v322
      %v1170 = vpop.f32.mrf.mxu0
      %v1171 = vadd.f32 0.0, %v1170
      %v1172 = vpop.f32.mrf.mxu0
      %1173 = vmatprep.mubr.f32.mxu0 0.0
      %1174 = vmatmul.mubr.f32.gmra.mxu0 %v324
      %v1175 = vpop.f32.mrf.mxu0
      %v1176 = vadd.f32 0.0, %v1175
      %v1177 = vpop.f32.mrf.mxu0
      %1178 = vmatprep.mubr.f32.mxu0 0.0
      %1179 = vmatmul.mubr.f32.gmra.mxu0 %v326
      %v1180 = vpop.f32.mrf.mxu0
      %v1181 = vadd.f32 0.0, %v1180
      %v1182 = vpop.f32.mrf.mxu0
      %1183 = vmatprep.mubr.f32.mxu0 0.0
      %1184 = vmatmul.mubr.f32.gmra.mxu0 %v328
      %v1185 = vpop.f32.mrf.mxu0
      %v1186 = vadd.f32 0.0, %v1185
      %v1187 = vpop.f32.mrf.mxu0
      %1188 = vmatprep.mubr.f32.mxu0 0.0
      %1189 = vmatmul.mubr.f32.gmra.mxu0 %v330
      %v1190 = vpop.f32.mrf.mxu0
      %v1191 = vadd.f32 0.0, %v1190
      %v1192 = vpop.f32.mrf.mxu0
      %1193 = vmatprep.mubr.f32.mxu0 0.0
      %1194 = vmatmul.mubr.f32.gmra.mxu0 %v332
      %v1195 = vpop.f32.mrf.mxu0
      %v1196 = vadd.f32 0.0, %v1195
      %v1197 = vpop.f32.mrf.mxu0
      %1198 = vmatprep.mubr.f32.mxu0 0.0
      %1199 = vmatmul.mubr.f32.gmra.mxu0 %v334
      %v1200 = vpop.f32.mrf.mxu0
      %v1201 = vadd.f32 0.0, %v1200
      %v1202 = vpop.f32.mrf.mxu0
      %1203 = vmatprep.mubr.f32.mxu0 0.0
      %1204 = vmatmul.mubr.f32.gmra.mxu0 %v336
      %v1205 = vpop.f32.mrf.mxu0
      %v1206 = vadd.f32 0.0, %v1205
      %v1207 = vpop.f32.mrf.mxu0
      %1208 = vmatprep.mubr.f32.mxu0 0.0
      %1209 = vmatmul.mubr.f32.gmra.mxu0 %v338
      %v1210 = vpop.f32.mrf.mxu0
      %v1211 = vadd.f32 0.0, %v1210
      %v1212 = vpop.f32.mrf.mxu0
      %1213 = vmatprep.mubr.f32.mxu0 0.0
      %1214 = vmatmul.mubr.f32.gmra.mxu0 %v340
      %v1215 = vpop.f32.mrf.mxu0
      %v1216 = vadd.f32 0.0, %v1215
      %v1217 = vpop.f32.mrf.mxu0
      %1218 = vmatprep.mubr.f32.mxu0 0.0
      %1219 = vmatmul.mubr.f32.gmra.mxu0 %v342
      %v1220 = vpop.f32.mrf.mxu0
      %v1221 = vadd.f32 0.0, %v1220
      %v1222 = vpop.f32.mrf.mxu0
      %1223 = vmatprep.mubr.f32.mxu0 0.0
      %1224 = vmatmul.mubr.f32.gmra.mxu0 %v344
      %v1225 = vpop.f32.mrf.mxu0
      %v1226 = vadd.f32 0.0, %v1225
      %v1227 = vpop.f32.mrf.mxu0
      %1228 = vmatprep.mubr.f32.mxu0 0.0
      %1229 = vmatmul.mubr.f32.gmra.mxu0 %v1090
      %v1230 = vpop.f32.mrf.mxu0
      %v1231 = vadd.f32 0.0, %v1230
      %v1232 = vpop.f32.mrf.mxu0
      %1233 = vmatprep.mubr.f32.mxu0 0.0
      %1234 = vmatmul.mubr.f32.gmra.mxu0 %v1092
      %v1235 = vpop.f32.mrf.mxu0
      %v1236 = vadd.f32 0.0, %v1235
      %v1237 = vpop.f32.mrf.mxu0
      %1238 = vdwg.mxu0
      %v1239 = vadd.f32 %v1063, %v1161
      %v1240 = vadd.f32 %v1064, %v1166
      %v1241 = vadd.f32 %v1065, %v1171
      %v1242 = vadd.f32 %v1066, %v1176
      %v1243 = vadd.f32 %v1067, %v1181
      %v1244 = vadd.f32 %v1068, %v1186
      %v1245 = vadd.f32 %v1069, %v1191
      %v1246 = vadd.f32 %v1070, %v1196
      %v1247 = vadd.f32 %v1071, %v1201
      %v1248 = vadd.f32 %v1072, %v1206
      %v1249 = vadd.f32 %v1073, %v1211
      %v1250 = vadd.f32 %v1074, %v1216
      %v1251 = vadd.f32 %v1075, %v1221
      %v1252 = vadd.f32 %v1076, %v1226
      %v1253 = vadd.f32 %v1077, %v1231
      %v1254 = vadd.f32 %v1078, %v1236
      %v1255 = vrot.slane %v232, 2
      %v1256 = vrot.slane %v233, 2
      %v1257 = vsel %vm668, %v1255, %v1256
      %v1258 = vrot.slane %v234, 2
      %v1259 = vsel %vm668, %v1256, %v1258
      %s1260 = scalar_lea.vmem %s1, 160
      %v1261 = vld [vmem:[%s1260] sm:$0xff]
      %v1262 = vld [vmem:[%s1260 + $0x8] sm:$0xff]
      %v1263 = vld [vmem:[%s1260 + $0x10] sm:$0xff]
      %v1264 = vld [vmem:[%s1260 + $0x18] sm:$0xff]
      %v1265 = vsel %vm313, %v1257, 0
      %v1267 = vsel %vm313, %v1259, 0
      %1269 = vmatprep.subr.mxu0 0.0
      %1270 = vmatpush1.msra.mxu0 0.0
      %1271 = vmatprep.subr.mxu0 0.0
      %1272 = vmatpush1.msra.mxu0 0.0
      %1273 = vmatprep.subr.mxu0 0.0
      %1274 = vmatpush1.msra.mxu0 0.0
      %1275 = vmatprep.subr.mxu0 0.0
      %1276 = vmatpush1.msra.mxu0 0.0
      %1277 = vmatprep.subr.mxu0 0.0
      %1278 = vmatpush1.msra.mxu0 0.0
      %1279 = vmatprep.subr.mxu0 0.0
      %1280 = vmatpush1.msra.mxu0 0.0
      %1281 = vmatprep.subr.mxu0 0.0
      %1282 = vmatpush1.msra.mxu0 0.0
      %1283 = vmatprep.subr.mxu0 0.0
      %1284 = vmatpush1.msra.mxu0 0.0
      %1285 = vmatprep.subr.mxu0 0.0
      %1286 = vmatpush1.msra.mxu0 0.0
      %1287 = vmatprep.subr.mxu0 0.0
      %1288 = vmatpush1.msra.mxu0 0.0
      %1289 = vmatprep.subr.mxu0 0.0
      %1290 = vmatpush1.msra.mxu0 0.0
      %1291 = vmatprep.subr.mxu0 0.0
      %1292 = vmatpush1.msra.mxu0 0.0
      %1293 = vmatprep.subr.mxu0 0.0
      %1294 = vmatpush1.msra.mxu0 %v1264
      %1295 = vmatprep.subr.mxu0 0.0
      %1296 = vmatpush1.msra.mxu0 %v1263
      %1297 = vmatprep.subr.mxu0 0.0
      %1298 = vmatpush1.msra.mxu0 %v1262
      %1299 = vmatprep.subr.mxu0 0.0
      %1300 = vmatpush1.msra.mxu0 %v1261
      %1301 = vmatprep.subr.mxu0 0.0
      %1302 = vmatpush2.msra.mxu0 0.0
      %1303 = vmatprep.subr.mxu0 0.0
      %1304 = vmatpush2.msra.mxu0 0.0
      %1305 = vmatprep.subr.mxu0 0.0
      %1306 = vmatpush2.msra.mxu0 0.0
      %1307 = vmatprep.subr.mxu0 0.0
      %1308 = vmatpush2.msra.mxu0 0.0
      %1309 = vmatprep.subr.mxu0 0.0
      %1310 = vmatpush2.msra.mxu0 0.0
      %1311 = vmatprep.subr.mxu0 0.0
      %1312 = vmatpush2.msra.mxu0 0.0
      %1313 = vmatprep.subr.mxu0 0.0
      %1314 = vmatpush2.msra.mxu0 0.0
      %1315 = vmatprep.subr.mxu0 0.0
      %1316 = vmatpush2.msra.mxu0 0.0
      %1317 = vmatprep.subr.mxu0 0.0
      %1318 = vmatpush2.msra.mxu0 0.0
      %1319 = vmatprep.subr.mxu0 0.0
      %1320 = vmatpush2.msra.mxu0 0.0
      %1321 = vmatprep.subr.mxu0 0.0
      %1322 = vmatpush2.msra.mxu0 0.0
      %1323 = vmatprep.subr.mxu0 0.0
      %1324 = vmatpush2.msra.mxu0 0.0
      %1325 = vmatprep.subr.mxu0 0.0
      %1326 = vmatpush2.msra.mxu0 0.0
      %1327 = vmatprep.subr.mxu0 0.0
      %1328 = vmatpush2.msra.mxu0 0.0
      %1329 = vmatprep.subr.mxu0 0.0
      %1330 = vmatpush2.msra.mxu0 0.0
      %1331 = vmatprep.subr.mxu0 0.0
      %1332 = vmatpush2.msra.mxu0 0.0
      %1333 = vmatprep.mubr.f32.mxu0 0.0
      %1334 = vmatmul.mubr.f32.gmra.mxu0 %v718
      %v1335 = vpop.f32.mrf.mxu0
      %v1336 = vadd.f32 0.0, %v1335
      %v1337 = vpop.f32.mrf.mxu0
      %1338 = vmatprep.mubr.f32.mxu0 0.0
      %1339 = vmatmul.mubr.f32.gmra.mxu0 %v720
      %v1340 = vpop.f32.mrf.mxu0
      %v1341 = vadd.f32 0.0, %v1340
      %v1342 = vpop.f32.mrf.mxu0
      %1343 = vmatprep.mubr.f32.mxu0 0.0
      %1344 = vmatmul.mubr.f32.gmra.mxu0 %v722
      %v1345 = vpop.f32.mrf.mxu0
      %v1346 = vadd.f32 0.0, %v1345
      %v1347 = vpop.f32.mrf.mxu0
      %1348 = vmatprep.mubr.f32.mxu0 0.0
      %1349 = vmatmul.mubr.f32.gmra.mxu0 %v724
      %v1350 = vpop.f32.mrf.mxu0
      %v1351 = vadd.f32 0.0, %v1350
      %v1352 = vpop.f32.mrf.mxu0
      %1353 = vmatprep.mubr.f32.mxu0 0.0
      %1354 = vmatmul.mubr.f32.gmra.mxu0 %v726
      %v1355 = vpop.f32.mrf.mxu0
      %v1356 = vadd.f32 0.0, %v1355
      %v1357 = vpop.f32.mrf.mxu0
      %1358 = vmatprep.mubr.f32.mxu0 0.0
      %1359 = vmatmul.mubr.f32.gmra.mxu0 %v728
      %v1360 = vpop.f32.mrf.mxu0
      %v1361 = vadd.f32 0.0, %v1360
      %v1362 = vpop.f32.mrf.mxu0
      %1363 = vmatprep.mubr.f32.mxu0 0.0
      %1364 = vmatmul.mubr.f32.gmra.mxu0 %v730
      %v1365 = vpop.f32.mrf.mxu0
      %v1366 = vadd.f32 0.0, %v1365
      %v1367 = vpop.f32.mrf.mxu0
      %1368 = vmatprep.mubr.f32.mxu0 0.0
      %1369 = vmatmul.mubr.f32.gmra.mxu0 %v732
      %v1370 = vpop.f32.mrf.mxu0
      %v1371 = vadd.f32 0.0, %v1370
      %v1372 = vpop.f32.mrf.mxu0
      %1373 = vmatprep.mubr.f32.mxu0 0.0
      %1374 = vmatmul.mubr.f32.gmra.mxu0 %v734
      %v1375 = vpop.f32.mrf.mxu0
      %v1376 = vadd.f32 0.0, %v1375
      %v1377 = vpop.f32.mrf.mxu0
      %1378 = vmatprep.mubr.f32.mxu0 0.0
      %1379 = vmatmul.mubr.f32.gmra.mxu0 %v736
      %v1380 = vpop.f32.mrf.mxu0
      %v1381 = vadd.f32 0.0, %v1380
      %v1382 = vpop.f32.mrf.mxu0
      %1383 = vmatprep.mubr.f32.mxu0 0.0
      %1384 = vmatmul.mubr.f32.gmra.mxu0 %v738
      %v1385 = vpop.f32.mrf.mxu0
      %v1386 = vadd.f32 0.0, %v1385
      %v1387 = vpop.f32.mrf.mxu0
      %1388 = vmatprep.mubr.f32.mxu0 0.0
      %1389 = vmatmul.mubr.f32.gmra.mxu0 %v740
      %v1390 = vpop.f32.mrf.mxu0
      %v1391 = vadd.f32 0.0, %v1390
      %v1392 = vpop.f32.mrf.mxu0
      %1393 = vmatprep.mubr.f32.mxu0 0.0
      %1394 = vmatmul.mubr.f32.gmra.mxu0 %v742
      %v1395 = vpop.f32.mrf.mxu0
      %v1396 = vadd.f32 0.0, %v1395
      %v1397 = vpop.f32.mrf.mxu0
      %1398 = vmatprep.mubr.f32.mxu0 0.0
      %1399 = vmatmul.mubr.f32.gmra.mxu0 %v744
      %v1400 = vpop.f32.mrf.mxu0
      %v1401 = vadd.f32 0.0, %v1400
      %v1402 = vpop.f32.mrf.mxu0
      %1403 = vmatprep.mubr.f32.mxu0 0.0
      %1404 = vmatmul.mubr.f32.gmra.mxu0 %v1265
      %v1405 = vpop.f32.mrf.mxu0
      %v1406 = vadd.f32 0.0, %v1405
      %v1407 = vpop.f32.mrf.mxu0
      %1408 = vmatprep.mubr.f32.mxu0 0.0
      %1409 = vmatmul.mubr.f32.gmra.mxu0 %v1267
      %v1410 = vpop.f32.mrf.mxu0
      %v1411 = vadd.f32 0.0, %v1410
      %v1412 = vpop.f32.mrf.mxu0
      %1413 = vdwg.mxu0
      %v1414 = vadd.f32 %v1239, %v1336
      %v1415 = vadd.f32 %v1240, %v1341
      %v1416 = vadd.f32 %v1241, %v1346
      %v1417 = vadd.f32 %v1242, %v1351
      %v1418 = vadd.f32 %v1243, %v1356
      %v1419 = vadd.f32 %v1244, %v1361
      %v1420 = vadd.f32 %v1245, %v1366
      %v1421 = vadd.f32 %v1246, %v1371
      %v1422 = vadd.f32 %v1247, %v1376
      %v1423 = vadd.f32 %v1248, %v1381
      %v1424 = vadd.f32 %v1249, %v1386
      %v1425 = vadd.f32 %v1250, %v1391
      %v1426 = vadd.f32 %v1251, %v1396
      %v1427 = vadd.f32 %v1252, %v1401
      %v1428 = vadd.f32 %v1253, %v1406
      %v1429 = vadd.f32 %v1254, %v1411
      %s1430 = scalar_lea.vmem %s1, 192
      %v1431 = vld [vmem:[%s1430] sm:$0xff]
      %v1432 = vld [vmem:[%s1430 + $0x8] sm:$0xff]
      %v1433 = vld [vmem:[%s1430 + $0x10] sm:$0xff]
      %v1434 = vld [vmem:[%s1430 + $0x18] sm:$0xff]
      %v1436 = vsel %vm313, %v235, 0
      %v1439 = vsel %vm313, %v236, 0
      %1441 = vmatprep.subr.mxu0 0.0
      %1442 = vmatpush1.msra.mxu0 0.0
      %1443 = vmatprep.subr.mxu0 0.0
      %1444 = vmatpush1.msra.mxu0 0.0
      %1445 = vmatprep.subr.mxu0 0.0
      %1446 = vmatpush1.msra.mxu0 0.0
      %1447 = vmatprep.subr.mxu0 0.0
      %1448 = vmatpush1.msra.mxu0 0.0
      %1449 = vmatprep.subr.mxu0 0.0
      %1450 = vmatpush1.msra.mxu0 0.0
      %1451 = vmatprep.subr.mxu0 0.0
      %1452 = vmatpush1.msra.mxu0 0.0
      %1453 = vmatprep.subr.mxu0 0.0
      %1454 = vmatpush1.msra.mxu0 0.0
      %1455 = vmatprep.subr.mxu0 0.0
      %1456 = vmatpush1.msra.mxu0 0.0
      %1457 = vmatprep.subr.mxu0 0.0
      %1458 = vmatpush1.msra.mxu0 0.0
      %1459 = vmatprep.subr.mxu0 0.0
      %1460 = vmatpush1.msra.mxu0 0.0
      %1461 = vmatprep.subr.mxu0 0.0
      %1462 = vmatpush1.msra.mxu0 0.0
      %1463 = vmatprep.subr.mxu0 0.0
      %1464 = vmatpush1.msra.mxu0 0.0
      %1465 = vmatprep.subr.mxu0 0.0
      %1466 = vmatpush1.msra.mxu0 %v1434
      %1467 = vmatprep.subr.mxu0 0.0
      %1468 = vmatpush1.msra.mxu0 %v1433
      %1469 = vmatprep.subr.mxu0 0.0
      %1470 = vmatpush1.msra.mxu0 %v1432
      %1471 = vmatprep.subr.mxu0 0.0
      %1472 = vmatpush1.msra.mxu0 %v1431
      %1473 = vmatprep.subr.mxu0 0.0
      %1474 = vmatpush2.msra.mxu0 0.0
      %1475 = vmatprep.subr.mxu0 0.0
      %1476 = vmatpush2.msra.mxu0 0.0
      %1477 = vmatprep.subr.mxu0 0.0
      %1478 = vmatpush2.msra.mxu0 0.0
      %1479 = vmatprep.subr.mxu0 0.0
      %1480 = vmatpush2.msra.mxu0 0.0
      %1481 = vmatprep.subr.mxu0 0.0
      %1482 = vmatpush2.msra.mxu0 0.0
      %1483 = vmatprep.subr.mxu0 0.0
      %1484 = vmatpush2.msra.mxu0 0.0
      %1485 = vmatprep.subr.mxu0 0.0
      %1486 = vmatpush2.msra.mxu0 0.0
      %1487 = vmatprep.subr.mxu0 0.0
      %1488 = vmatpush2.msra.mxu0 0.0
      %1489 = vmatprep.subr.mxu0 0.0
      %1490 = vmatpush2.msra.mxu0 0.0
      %1491 = vmatprep.subr.mxu0 0.0
      %1492 = vmatpush2.msra.mxu0 0.0
      %1493 = vmatprep.subr.mxu0 0.0
      %1494 = vmatpush2.msra.mxu0 0.0
      %1495 = vmatprep.subr.mxu0 0.0
      %1496 = vmatpush2.msra.mxu0 0.0
      %1497 = vmatprep.subr.mxu0 0.0
      %1498 = vmatpush2.msra.mxu0 0.0
      %1499 = vmatprep.subr.mxu0 0.0
      %1500 = vmatpush2.msra.mxu0 0.0
      %1501 = vmatprep.subr.mxu0 0.0
      %1502 = vmatpush2.msra.mxu0 0.0
      %1503 = vmatprep.subr.mxu0 0.0
      %1504 = vmatpush2.msra.mxu0 0.0
      %1505 = vmatprep.mubr.f32.mxu0 0.0
      %1506 = vmatmul.mubr.f32.gmra.mxu0 %v499
      %v1507 = vpop.f32.mrf.mxu0
      %v1508 = vadd.f32 0.0, %v1507
      %v1509 = vpop.f32.mrf.mxu0
      %1510 = vmatprep.mubr.f32.mxu0 0.0
      %1511 = vmatmul.mubr.f32.gmra.mxu0 %v501
      %v1512 = vpop.f32.mrf.mxu0
      %v1513 = vadd.f32 0.0, %v1512
      %v1514 = vpop.f32.mrf.mxu0
      %1515 = vmatprep.mubr.f32.mxu0 0.0
      %1516 = vmatmul.mubr.f32.gmra.mxu0 %v503
      %v1517 = vpop.f32.mrf.mxu0
      %v1518 = vadd.f32 0.0, %v1517
      %v1519 = vpop.f32.mrf.mxu0
      %1520 = vmatprep.mubr.f32.mxu0 0.0
      %1521 = vmatmul.mubr.f32.gmra.mxu0 %v505
      %v1522 = vpop.f32.mrf.mxu0
      %v1523 = vadd.f32 0.0, %v1522
      %v1524 = vpop.f32.mrf.mxu0
      %1525 = vmatprep.mubr.f32.mxu0 0.0
      %1526 = vmatmul.mubr.f32.gmra.mxu0 %v507
      %v1527 = vpop.f32.mrf.mxu0
      %v1528 = vadd.f32 0.0, %v1527
      %v1529 = vpop.f32.mrf.mxu0
      %1530 = vmatprep.mubr.f32.mxu0 0.0
      %1531 = vmatmul.mubr.f32.gmra.mxu0 %v509
      %v1532 = vpop.f32.mrf.mxu0
      %v1533 = vadd.f32 0.0, %v1532
      %v1534 = vpop.f32.mrf.mxu0
      %1535 = vmatprep.mubr.f32.mxu0 0.0
      %1536 = vmatmul.mubr.f32.gmra.mxu0 %v511
      %v1537 = vpop.f32.mrf.mxu0
      %v1538 = vadd.f32 0.0, %v1537
      %v1539 = vpop.f32.mrf.mxu0
      %1540 = vmatprep.mubr.f32.mxu0 0.0
      %1541 = vmatmul.mubr.f32.gmra.mxu0 %v513
      %v1542 = vpop.f32.mrf.mxu0
      %v1543 = vadd.f32 0.0, %v1542
      %v1544 = vpop.f32.mrf.mxu0
      %1545 = vmatprep.mubr.f32.mxu0 0.0
      %1546 = vmatmul.mubr.f32.gmra.mxu0 %v515
      %v1547 = vpop.f32.mrf.mxu0
      %v1548 = vadd.f32 0.0, %v1547
      %v1549 = vpop.f32.mrf.mxu0
      %1550 = vmatprep.mubr.f32.mxu0 0.0
      %1551 = vmatmul.mubr.f32.gmra.mxu0 %v517
      %v1552 = vpop.f32.mrf.mxu0
      %v1553 = vadd.f32 0.0, %v1552
      %v1554 = vpop.f32.mrf.mxu0
      %1555 = vmatprep.mubr.f32.mxu0 0.0
      %1556 = vmatmul.mubr.f32.gmra.mxu0 %v519
      %v1557 = vpop.f32.mrf.mxu0
      %v1558 = vadd.f32 0.0, %v1557
      %v1559 = vpop.f32.mrf.mxu0
      %1560 = vmatprep.mubr.f32.mxu0 0.0
      %1561 = vmatmul.mubr.f32.gmra.mxu0 %v521
      %v1562 = vpop.f32.mrf.mxu0
      %v1563 = vadd.f32 0.0, %v1562
      %v1564 = vpop.f32.mrf.mxu0
      %1565 = vmatprep.mubr.f32.mxu0 0.0
      %1566 = vmatmul.mubr.f32.gmra.mxu0 %v913
      %v1567 = vpop.f32.mrf.mxu0
      %v1568 = vadd.f32 0.0, %v1567
      %v1569 = vpop.f32.mrf.mxu0
      %1570 = vmatprep.mubr.f32.mxu0 0.0
      %1571 = vmatmul.mubr.f32.gmra.mxu0 %v916
      %v1572 = vpop.f32.mrf.mxu0
      %v1573 = vadd.f32 0.0, %v1572
      %v1574 = vpop.f32.mrf.mxu0
      %1575 = vmatprep.mubr.f32.mxu0 0.0
      %1576 = vmatmul.mubr.f32.gmra.mxu0 %v1436
      %v1577 = vpop.f32.mrf.mxu0
      %v1578 = vadd.f32 0.0, %v1577
      %v1579 = vpop.f32.mrf.mxu0
      %1580 = vmatprep.mubr.f32.mxu0 0.0
      %1581 = vmatmul.mubr.f32.gmra.mxu0 %v1439
      %v1582 = vpop.f32.mrf.mxu0
      %v1583 = vadd.f32 0.0, %v1582
      %v1584 = vpop.f32.mrf.mxu0
      %1585 = vdwg.mxu0
      %v1586 = vadd.f32 %v1414, %v1508
      %v1587 = vadd.f32 %v1415, %v1513
      %v1588 = vadd.f32 %v1416, %v1518
      %v1589 = vadd.f32 %v1417, %v1523
      %v1590 = vadd.f32 %v1418, %v1528
      %v1591 = vadd.f32 %v1419, %v1533
      %v1592 = vadd.f32 %v1420, %v1538
      %v1593 = vadd.f32 %v1421, %v1543
      %v1594 = vadd.f32 %v1422, %v1548
      %v1595 = vadd.f32 %v1423, %v1553
      %v1596 = vadd.f32 %v1424, %v1558
      %v1597 = vadd.f32 %v1425, %v1563
      %v1598 = vadd.f32 %v1426, %v1568
      %v1599 = vadd.f32 %v1427, %v1573
      %v1600 = vadd.f32 %v1428, %v1578
      %v1601 = vadd.f32 %v1429, %v1583
      %v1603 = vrot.slane %v235, 1
      %v1604 = vrot.slane %v236, 1
      %v1605 = vsel %vm267, %v1603, %v1604
      %v1606 = vrot.slane %v237, 1
      %v1607 = vsel %vm267, %v1604, %v1606
      %s1608 = scalar_lea.vmem %s1, 224
      %v1609 = vld [vmem:[%s1608] sm:$0xff]
      %v1610 = vld [vmem:[%s1608 + $0x8] sm:$0xff]
      %v1611 = vld [vmem:[%s1608 + $0x10] sm:$0xff]
      %v1612 = vld [vmem:[%s1608 + $0x18] sm:$0xff]
      %v1613 = vsel %vm313, %v1605, 0
      %v1615 = vsel %vm313, %v1607, 0
      %1617 = vmatprep.subr.mxu0 0.0
      %1618 = vmatpush1.msra.mxu0 0.0
      %1619 = vmatprep.subr.mxu0 0.0
      %1620 = vmatpush1.msra.mxu0 0.0
      %1621 = vmatprep.subr.mxu0 0.0
      %1622 = vmatpush1.msra.mxu0 0.0
      %1623 = vmatprep.subr.mxu0 0.0
      %1624 = vmatpush1.msra.mxu0 0.0
      %1625 = vmatprep.subr.mxu0 0.0
      %1626 = vmatpush1.msra.mxu0 0.0
      %1627 = vmatprep.subr.mxu0 0.0
      %1628 = vmatpush1.msra.mxu0 0.0
      %1629 = vmatprep.subr.mxu0 0.0
      %1630 = vmatpush1.msra.mxu0 0.0
      %1631 = vmatprep.subr.mxu0 0.0
      %1632 = vmatpush1.msra.mxu0 0.0
      %1633 = vmatprep.subr.mxu0 0.0
      %1634 = vmatpush1.msra.mxu0 0.0
      %1635 = vmatprep.subr.mxu0 0.0
      %1636 = vmatpush1.msra.mxu0 0.0
      %1637 = vmatprep.subr.mxu0 0.0
      %1638 = vmatpush1.msra.mxu0 0.0
      %1639 = vmatprep.subr.mxu0 0.0
      %1640 = vmatpush1.msra.mxu0 0.0
      %1641 = vmatprep.subr.mxu0 0.0
      %1642 = vmatpush1.msra.mxu0 %v1612
      %1643 = vmatprep.subr.mxu0 0.0
      %1644 = vmatpush1.msra.mxu0 %v1611
      %1645 = vmatprep.subr.mxu0 0.0
      %1646 = vmatpush1.msra.mxu0 %v1610
      %1647 = vmatprep.subr.mxu0 0.0
      %1648 = vmatpush1.msra.mxu0 %v1609
      %1649 = vmatprep.subr.mxu0 0.0
      %1650 = vmatpush2.msra.mxu0 0.0
      %1651 = vmatprep.subr.mxu0 0.0
      %1652 = vmatpush2.msra.mxu0 0.0
      %1653 = vmatprep.subr.mxu0 0.0
      %1654 = vmatpush2.msra.mxu0 0.0
      %1655 = vmatprep.subr.mxu0 0.0
      %1656 = vmatpush2.msra.mxu0 0.0
      %1657 = vmatprep.subr.mxu0 0.0
      %1658 = vmatpush2.msra.mxu0 0.0
      %1659 = vmatprep.subr.mxu0 0.0
      %1660 = vmatpush2.msra.mxu0 0.0
      %1661 = vmatprep.subr.mxu0 0.0
      %1662 = vmatpush2.msra.mxu0 0.0
      %1663 = vmatprep.subr.mxu0 0.0
      %1664 = vmatpush2.msra.mxu0 0.0
      %1665 = vmatprep.subr.mxu0 0.0
      %1666 = vmatpush2.msra.mxu0 0.0
      %1667 = vmatprep.subr.mxu0 0.0
      %1668 = vmatpush2.msra.mxu0 0.0
      %1669 = vmatprep.subr.mxu0 0.0
      %1670 = vmatpush2.msra.mxu0 0.0
      %1671 = vmatprep.subr.mxu0 0.0
      %1672 = vmatpush2.msra.mxu0 0.0
      %1673 = vmatprep.subr.mxu0 0.0
      %1674 = vmatpush2.msra.mxu0 0.0
      %1675 = vmatprep.subr.mxu0 0.0
      %1676 = vmatpush2.msra.mxu0 0.0
      %1677 = vmatprep.subr.mxu0 0.0
      %1678 = vmatpush2.msra.mxu0 0.0
      %1679 = vmatprep.subr.mxu0 0.0
      %1680 = vmatpush2.msra.mxu0 0.0
      %1681 = vmatprep.mubr.f32.mxu0 0.0
      %1682 = vmatmul.mubr.f32.gmra.mxu0 %v322
      %v1683 = vpop.f32.mrf.mxu0
      %v1684 = vadd.f32 0.0, %v1683
      %v1685 = vpop.f32.mrf.mxu0
      %1686 = vmatprep.mubr.f32.mxu0 0.0
      %1687 = vmatmul.mubr.f32.gmra.mxu0 %v324
      %v1688 = vpop.f32.mrf.mxu0
      %v1689 = vadd.f32 0.0, %v1688
      %v1690 = vpop.f32.mrf.mxu0
      %1691 = vmatprep.mubr.f32.mxu0 0.0
      %1692 = vmatmul.mubr.f32.gmra.mxu0 %v326
      %v1693 = vpop.f32.mrf.mxu0
      %v1694 = vadd.f32 0.0, %v1693
      %v1695 = vpop.f32.mrf.mxu0
      %1696 = vmatprep.mubr.f32.mxu0 0.0
      %1697 = vmatmul.mubr.f32.gmra.mxu0 %v328
      %v1698 = vpop.f32.mrf.mxu0
      %v1699 = vadd.f32 0.0, %v1698
      %v1700 = vpop.f32.mrf.mxu0
      %1701 = vmatprep.mubr.f32.mxu0 0.0
      %1702 = vmatmul.mubr.f32.gmra.mxu0 %v330
      %v1703 = vpop.f32.mrf.mxu0
      %v1704 = vadd.f32 0.0, %v1703
      %v1705 = vpop.f32.mrf.mxu0
      %1706 = vmatprep.mubr.f32.mxu0 0.0
      %1707 = vmatmul.mubr.f32.gmra.mxu0 %v332
      %v1708 = vpop.f32.mrf.mxu0
      %v1709 = vadd.f32 0.0, %v1708
      %v1710 = vpop.f32.mrf.mxu0
      %1711 = vmatprep.mubr.f32.mxu0 0.0
      %1712 = vmatmul.mubr.f32.gmra.mxu0 %v334
      %v1713 = vpop.f32.mrf.mxu0
      %v1714 = vadd.f32 0.0, %v1713
      %v1715 = vpop.f32.mrf.mxu0
      %1716 = vmatprep.mubr.f32.mxu0 0.0
      %1717 = vmatmul.mubr.f32.gmra.mxu0 %v336
      %v1718 = vpop.f32.mrf.mxu0
      %v1719 = vadd.f32 0.0, %v1718
      %v1720 = vpop.f32.mrf.mxu0
      %1721 = vmatprep.mubr.f32.mxu0 0.0
      %1722 = vmatmul.mubr.f32.gmra.mxu0 %v338
      %v1723 = vpop.f32.mrf.mxu0
      %v1724 = vadd.f32 0.0, %v1723
      %v1725 = vpop.f32.mrf.mxu0
      %1726 = vmatprep.mubr.f32.mxu0 0.0
      %1727 = vmatmul.mubr.f32.gmra.mxu0 %v340
      %v1728 = vpop.f32.mrf.mxu0
      %v1729 = vadd.f32 0.0, %v1728
      %v1730 = vpop.f32.mrf.mxu0
      %1731 = vmatprep.mubr.f32.mxu0 0.0
      %1732 = vmatmul.mubr.f32.gmra.mxu0 %v342
      %v1733 = vpop.f32.mrf.mxu0
      %v1734 = vadd.f32 0.0, %v1733
      %v1735 = vpop.f32.mrf.mxu0
      %1736 = vmatprep.mubr.f32.mxu0 0.0
      %1737 = vmatmul.mubr.f32.gmra.mxu0 %v344
      %v1738 = vpop.f32.mrf.mxu0
      %v1739 = vadd.f32 0.0, %v1738
      %v1740 = vpop.f32.mrf.mxu0
      %1741 = vmatprep.mubr.f32.mxu0 0.0
      %1742 = vmatmul.mubr.f32.gmra.mxu0 %v1090
      %v1743 = vpop.f32.mrf.mxu0
      %v1744 = vadd.f32 0.0, %v1743
      %v1745 = vpop.f32.mrf.mxu0
      %1746 = vmatprep.mubr.f32.mxu0 0.0
      %1747 = vmatmul.mubr.f32.gmra.mxu0 %v1092
      %v1748 = vpop.f32.mrf.mxu0
      %v1749 = vadd.f32 0.0, %v1748
      %v1750 = vpop.f32.mrf.mxu0
      %1751 = vmatprep.mubr.f32.mxu0 0.0
      %1752 = vmatmul.mubr.f32.gmra.mxu0 %v1613
      %v1753 = vpop.f32.mrf.mxu0
      %v1754 = vadd.f32 0.0, %v1753
      %v1755 = vpop.f32.mrf.mxu0
      %1756 = vmatprep.mubr.f32.mxu0 0.0
      %1757 = vmatmul.mubr.f32.gmra.mxu0 %v1615
      %v1758 = vpop.f32.mrf.mxu0
      %v1759 = vadd.f32 0.0, %v1758
      %v1760 = vpop.f32.mrf.mxu0
      %1761 = vdwg.mxu0
      %v1762 = vadd.f32 %v1586, %v1684
      %v1763 = vadd.f32 %v1587, %v1689
      %v1764 = vadd.f32 %v1588, %v1694
      %v1765 = vadd.f32 %v1589, %v1699
      %v1766 = vadd.f32 %v1590, %v1704
      %v1767 = vadd.f32 %v1591, %v1709
      %v1768 = vadd.f32 %v1592, %v1714
      %v1769 = vadd.f32 %v1593, %v1719
      %v1770 = vadd.f32 %v1594, %v1724
      %v1771 = vadd.f32 %v1595, %v1729
      %v1772 = vadd.f32 %v1596, %v1734
      %v1773 = vadd.f32 %v1597, %v1739
      %v1774 = vadd.f32 %v1598, %v1744
      %v1775 = vadd.f32 %v1599, %v1749
      %v1776 = vadd.f32 %v1600, %v1754
      %v1777 = vadd.f32 %v1601, %v1759
      %v1778 = vrot.slane %v235, 2
      %v1779 = vrot.slane %v236, 2
      %v1780 = vsel %vm668, %v1778, %v1779
      %v1781 = vrot.slane %v237, 2
      %v1782 = vsel %vm668, %v1779, %v1781
      %s1783 = scalar_lea.vmem %s1, 256
      %v1784 = vld [vmem:[%s1783] sm:$0xff]
      %v1785 = vld [vmem:[%s1783 + $0x8] sm:$0xff]
      %v1786 = vld [vmem:[%s1783 + $0x10] sm:$0xff]
      %v1787 = vld [vmem:[%s1783 + $0x18] sm:$0xff]
      %v1788 = vsel %vm313, %v1780, 0
      %v1790 = vsel %vm313, %v1782, 0
      %1792 = vmatprep.subr.mxu0 0.0
      %1793 = vmatpush1.msra.mxu0 0.0
      %1794 = vmatprep.subr.mxu0 0.0
      %1795 = vmatpush1.msra.mxu0 0.0
      %1796 = vmatprep.subr.mxu0 0.0
      %1797 = vmatpush1.msra.mxu0 0.0
      %1798 = vmatprep.subr.mxu0 0.0
      %1799 = vmatpush1.msra.mxu0 0.0
      %1800 = vmatprep.subr.mxu0 0.0
      %1801 = vmatpush1.msra.mxu0 0.0
      %1802 = vmatprep.subr.mxu0 0.0
      %1803 = vmatpush1.msra.mxu0 0.0
      %1804 = vmatprep.subr.mxu0 0.0
      %1805 = vmatpush1.msra.mxu0 0.0
      %1806 = vmatprep.subr.mxu0 0.0
      %1807 = vmatpush1.msra.mxu0 0.0
      %1808 = vmatprep.subr.mxu0 0.0
      %1809 = vmatpush1.msra.mxu0 0.0
      %1810 = vmatprep.subr.mxu0 0.0
      %1811 = vmatpush1.msra.mxu0 0.0
      %1812 = vmatprep.subr.mxu0 0.0
      %1813 = vmatpush1.msra.mxu0 0.0
      %1814 = vmatprep.subr.mxu0 0.0
      %1815 = vmatpush1.msra.mxu0 0.0
      %1816 = vmatprep.subr.mxu0 0.0
      %1817 = vmatpush1.msra.mxu0 %v1787
      %1818 = vmatprep.subr.mxu0 0.0
      %1819 = vmatpush1.msra.mxu0 %v1786
      %1820 = vmatprep.subr.mxu0 0.0
      %1821 = vmatpush1.msra.mxu0 %v1785
      %1822 = vmatprep.subr.mxu0 0.0
      %1823 = vmatpush1.msra.mxu0 %v1784
      %1824 = vmatprep.subr.mxu0 0.0
      %1825 = vmatpush2.msra.mxu0 0.0
      %1826 = vmatprep.subr.mxu0 0.0
      %1827 = vmatpush2.msra.mxu0 0.0
      %1828 = vmatprep.subr.mxu0 0.0
      %1829 = vmatpush2.msra.mxu0 0.0
      %1830 = vmatprep.subr.mxu0 0.0
      %1831 = vmatpush2.msra.mxu0 0.0
      %1832 = vmatprep.subr.mxu0 0.0
      %1833 = vmatpush2.msra.mxu0 0.0
      %1834 = vmatprep.subr.mxu0 0.0
      %1835 = vmatpush2.msra.mxu0 0.0
      %1836 = vmatprep.subr.mxu0 0.0
      %1837 = vmatpush2.msra.mxu0 0.0
      %1838 = vmatprep.subr.mxu0 0.0
      %1839 = vmatpush2.msra.mxu0 0.0
      %1840 = vmatprep.subr.mxu0 0.0
      %1841 = vmatpush2.msra.mxu0 0.0
      %1842 = vmatprep.subr.mxu0 0.0
      %1843 = vmatpush2.msra.mxu0 0.0
      %1844 = vmatprep.subr.mxu0 0.0
      %1845 = vmatpush2.msra.mxu0 0.0
      %1846 = vmatprep.subr.mxu0 0.0
      %1847 = vmatpush2.msra.mxu0 0.0
      %1848 = vmatprep.subr.mxu0 0.0
      %1849 = vmatpush2.msra.mxu0 0.0
      %1850 = vmatprep.subr.mxu0 0.0
      %1851 = vmatpush2.msra.mxu0 0.0
      %1852 = vmatprep.subr.mxu0 0.0
      %1853 = vmatpush2.msra.mxu0 0.0
      %1854 = vmatprep.subr.mxu0 0.0
      %1855 = vmatpush2.msra.mxu0 0.0
      %1856 = vmatprep.mubr.f32.mxu0 0.0
      %1857 = vmatmul.mubr.f32.gmra.mxu0 %v722
      %v1858 = vpop.f32.mrf.mxu0
      %v1859 = vadd.f32 0.0, %v1858
      %v1860 = vpop.f32.mrf.mxu0
      %1861 = vmatprep.mubr.f32.mxu0 0.0
      %1862 = vmatmul.mubr.f32.gmra.mxu0 %v724
      %v1863 = vpop.f32.mrf.mxu0
      %v1864 = vadd.f32 0.0, %v1863
      %v1865 = vpop.f32.mrf.mxu0
      %1866 = vmatprep.mubr.f32.mxu0 0.0
      %1867 = vmatmul.mubr.f32.gmra.mxu0 %v726
      %v1868 = vpop.f32.mrf.mxu0
      %v1869 = vadd.f32 0.0, %v1868
      %v1870 = vpop.f32.mrf.mxu0
      %1871 = vmatprep.mubr.f32.mxu0 0.0
      %1872 = vmatmul.mubr.f32.gmra.mxu0 %v728
      %v1873 = vpop.f32.mrf.mxu0
      %v1874 = vadd.f32 0.0, %v1873
      %v1875 = vpop.f32.mrf.mxu0
      %1876 = vmatprep.mubr.f32.mxu0 0.0
      %1877 = vmatmul.mubr.f32.gmra.mxu0 %v730
      %v1878 = vpop.f32.mrf.mxu0
      %v1879 = vadd.f32 0.0, %v1878
      %v1880 = vpop.f32.mrf.mxu0
      %1881 = vmatprep.mubr.f32.mxu0 0.0
      %1882 = vmatmul.mubr.f32.gmra.mxu0 %v732
      %v1883 = vpop.f32.mrf.mxu0
      %v1884 = vadd.f32 0.0, %v1883
      %v1885 = vpop.f32.mrf.mxu0
      %1886 = vmatprep.mubr.f32.mxu0 0.0
      %1887 = vmatmul.mubr.f32.gmra.mxu0 %v734
      %v1888 = vpop.f32.mrf.mxu0
      %v1889 = vadd.f32 0.0, %v1888
      %v1890 = vpop.f32.mrf.mxu0
      %1891 = vmatprep.mubr.f32.mxu0 0.0
      %1892 = vmatmul.mubr.f32.gmra.mxu0 %v736
      %v1893 = vpop.f32.mrf.mxu0
      %v1894 = vadd.f32 0.0, %v1893
      %v1895 = vpop.f32.mrf.mxu0
      %1896 = vmatprep.mubr.f32.mxu0 0.0
      %1897 = vmatmul.mubr.f32.gmra.mxu0 %v738
      %v1898 = vpop.f32.mrf.mxu0
      %v1899 = vadd.f32 0.0, %v1898
      %v1900 = vpop.f32.mrf.mxu0
      %1901 = vmatprep.mubr.f32.mxu0 0.0
      %1902 = vmatmul.mubr.f32.gmra.mxu0 %v740
      %v1903 = vpop.f32.mrf.mxu0
      %v1904 = vadd.f32 0.0, %v1903
      %v1905 = vpop.f32.mrf.mxu0
      %1906 = vmatprep.mubr.f32.mxu0 0.0
      %1907 = vmatmul.mubr.f32.gmra.mxu0 %v742
      %v1908 = vpop.f32.mrf.mxu0
      %v1909 = vadd.f32 0.0, %v1908
      %v1910 = vpop.f32.mrf.mxu0
      %1911 = vmatprep.mubr.f32.mxu0 0.0
      %1912 = vmatmul.mubr.f32.gmra.mxu0 %v744
      %v1913 = vpop.f32.mrf.mxu0
      %v1914 = vadd.f32 0.0, %v1913
      %v1915 = vpop.f32.mrf.mxu0
      %1916 = vmatprep.mubr.f32.mxu0 0.0
      %1917 = vmatmul.mubr.f32.gmra.mxu0 %v1265
      %v1918 = vpop.f32.mrf.mxu0
      %v1919 = vadd.f32 0.0, %v1918
      %v1920 = vpop.f32.mrf.mxu0
      %1921 = vmatprep.mubr.f32.mxu0 0.0
      %1922 = vmatmul.mubr.f32.gmra.mxu0 %v1267
      %v1923 = vpop.f32.mrf.mxu0
      %v1924 = vadd.f32 0.0, %v1923
      %v1925 = vpop.f32.mrf.mxu0
      %1926 = vmatprep.mubr.f32.mxu0 0.0
      %1927 = vmatmul.mubr.f32.gmra.mxu0 %v1788
      %v1928 = vpop.f32.mrf.mxu0
      %v1929 = vadd.f32 0.0, %v1928
      %v1930 = vpop.f32.mrf.mxu0
      %1931 = vmatprep.mubr.f32.mxu0 0.0
      %1932 = vmatmul.mubr.f32.gmra.mxu0 %v1790
      %v1933 = vpop.f32.mrf.mxu0
      %v1934 = vadd.f32 0.0, %v1933
      %v1935 = vpop.f32.mrf.mxu0
      %1936 = vdwg.mxu0
      %v1937 = vadd.f32 %v1762, %v1859
      %v1938 = vadd.f32 %v1763, %v1864
      %v1939 = vadd.f32 %v1764, %v1869
      %v1940 = vadd.f32 %v1765, %v1874
      %v1941 = vadd.f32 %v1766, %v1879
      %v1942 = vadd.f32 %v1767, %v1884
      %v1943 = vadd.f32 %v1768, %v1889
      %v1944 = vadd.f32 %v1769, %v1894
      %v1945 = vadd.f32 %v1770, %v1899
      %v1946 = vadd.f32 %v1771, %v1904
      %v1947 = vadd.f32 %v1772, %v1909
      %v1948 = vadd.f32 %v1773, %v1914
      %v1949 = vadd.f32 %v1774, %v1919
      %v1950 = vadd.f32 %v1775, %v1924
      %v1951 = vadd.f32 %v1776, %v1929
      %v1952 = vadd.f32 %v1777, %v1934
      %v1954 = vlaneseq
      %v1955 = vshrl.u32 %v1954, 7
      %v1956 = vsub.s32 0, %v1955
      %v1957 = vrot.slane %v238, %v1956
      %v1959 = vadd.f32 %v1937, %v1957
      %v1960 = vadd.f32 %v1938, %v1957
      %v1961 = vadd.f32 %v1939, %v1957
      %v1962 = vadd.f32 %v1940, %v1957
      %v1963 = vadd.f32 %v1941, %v1957
      %v1964 = vadd.f32 %v1942, %v1957
      %v1965 = vadd.f32 %v1943, %v1957
      %v1966 = vadd.f32 %v1944, %v1957
      %v1967 = vadd.f32 %v1945, %v1957
      %v1968 = vadd.f32 %v1946, %v1957
      %v1969 = vadd.f32 %v1947, %v1957
      %v1970 = vadd.f32 %v1948, %v1957
      %v1971 = vadd.f32 %v1949, %v1957
      %v1972 = vadd.f32 %v1950, %v1957
      %v1973 = vadd.f32 %v1951, %v1957
      %v1974 = vadd.f32 %v1952, %v1957
      %v1975 = vmax.f32 %v1959, 0.0
      %v1976 = vmax.f32 %v1960, 0.0
      %v1977 = vmax.f32 %v1961, 0.0
      %v1978 = vmax.f32 %v1962, 0.0
      %v1979 = vmax.f32 %v1963, 0.0
      %v1980 = vmax.f32 %v1964, 0.0
      %v1981 = vmax.f32 %v1965, 0.0
      %v1982 = vmax.f32 %v1966, 0.0
      %v1983 = vmax.f32 %v1967, 0.0
      %v1984 = vmax.f32 %v1968, 0.0
      %v1985 = vmax.f32 %v1969, 0.0
      %v1986 = vmax.f32 %v1970, 0.0
      %v1987 = vmax.f32 %v1971, 0.0
      %v1988 = vmax.f32 %v1972, 0.0
      %v1989 = vmax.f32 %v1973, 0.0
      %v1990 = vmax.f32 %v1974, 0.0
      %vm1991 = vcmask 130048
      %1992 = vst.msk [vmem:[%s206] sm:$0xff] %vm1991, %v1975
      %1993 = vst.msk [vmem:[%s206 + $0x8] sm:$0xff] %vm1991, %v1976
      %1994 = vst.msk [vmem:[%s206 + $0x10] sm:$0xff] %vm1991, %v1977
      %1995 = vst.msk [vmem:[%s206 + $0x18] sm:$0xff] %vm1991, %v1978
      %1996 = vst.msk [vmem:[%s206 + $0x20] sm:$0xff] %vm1991, %v1979
      %1997 = vst.msk [vmem:[%s206 + $0x28] sm:$0xff] %vm1991, %v1980
      %1998 = vst.msk [vmem:[%s206 + $0x30] sm:$0xff] %vm1991, %v1981
      %1999 = vst.msk [vmem:[%s206 + $0x38] sm:$0xff] %vm1991, %v1982
      %2000 = vst.msk [vmem:[%s206 + $0x40] sm:$0xff] %vm1991, %v1983
      %2001 = vst.msk [vmem:[%s206 + $0x48] sm:$0xff] %vm1991, %v1984
      %2002 = vst.msk [vmem:[%s206 + $0x50] sm:$0xff] %vm1991, %v1985
      %2003 = vst.msk [vmem:[%s206 + $0x58] sm:$0xff] %vm1991, %v1986
      %2004 = vst.msk [vmem:[%s206 + $0x60] sm:$0xff] %vm1991, %v1987
      %2005 = vst.msk [vmem:[%s206 + $0x68] sm:$0xff] %vm1991, %v1988
      %2006 = vst.msk [vmem:[%s206 + $0x70] sm:$0xff] %vm1991, %v1989
      %2007 = vst.msk [vmem:[%s206 + $0x78] sm:$0xff] %vm1991, %v1990
      %s2008 = smul.u32 16, %s19
      %p2009 = scmp.lt.s32.totalorder %s18, 1
      %s2010 = scalar_select %p2009, %s18, 1
      %p2011 = scmp.lt.s32.totalorder %s2008, 31
      %s2012 = scalar_select %p2011, %s2008, 31
      %s2013 = smul.addr %s2010, 32
      %s2014 = sadd.s32 %s2012, %s2013
      %s2015 = smul.addr %s2014, 8
      %s2016 = scalar_lea.vmem %s3, %s2015
      // Predicated region
      $region33: #{_lambda_.3} parent=31 // pred_check
        %p2017 = pneg %p116
      $region34: #{_lambda_.3} parent=31 // pred_check_branch
        %2019 = sbr.rel (%p2017) target = $region36
      $region35: #{_lambda_.3} parent=31 // pred_region
        %s2020 = smul.u32 16, %s19
      $region36: #{_lambda_.3} parent=31 // pred_fallthru
        _
    $region32: #{_lambda_.3} parent=5 // pred_fallthru
      _
    %p2021 = scmp.le.s32.totalorder 2, %s9
    // Predicated region
    $region37: #{_lambda_.3} parent=5 // pred_check
      %p2022 = pneg %p2021
    $region38: #{_lambda_.3} parent=5 // pred_check_branch
      %2024 = sbr.rel (%p2022) target = $region40
    $region39: #{_lambda_.3} parent=5 // pred_region
      %s2025 = ssub.s32 %s9, 2
      // Predicated region
      $region41: #{_lambda_.3} parent=39 // pred_check
        %p2026 = pneg %p122
      $region42: #{_lambda_.3} parent=39 // pred_check_branch
        %2028 = sbr.rel (%p2026) target = $region44
      $region43: #{_lambda_.3} parent=39 // pred_region
        %s2029 = smul.u32 16, %s21
        %p2030 = scmp.lt.s32.totalorder %s20, 1
        %s2031 = scalar_select %p2030, %s20, 1
        %p2032 = scmp.lt.s32.totalorder %s2029, 31
        %s2033 = scalar_select %p2032, %s2029, 31
        %s2034 = smul.addr %s2031, 32
        %s2035 = sadd.s32 %s2033, %s2034
        %s2036 = smul.addr %s2035, 8
        %s2037 = scalar_lea.vmem %s3, %s2036
      $region44: #{_lambda_.3} parent=39 // pred_fallthru
        _
    $region40: #{_lambda_.3} parent=5 // pred_fallthru
      _
  $region6: #{_lambda_.3} parent=0 // loop_footer
    %s13 = sadd.s32 1, %s9
  $region7: #{_lambda_.3} parent=0 // loop_footer_branch
    %8 = sbr.rel target = $region3
  $region8: #{_lambda_.3} parent=0 // loop_exit
    _

</llo_original>
